<compile_context>
chip_gen: v5e
topology: v5e:2x2
jax: 0.10.0
libtpu: 0.0.40
codegen_flags: <defaults>
</compile_context>

<pallas_src>
import jax
import jax.numpy as jnp
import numpy as np
from jax.experimental import pallas as pl
from jax.experimental.pallas import tpu as pltpu


IMG_C = 3        # image channels
HIDDEN = 32      # conv hidden channels
EMB = 32         # conditioning embedding width
LABEL_DIM = 10
SIGMA_DATA = 0.5


# ----------------------------------------------------------------------------
# Fused Pallas kernel
#   conv math runs in (pixels, channels) = (H*W, ·) rows x lanes layout;
#   the final store uses a lane-dense (C, H*W) layout that matches NCHW.
# ----------------------------------------------------------------------------

def _make_fused_edm_kernel(H, W, C, F):
    HW = H * W

    def kern(c_in_ref, c_skip_ref, c_out_ref,   # SMEM scalars, shape (N,)
             xpad_ref,                          # VMEM (H+2, W+2, C)  zero-padded input
             xt_ref,                            # VMEM (C, H*W)       NCHW-flat input (skip path)
             modb_ref,                          # VMEM (N, F)         conv1 bias + FiLM mod (pre-fused)
             w1_ref,                            # VMEM (9*C, F)
             w2_ref,                            # VMEM (9*F, C)
             b2_ref,                            # VMEM (1, C)
             o_ref,                             # VMEM (C, H*W)       output
             hpad_ref):                         # VMEM scratch (H+2, W+2, F)
        b = pl.program_id(0)

        # ---- conv1 (3x3, pad=1): 9-tap MXU accumulation, all in VMEM --------
        # Input preconditioning is folded through linearity:
        #   conv1(c_in * x) == c_in * conv1(x)
        h = jnp.zeros((HW, F), jnp.float32)
        for ki in range(3):
            for kj in range(3):
                t = ki * 3 + kj
                tap = xpad_ref[ki:ki + H, kj:kj + W, :]            # (H, W, C)
                h = h + jnp.dot(tap.reshape(HW, C),
                                w1_ref[t * C:(t + 1) * C, :],
                                preferred_element_type=jnp.float32)

        # ---- FiLM (+ conv1 bias, pre-fused into modb) + SiLU -----------------
        z = c_in_ref[b] * h + modb_ref[pl.ds(b, 1), :]             # (HW, F) + (1, F)
        hact = z * jax.nn.sigmoid(z)

        # ---- zero-pad hidden activations in VMEM scratch for conv2 -----------
        hpad_ref[...] = jnp.zeros_like(hpad_ref)
        hpad_ref[1:H + 1, 1:W + 1, :] = hact.reshape(H, W, F)

        # ---- conv2 (3x3, pad=1): 9-tap MXU accumulation ----------------------
        fx = jnp.zeros((HW, C), jnp.float32)
        for ki in range(3):
            for kj in range(3):
                t = ki * 3 + kj
                tap = hpad_ref[ki:ki + H, kj:kj + W, :]            # (H, W, F)
                fx = fx + jnp.dot(tap.reshape(HW, F),
                                  w2_ref[t * F:(t + 1) * F, :],
                                  preferred_element_type=jnp.float32)
        fx = fx + b2_ref[...]                                      # (HW, C)

        # ---- EDM output preconditioning, lane-dense (C, H*W) store -----------
        o_ref[...] = c_skip_ref[b] * xt_ref[...] + c_out_ref[b] * fx.T

    return kern


# ----------------------------------------------------------------------------
# Synthetic "get_edm_network" (EDMPrecond-style) parameters
# ----------------------------------------------------------------------------

def init_params(key):
    ks = jax.random.split(key, 8)
    s = 0.1
    return {
        "freqs":   jnp.arange(1, EMB // 2 + 1, dtype=jnp.float32) * 0.25,   # (16,)
        "map_w":   s * jax.random.normal(ks[0], (EMB, EMB), jnp.float32),
        "map_b":   s * jax.random.normal(ks[1], (EMB,), jnp.float32),
        "label_w": s * jax.random.normal(ks[2], (LABEL_DIM, EMB), jnp.float32),
        "mod_w":   s * jax.random.normal(ks[3], (EMB, HIDDEN), jnp.float32),
        "mod_b":   s * jax.random.normal(ks[4], (HIDDEN,), jnp.float32),
        # conv weights stored flat as (9*Cin, Cout) with rows ordered (tap, cin)
        "conv1_w": s * jax.random.normal(ks[5], (9 * IMG_C, HIDDEN), jnp.float32),
        "conv1_b": s * jax.random.normal(ks[6], (HIDDEN,), jnp.float32),
        "conv2_w": s * jax.random.normal(ks[7], (9 * HIDDEN, IMG_C), jnp.float32),
        "conv2_b": jnp.zeros((IMG_C,), jnp.float32),
    }


# ----------------------------------------------------------------------------
# Forward: EDM preconditioning around the fused Pallas kernel (NCHW in / out)
# ----------------------------------------------------------------------------

def edm_precond_forward(params, x_nchw, sigma, labels):
    N, C, H, W = x_nchw.shape
    HW = H * W
    sigma = sigma.astype(jnp.float32)

    c_skip = SIGMA_DATA ** 2 / (sigma ** 2 + SIGMA_DATA ** 2)
    c_out = sigma * SIGMA_DATA / jnp.sqrt(sigma ** 2 + SIGMA_DATA ** 2)
    c_in = 1.0 / jnp.sqrt(SIGMA_DATA ** 2 + sigma ** 2)
    c_noise = jnp.log(sigma) / 4.0

    # conditioning path (~2 KFLOPs) in plain XLA (too tiny to be worth a kernel)
    phase = c_noise[:, None] * params["freqs"][None, :]
    four = jnp.concatenate([jnp.cos(phase), jnp.sin(phase)], axis=-1)   # (N, EMB)
    emb = four @ params["map_w"] + params["map_b"]
    emb = emb * jax.nn.sigmoid(emb)                                     # SiLU
    emb = emb + labels.astype(jnp.float32) @ params["label_w"]
    mod = emb @ params["mod_w"] + params["mod_b"]                       # (N, HIDDEN)
    modb = mod + params["conv1_b"][None, :]                             # fused bias+mod

    # cheap layout glue (no 9x im2col in HBM; just a +2 border pad)
    x_t = x_nchw.reshape(N, C, HW)                                      # NCHW-flat
    x_nhwc = jnp.transpose(x_nchw, (0, 2, 3, 1))
    xpad = jnp.pad(x_nhwc, ((0, 0), (1, 1), (1, 1), (0, 0)))
    b2 = params["conv2_b"].reshape(1, C)

    out_t = pl.pallas_call(
        _make_fused_edm_kernel(H, W, C, HIDDEN),
        out_shape=jax.ShapeDtypeStruct((N, C, HW), jnp.float32),
        grid=(N,),
        in_specs=[
            pl.BlockSpec(memory_space=pltpu.SMEM),                        # c_in  (N,)
            pl.BlockSpec(memory_space=pltpu.SMEM),                        # c_skip(N,)
            pl.BlockSpec(memory_space=pltpu.SMEM),                        # c_out (N,)
            pl.BlockSpec((None, H + 2, W + 2, C), lambda b: (b, 0, 0, 0)),  # xpad
            pl.BlockSpec((None, C, HW), lambda b: (b, 0, 0)),             # x_t
            pl.BlockSpec((N, HIDDEN), lambda b: (0, 0)),                  # modb
            pl.BlockSpec((9 * C, HIDDEN), lambda b: (0, 0)),              # w1
            pl.BlockSpec((9 * HIDDEN, C), lambda b: (0, 0)),              # w2
            pl.BlockSpec((1, C), lambda b: (0, 0)),                       # b2
        ],
        out_specs=pl.BlockSpec((None, C, HW), lambda b: (b, 0, 0)),
        scratch_shapes=[pltpu.VMEM((H + 2, W + 2, HIDDEN), jnp.float32)],
        compiler_params=pltpu.CompilerParams(
            dimension_semantics=("parallel",)),
    )(c_in, c_skip, c_out, xpad, x_t, modb,
      params["conv1_w"], params["conv2_w"], b2)

    return out_t.reshape(N, C, H, W)


def edm_precond_reference(params, x_nchw, sigma, labels):
    """Pure-JAX reference (no Pallas), NCHW in / out."""
    N, C, H, W = x_nchw.shape
    x = jnp.transpose(x_nchw, (0, 2, 3, 1))    # NHWC
    sigma = sigma.astype(jnp.float32)
    c_skip = SIGMA_DATA ** 2 / (sigma ** 2 + SIGMA_DATA ** 2)
    c_out = sigma * SIGMA_DATA / jnp.sqrt(sigma ** 2 + SIGMA_DATA ** 2)
    c_in = 1.0 / jnp.sqrt(SIGMA_DATA ** 2 + sigma ** 2)
    c_noise = jnp.log(sigma) / 4.0

    x_in = c_in[:, None, None, None] * x
    phase = c_noise[:, None] * params["freqs"][None, :]
    four = jnp.concatenate([jnp.cos(phase), jnp.sin(phase)], axis=-1)
    emb = four @ params["map_w"] + params["map_b"]
    emb = emb * jax.nn.sigmoid(emb)
    emb = emb + labels.astype(jnp.float32) @ params["label_w"]
    mod = emb @ params["mod_w"] + params["mod_b"]

    def im2col(t):
        n, h, w, c = t.shape
        tp = jnp.pad(t, ((0, 0), (1, 1), (1, 1), (0, 0)))
        cols = [tp[:, ki:ki + h, kj:kj + w, :]
                for ki in range(3) for kj in range(3)]
        return jnp.stack(cols, axis=3).reshape(n * h * w, 9 * c)

    h1 = (im2col(x_in) @ params["conv1_w"]).reshape(N, H, W, HIDDEN)
    z = h1 + params["conv1_b"][None, None, None, :] + mod[:, None, None, :]
    h1 = z * jax.nn.sigmoid(z)
    fx = (im2col(h1) @ params["conv2_w"] + params["conv2_b"]).reshape(N, H, W, C)
    out = c_skip[:, None, None, None] * x + c_out[:, None, None, None] * fx
    return jnp.transpose(out, (0, 3, 1, 2))


# ----------------------------------------------------------------------------
# EDMUniModel wrapper (generator_turn forward semantics)
# ----------------------------------------------------------------------------

class EDMUniModelPallas:
    def __init__(self, seed=0, num_train_timesteps=1000):
        self.params = init_params(jax.random.PRNGKey(seed))
        self.use_consistency = False          # consistency_model_path is None
        self.num_train_timesteps = num_train_timesteps
        self.guidance_min_step = 0
        self.guidance_max_step = num_train_timesteps
        self._forward_fn = jax.jit(edm_precond_forward)

    def forward(self, scaled_noisy_image, timestep_sigma, labels,
                real_train_dict=None, compute_generator_gradient=False,
                generator_turn=False, guidance_turn=False,
                guidance_data_dict=None):
        assert (generator_turn and not guidance_turn) or \
               (guidance_turn and not generator_turn)
        if generator_turn:
            # sample_onestep (EDM path): generated = EDMPrecond(x, sigma, labels)
            generated_image = self._forward_fn(self.params, scaled_noisy_image,
                                               timestep_sigma, labels)
            # TODO(synk): compute_generator_gradient=True would call EDMGuidance
            # (distribution-matching loss); it is not defined in the reference
            # snippet, so loss_dict stays empty (matches the
            # compute_generator_gradient=False branch exactly).
            loss_dict = {}
            log_dict = {
                "generated_image": generated_image,
                "guidance_data_dict": {
                    "image": generated_image,
                    "label": labels,
                    "real_train_dict": real_train_dict,
                },
            }
            return loss_dict, log_dict
        else:
            # TODO(synk): guidance_turn path requires EDMGuidance, which is not
            # defined in the provided reference module.
            raise NotImplementedError("guidance_turn requires EDMGuidance")


# ----------------------------------------------------------------------------
# Main
# ----------------------------------------------------------------------------

if __name__ == "__main__":
    key = jax.random.PRNGKey(0)
    k_x, k_s, k_l = jax.random.split(key, 3)

    B, C, H, W = 2, IMG_C, 16, 16
    scaled_noisy_image = jax.random.normal(k_x, (B, C, H, W), jnp.float32)
    timestep_sigma = jnp.exp(jax.random.uniform(k_s, (B,), jnp.float32,
                                                minval=0.0, maxval=2.0))
    labels = jax.nn.one_hot(jax.random.randint(k_l, (B,), 0, LABEL_DIM),
                            LABEL_DIM, dtype=jnp.float32)

    model = EDMUniModelPallas(seed=0)
    loss_dict, log_dict = model.forward(
        scaled_noisy_image, timestep_sigma, labels,
        real_train_dict=None, compute_generator_gradient=False,
        generator_turn=True, guidance_turn=False)

    generated = jax.block_until_ready(log_dict["generated_image"])
    assert generated.shape == (B, C, H, W)
    assert loss_dict == {}

    # sanity check against the pure-JAX reference
    ref = jax.block_until_ready(
        edm_precond_reference(model.params, scaled_noisy_image,
                              timestep_sigma, labels))
    np.testing.assert_allclose(np.asarray(generated), np.asarray(ref),
                               rtol=2e-2, atol=2e-2)

    print("KERNEL_OK")
</pallas_src>

<mosaic_0001>
module attributes {stable_mosaic.version = 11 : i64} {
  func.func @kern(%arg0: i32, %arg1: memref<2xf32, #tpu.memory_space<smem>>, %arg2: memref<2xf32, #tpu.memory_space<smem>>, %arg3: memref<2xf32, #tpu.memory_space<smem>>, %arg4: memref<1x18x18x3xf32, #tpu.memory_space<vmem>>, %arg5: memref<1x3x256xf32, #tpu.memory_space<vmem>>, %arg6: memref<2x32xf32, #tpu.memory_space<vmem>>, %arg7: memref<27x32xf32, #tpu.memory_space<vmem>>, %arg8: memref<288x3xf32, #tpu.memory_space<vmem>>, %arg9: memref<1x3xf32, #tpu.memory_space<vmem>>, %arg10: memref<1x3x256xf32, #tpu.memory_space<vmem>>, %arg11: memref<18x18x32xf32, #tpu.memory_space<vmem>>) attributes {dimension_semantics = [#tpu.dimension_semantics<parallel>], iteration_bounds = array<i64: 2>, scalar_prefetch = 0 : i64, scratch_operands = 1 : i64, tpu.core_type = #tpu.core_type<tc>, window_params = [{transform_indices = @transform_0, window_bounds = array<i64: 2>}, {transform_indices = @transform_1, window_bounds = array<i64: 2>}, {transform_indices = @transform_2, window_bounds = array<i64: 2>}, {transform_indices = @transform_3, window_bounds = array<i64: 1, 18, 18, 3>}, {transform_indices = @transform_4, window_bounds = array<i64: 1, 3, 256>}, {pipeline_mode = #tpu.pipeline_mode<synchronous>, transform_indices = @transform_5, window_bounds = array<i64: 2, 32>}, {pipeline_mode = #tpu.pipeline_mode<synchronous>, transform_indices = @transform_6, window_bounds = array<i64: 27, 32>}, {pipeline_mode = #tpu.pipeline_mode<synchronous>, transform_indices = @transform_7, window_bounds = array<i64: 288, 3>}, {pipeline_mode = #tpu.pipeline_mode<synchronous>, transform_indices = @transform_8, window_bounds = array<i64: 1, 3>}, {transform_indices = @transform_9, window_bounds = array<i64: 1, 3, 256>}]} {
    %cst = arith.constant 0.000000e+00 : f32
    %0 = vector.broadcast %cst : f32 to vector<256x32xf32>
    %c0 = arith.constant 0 : index
    %c0_0 = arith.constant 0 : index
    %c0_1 = arith.constant 0 : index
    %c0_2 = arith.constant 0 : index
    %1 = vector.load %arg4[%c0, %c0_0, %c0_1, %c0_2] : memref<1x18x18x3xf32, #tpu.memory_space<vmem>>, vector<1x16x16x3xf32>
    %2 = vector.shape_cast %1 : vector<1x16x16x3xf32> to vector<16x16x3xf32>
    %3 = vector.shape_cast %2 : vector<16x16x3xf32> to vector<256x3xf32>
    %c0_3 = arith.constant 0 : index
    %c0_4 = arith.constant 0 : index
    %4 = vector.load %arg7[%c0_3, %c0_4] : memref<27x32xf32, #tpu.memory_space<vmem>>, vector<3x32xf32>
    %cst_5 = arith.constant dense<0.000000e+00> : vector<256x32xf32>
    %5 = tpu.matmul %3, %4, %cst_5 {dimension_numbers = #tpu.dot_dimension_numbers<[1], [0], [0], [1], [0, 0, 1, 1], [], []>} : vector<256x3xf32>, vector<3x32xf32>, vector<256x32xf32> -> vector<256x32xf32>
    %6 = arith.addf %0, %5 : vector<256x32xf32>
    %c0_6 = arith.constant 0 : index
    %c0_7 = arith.constant 0 : index
    %c1 = arith.constant 1 : index
    %c0_8 = arith.constant 0 : index
    %7 = vector.load %arg4[%c0_6, %c0_7, %c1, %c0_8] : memref<1x18x18x3xf32, #tpu.memory_space<vmem>>, vector<1x16x16x3xf32>
    %8 = vector.shape_cast %7 : vector<1x16x16x3xf32> to vector<16x16x3xf32>
    %9 = vector.shape_cast %8 : vector<16x16x3xf32> to vector<256x3xf32>
    %c3 = arith.constant 3 : index
    %c0_9 = arith.constant 0 : index
    %10 = vector.load %arg7[%c3, %c0_9] : memref<27x32xf32, #tpu.memory_space<vmem>>, vector<3x32xf32>
    %cst_10 = arith.constant dense<0.000000e+00> : vector<256x32xf32>
    %11 = tpu.matmul %9, %10, %cst_10 {dimension_numbers = #tpu.dot_dimension_numbers<[1], [0], [0], [1], [0, 0, 1, 1], [], []>} : vector<256x3xf32>, vector<3x32xf32>, vector<256x32xf32> -> vector<256x32xf32>
    %12 = arith.addf %6, %11 : vector<256x32xf32>
    %c0_11 = arith.constant 0 : index
    %c0_12 = arith.constant 0 : index
    %c2 = arith.constant 2 : index
    %c0_13 = arith.constant 0 : index
    %13 = vector.load %arg4[%c0_11, %c0_12, %c2, %c0_13] : memref<1x18x18x3xf32, #tpu.memory_space<vmem>>, vector<1x16x16x3xf32>
    %14 = vector.shape_cast %13 : vector<1x16x16x3xf32> to vector<16x16x3xf32>
    %15 = vector.shape_cast %14 : vector<16x16x3xf32> to vector<256x3xf32>
    %c6 = arith.constant 6 : index
    %c0_14 = arith.constant 0 : index
    %16 = vector.load %arg7[%c6, %c0_14] : memref<27x32xf32, #tpu.memory_space<vmem>>, vector<3x32xf32>
    %cst_15 = arith.constant dense<0.000000e+00> : vector<256x32xf32>
    %17 = tpu.matmul %15, %16, %cst_15 {dimension_numbers = #tpu.dot_dimension_numbers<[1], [0], [0], [1], [0, 0, 1, 1], [], []>} : vector<256x3xf32>, vector<3x32xf32>, vector<256x32xf32> -> vector<256x32xf32>
    %18 = arith.addf %12, %17 : vector<256x32xf32>
    %c0_16 = arith.constant 0 : index
    %c1_17 = arith.constant 1 : index
    %c0_18 = arith.constant 0 : index
    %c0_19 = arith.constant 0 : index
    %19 = vector.load %arg4[%c0_16, %c1_17, %c0_18, %c0_19] : memref<1x18x18x3xf32, #tpu.memory_space<vmem>>, vector<1x16x16x3xf32>
    %20 = vector.shape_cast %19 : vector<1x16x16x3xf32> to vector<16x16x3xf32>
    %21 = vector.shape_cast %20 : vector<16x16x3xf32> to vector<256x3xf32>
    %c9 = arith.constant 9 : index
    %c0_20 = arith.constant 0 : index
    %22 = vector.load %arg7[%c9, %c0_20] : memref<27x32xf32, #tpu.memory_space<vmem>>, vector<3x32xf32>
    %cst_21 = arith.constant dense<0.000000e+00> : vector<256x32xf32>
    %23 = tpu.matmul %21, %22, %cst_21 {dimension_numbers = #tpu.dot_dimension_numbers<[1], [0], [0], [1], [0, 0, 1, 1], [], []>} : vector<256x3xf32>, vector<3x32xf32>, vector<256x32xf32> -> vector<256x32xf32>
    %24 = arith.addf %18, %23 : vector<256x32xf32>
    %c0_22 = arith.constant 0 : index
    %c1_23 = arith.constant 1 : index
    %c1_24 = arith.constant 1 : index
    %c0_25 = arith.constant 0 : index
    %25 = vector.load %arg4[%c0_22, %c1_23, %c1_24, %c0_25] : memref<1x18x18x3xf32, #tpu.memory_space<vmem>>, vector<1x16x16x3xf32>
    %26 = vector.shape_cast %25 : vector<1x16x16x3xf32> to vector<16x16x3xf32>
    %27 = vector.shape_cast %26 : vector<16x16x3xf32> to vector<256x3xf32>
    %c12 = arith.constant 12 : index
    %c0_26 = arith.constant 0 : index
    %28 = vector.load %arg7[%c12, %c0_26] : memref<27x32xf32, #tpu.memory_space<vmem>>, vector<3x32xf32>
    %cst_27 = arith.constant dense<0.000000e+00> : vector<256x32xf32>
    %29 = tpu.matmul %27, %28, %cst_27 {dimension_numbers = #tpu.dot_dimension_numbers<[1], [0], [0], [1], [0, 0, 1, 1], [], []>} : vector<256x3xf32>, vector<3x32xf32>, vector<256x32xf32> -> vector<256x32xf32>
    %30 = arith.addf %24, %29 : vector<256x32xf32>
    %c0_28 = arith.constant 0 : index
    %c1_29 = arith.constant 1 : index
    %c2_30 = arith.constant 2 : index
    %c0_31 = arith.constant 0 : index
    %31 = vector.load %arg4[%c0_28, %c1_29, %c2_30, %c0_31] : memref<1x18x18x3xf32, #tpu.memory_space<vmem>>, vector<1x16x16x3xf32>
    %32 = vector.shape_cast %31 : vector<1x16x16x3xf32> to vector<16x16x3xf32>
    %33 = vector.shape_cast %32 : vector<16x16x3xf32> to vector<256x3xf32>
    %c15 = arith.constant 15 : index
    %c0_32 = arith.constant 0 : index
    %34 = vector.load %arg7[%c15, %c0_32] : memref<27x32xf32, #tpu.memory_space<vmem>>, vector<3x32xf32>
    %cst_33 = arith.constant dense<0.000000e+00> : vector<256x32xf32>
    %35 = tpu.matmul %33, %34, %cst_33 {dimension_numbers = #tpu.dot_dimension_numbers<[1], [0], [0], [1], [0, 0, 1, 1], [], []>} : vector<256x3xf32>, vector<3x32xf32>, vector<256x32xf32> -> vector<256x32xf32>
    %36 = arith.addf %30, %35 : vector<256x32xf32>
    %c0_34 = arith.constant 0 : index
    %c2_35 = arith.constant 2 : index
    %c0_36 = arith.constant 0 : index
    %c0_37 = arith.constant 0 : index
    %37 = vector.load %arg4[%c0_34, %c2_35, %c0_36, %c0_37] : memref<1x18x18x3xf32, #tpu.memory_space<vmem>>, vector<1x16x16x3xf32>
    %38 = vector.shape_cast %37 : vector<1x16x16x3xf32> to vector<16x16x3xf32>
    %39 = vector.shape_cast %38 : vector<16x16x3xf32> to vector<256x3xf32>
    %c18 = arith.constant 18 : index
    %c0_38 = arith.constant 0 : index
    %40 = vector.load %arg7[%c18, %c0_38] : memref<27x32xf32, #tpu.memory_space<vmem>>, vector<3x32xf32>
    %cst_39 = arith.constant dense<0.000000e+00> : vector<256x32xf32>
    %41 = tpu.matmul %39, %40, %cst_39 {dimension_numbers = #tpu.dot_dimension_numbers<[1], [0], [0], [1], [0, 0, 1, 1], [], []>} : vector<256x3xf32>, vector<3x32xf32>, vector<256x32xf32> -> vector<256x32xf32>
    %42 = arith.addf %36, %41 : vector<256x32xf32>
    %c0_40 = arith.constant 0 : index
    %c2_41 = arith.constant 2 : index
    %c1_42 = arith.constant 1 : index
    %c0_43 = arith.constant 0 : index
    %43 = vector.load %arg4[%c0_40, %c2_41, %c1_42, %c0_43] : memref<1x18x18x3xf32, #tpu.memory_space<vmem>>, vector<1x16x16x3xf32>
    %44 = vector.shape_cast %43 : vector<1x16x16x3xf32> to vector<16x16x3xf32>
    %45 = vector.shape_cast %44 : vector<16x16x3xf32> to vector<256x3xf32>
    %c21 = arith.constant 21 : index
    %c0_44 = arith.constant 0 : index
    %46 = vector.load %arg7[%c21, %c0_44] : memref<27x32xf32, #tpu.memory_space<vmem>>, vector<3x32xf32>
    %cst_45 = arith.constant dense<0.000000e+00> : vector<256x32xf32>
    %47 = tpu.matmul %45, %46, %cst_45 {dimension_numbers = #tpu.dot_dimension_numbers<[1], [0], [0], [1], [0, 0, 1, 1], [], []>} : vector<256x3xf32>, vector<3x32xf32>, vector<256x32xf32> -> vector<256x32xf32>
    %48 = arith.addf %42, %47 : vector<256x32xf32>
    %c0_46 = arith.constant 0 : index
    %c2_47 = arith.constant 2 : index
    %c2_48 = arith.constant 2 : index
    %c0_49 = arith.constant 0 : index
    %49 = vector.load %arg4[%c0_46, %c2_47, %c2_48, %c0_49] : memref<1x18x18x3xf32, #tpu.memory_space<vmem>>, vector<1x16x16x3xf32>
    %50 = vector.shape_cast %49 : vector<1x16x16x3xf32> to vector<16x16x3xf32>
    %51 = vector.shape_cast %50 : vector<16x16x3xf32> to vector<256x3xf32>
    %c24 = arith.constant 24 : index
    %c0_50 = arith.constant 0 : index
    %52 = vector.load %arg7[%c24, %c0_50] : memref<27x32xf32, #tpu.memory_space<vmem>>, vector<3x32xf32>
    %cst_51 = arith.constant dense<0.000000e+00> : vector<256x32xf32>
    %53 = tpu.matmul %51, %52, %cst_51 {dimension_numbers = #tpu.dot_dimension_numbers<[1], [0], [0], [1], [0, 0, 1, 1], [], []>} : vector<256x3xf32>, vector<3x32xf32>, vector<256x32xf32> -> vector<256x32xf32>
    %54 = arith.addf %48, %53 : vector<256x32xf32>
    %55 = arith.index_cast %arg0 : i32 to index
    %56 = memref.load %arg1[%55] : memref<2xf32, #tpu.memory_space<smem>>
    %57 = vector.broadcast %56 : f32 to vector<256x32xf32>
    %58 = arith.mulf %57, %54 : vector<256x32xf32>
    %59 = arith.index_cast %arg0 : i32 to index
    %c0_52 = arith.constant 0 : index
    %60 = vector.load %arg6[%59, %c0_52] : memref<2x32xf32, #tpu.memory_space<vmem>>, vector<1x32xf32>
    %61 = vector.broadcast %60 : vector<1x32xf32> to vector<256x32xf32>
    %62 = arith.addf %58, %61 : vector<256x32xf32>
    %63 = arith.negf %62 : vector<256x32xf32>
    %64 = math.exp %63 : vector<256x32xf32>
    %cst_53 = arith.constant 1.000000e+00 : f32
    %65 = vector.broadcast %cst_53 : f32 to vector<256x32xf32>
    %66 = arith.addf %65, %64 : vector<256x32xf32>
    %67 = arith.divf %65, %66 : vector<256x32xf32>
    %68 = arith.mulf %62, %67 : vector<256x32xf32>
    %cst_54 = arith.constant 0.000000e+00 : f32
    %69 = vector.broadcast %cst_54 : f32 to vector<18x18x32xf32>
    %c0_55 = arith.constant 0 : index
    %c0_56 = arith.constant 0 : index
    %c0_57 = arith.constant 0 : index
    %70 = vector.load %arg11[%c0_55, %c0_56, %c0_57] : memref<18x18x32xf32, #tpu.memory_space<vmem>>, vector<18x18x32xf32>
    tpu.vector_store %arg11[%c0_55, %c0_56, %c0_57], %69 {strides = array<i32>} : memref<18x18x32xf32, #tpu.memory_space<vmem>>, vector<18x18x32xf32>,
    %71 = vector.shape_cast %68 : vector<256x32xf32> to vector<16x16x32xf32>
    %c1_58 = arith.constant 1 : index
    %c1_59 = arith.constant 1 : index
    %c0_60 = arith.constant 0 : index
    %72 = vector.load %arg11[%c1_58, %c1_59, %c0_60] : memref<18x18x32xf32, #tpu.memory_space<vmem>>, vector<16x16x32xf32>
    tpu.vector_store %arg11[%c1_58, %c1_59, %c0_60], %71 {strides = array<i32>} : memref<18x18x32xf32, #tpu.memory_space<vmem>>, vector<16x16x32xf32>,
    %cst_61 = arith.constant 0.000000e+00 : f32
    %73 = vector.broadcast %cst_61 : f32 to vector<256x3xf32>
    %c0_62 = arith.constant 0 : index
    %c0_63 = arith.constant 0 : index
    %c0_64 = arith.constant 0 : index
    %74 = vector.load %arg11[%c0_62, %c0_63, %c0_64] : memref<18x18x32xf32, #tpu.memory_space<vmem>>, vector<16x16x32xf32>
    %75 = vector.shape_cast %74 : vector<16x16x32xf32> to vector<256x32xf32>
    %c0_65 = arith.constant 0 : index
    %c0_66 = arith.constant 0 : index
    %76 = vector.load %arg8[%c0_65, %c0_66] : memref<288x3xf32, #tpu.memory_space<vmem>>, vector<32x3xf32>
    %cst_67 = arith.constant dense<0.000000e+00> : vector<256x3xf32>
    %77 = tpu.matmul %75, %76, %cst_67 {dimension_numbers = #tpu.dot_dimension_numbers<[1], [0], [0], [1], [0, 0, 1, 1], [], []>} : vector<256x32xf32>, vector<32x3xf32>, vector<256x3xf32> -> vector<256x3xf32>
    %78 = arith.addf %73, %77 : vector<256x3xf32>
    %c0_68 = arith.constant 0 : index
    %c1_69 = arith.constant 1 : index
    %c0_70 = arith.constant 0 : index
    %79 = vector.load %arg11[%c0_68, %c1_69, %c0_70] : memref<18x18x32xf32, #tpu.memory_space<vmem>>, vector<16x16x32xf32>
    %80 = vector.shape_cast %79 : vector<16x16x32xf32> to vector<256x32xf32>
    %c32 = arith.constant 32 : index
    %c0_71 = arith.constant 0 : index
    %81 = vector.load %arg8[%c32, %c0_71] : memref<288x3xf32, #tpu.memory_space<vmem>>, vector<32x3xf32>
    %cst_72 = arith.constant dense<0.000000e+00> : vector<256x3xf32>
    %82 = tpu.matmul %80, %81, %cst_72 {dimension_numbers = #tpu.dot_dimension_numbers<[1], [0], [0], [1], [0, 0, 1, 1], [], []>} : vector<256x32xf32>, vector<32x3xf32>, vector<256x3xf32> -> vector<256x3xf32>
    %83 = arith.addf %78, %82 : vector<256x3xf32>
    %c0_73 = arith.constant 0 : index
    %c2_74 = arith.constant 2 : index
    %c0_75 = arith.constant 0 : index
    %84 = vector.load %arg11[%c0_73, %c2_74, %c0_75] : memref<18x18x32xf32, #tpu.memory_space<vmem>>, vector<16x16x32xf32>
    %85 = vector.shape_cast %84 : vector<16x16x32xf32> to vector<256x32xf32>
    %c64 = arith.constant 64 : index
    %c0_76 = arith.constant 0 : index
    %86 = vector.load %arg8[%c64, %c0_76] : memref<288x3xf32, #tpu.memory_space<vmem>>, vector<32x3xf32>
    %cst_77 = arith.constant dense<0.000000e+00> : vector<256x3xf32>
    %87 = tpu.matmul %85, %86, %cst_77 {dimension_numbers = #tpu.dot_dimension_numbers<[1], [0], [0], [1], [0, 0, 1, 1], [], []>} : vector<256x32xf32>, vector<32x3xf32>, vector<256x3xf32> -> vector<256x3xf32>
    %88 = arith.addf %83, %87 : vector<256x3xf32>
    %c1_78 = arith.constant 1 : index
    %c0_79 = arith.constant 0 : index
    %c0_80 = arith.constant 0 : index
    %89 = vector.load %arg11[%c1_78, %c0_79, %c0_80] : memref<18x18x32xf32, #tpu.memory_space<vmem>>, vector<16x16x32xf32>
    %90 = vector.shape_cast %89 : vector<16x16x32xf32> to vector<256x32xf32>
    %c96 = arith.constant 96 : index
    %c0_81 = arith.constant 0 : index
    %91 = vector.load %arg8[%c96, %c0_81] : memref<288x3xf32, #tpu.memory_space<vmem>>, vector<32x3xf32>
    %cst_82 = arith.constant dense<0.000000e+00> : vector<256x3xf32>
    %92 = tpu.matmul %90, %91, %cst_82 {dimension_numbers = #tpu.dot_dimension_numbers<[1], [0], [0], [1], [0, 0, 1, 1], [], []>} : vector<256x32xf32>, vector<32x3xf32>, vector<256x3xf32> -> vector<256x3xf32>
    %93 = arith.addf %88, %92 : vector<256x3xf32>
    %c1_83 = arith.constant 1 : index
    %c1_84 = arith.constant 1 : index
    %c0_85 = arith.constant 0 : index
    %94 = vector.load %arg11[%c1_83, %c1_84, %c0_85] : memref<18x18x32xf32, #tpu.memory_space<vmem>>, vector<16x16x32xf32>
    %95 = vector.shape_cast %94 : vector<16x16x32xf32> to vector<256x32xf32>
    %c128 = arith.constant 128 : index
    %c0_86 = arith.constant 0 : index
    %96 = vector.load %arg8[%c128, %c0_86] : memref<288x3xf32, #tpu.memory_space<vmem>>, vector<32x3xf32>
    %cst_87 = arith.constant dense<0.000000e+00> : vector<256x3xf32>
    %97 = tpu.matmul %95, %96, %cst_87 {dimension_numbers = #tpu.dot_dimension_numbers<[1], [0], [0], [1], [0, 0, 1, 1], [], []>} : vector<256x32xf32>, vector<32x3xf32>, vector<256x3xf32> -> vector<256x3xf32>
    %98 = arith.addf %93, %97 : vector<256x3xf32>
    %c1_88 = arith.constant 1 : index
    %c2_89 = arith.constant 2 : index
    %c0_90 = arith.constant 0 : index
    %99 = vector.load %arg11[%c1_88, %c2_89, %c0_90] : memref<18x18x32xf32, #tpu.memory_space<vmem>>, vector<16x16x32xf32>
    %100 = vector.shape_cast %99 : vector<16x16x32xf32> to vector<256x32xf32>
    %c160 = arith.constant 160 : index
    %c0_91 = arith.constant 0 : index
    %101 = vector.load %arg8[%c160, %c0_91] : memref<288x3xf32, #tpu.memory_space<vmem>>, vector<32x3xf32>
    %cst_92 = arith.constant dense<0.000000e+00> : vector<256x3xf32>
    %102 = tpu.matmul %100, %101, %cst_92 {dimension_numbers = #tpu.dot_dimension_numbers<[1], [0], [0], [1], [0, 0, 1, 1], [], []>} : vector<256x32xf32>, vector<32x3xf32>, vector<256x3xf32> -> vector<256x3xf32>
    %103 = arith.addf %98, %102 : vector<256x3xf32>
    %c2_93 = arith.constant 2 : index
    %c0_94 = arith.constant 0 : index
    %c0_95 = arith.constant 0 : index
    %104 = vector.load %arg11[%c2_93, %c0_94, %c0_95] : memref<18x18x32xf32, #tpu.memory_space<vmem>>, vector<16x16x32xf32>
    %105 = vector.shape_cast %104 : vector<16x16x32xf32> to vector<256x32xf32>
    %c192 = arith.constant 192 : index
    %c0_96 = arith.constant 0 : index
    %106 = vector.load %arg8[%c192, %c0_96] : memref<288x3xf32, #tpu.memory_space<vmem>>, vector<32x3xf32>
    %cst_97 = arith.constant dense<0.000000e+00> : vector<256x3xf32>
    %107 = tpu.matmul %105, %106, %cst_97 {dimension_numbers = #tpu.dot_dimension_numbers<[1], [0], [0], [1], [0, 0, 1, 1], [], []>} : vector<256x32xf32>, vector<32x3xf32>, vector<256x3xf32> -> vector<256x3xf32>
    %108 = arith.addf %103, %107 : vector<256x3xf32>
    %c2_98 = arith.constant 2 : index
    %c1_99 = arith.constant 1 : index
    %c0_100 = arith.constant 0 : index
    %109 = vector.load %arg11[%c2_98, %c1_99, %c0_100] : memref<18x18x32xf32, #tpu.memory_space<vmem>>, vector<16x16x32xf32>
    %110 = vector.shape_cast %109 : vector<16x16x32xf32> to vector<256x32xf32>
    %c224 = arith.constant 224 : index
    %c0_101 = arith.constant 0 : index
    %111 = vector.load %arg8[%c224, %c0_101] : memref<288x3xf32, #tpu.memory_space<vmem>>, vector<32x3xf32>
    %cst_102 = arith.constant dense<0.000000e+00> : vector<256x3xf32>
    %112 = tpu.matmul %110, %111, %cst_102 {dimension_numbers = #tpu.dot_dimension_numbers<[1], [0], [0], [1], [0, 0, 1, 1], [], []>} : vector<256x32xf32>, vector<32x3xf32>, vector<256x3xf32> -> vector<256x3xf32>
    %113 = arith.addf %108, %112 : vector<256x3xf32>
    %c2_103 = arith.constant 2 : index
    %c2_104 = arith.constant 2 : index
    %c0_105 = arith.constant 0 : index
    %114 = vector.load %arg11[%c2_103, %c2_104, %c0_105] : memref<18x18x32xf32, #tpu.memory_space<vmem>>, vector<16x16x32xf32>
    %115 = vector.shape_cast %114 : vector<16x16x32xf32> to vector<256x32xf32>
    %c256 = arith.constant 256 : index
    %c0_106 = arith.constant 0 : index
    %116 = vector.load %arg8[%c256, %c0_106] : memref<288x3xf32, #tpu.memory_space<vmem>>, vector<32x3xf32>
    %cst_107 = arith.constant dense<0.000000e+00> : vector<256x3xf32>
    %117 = tpu.matmul %115, %116, %cst_107 {dimension_numbers = #tpu.dot_dimension_numbers<[1], [0], [0], [1], [0, 0, 1, 1], [], []>} : vector<256x32xf32>, vector<32x3xf32>, vector<256x3xf32> -> vector<256x3xf32>
    %118 = arith.addf %113, %117 : vector<256x3xf32>
    %c0_108 = arith.constant 0 : index
    %c0_109 = arith.constant 0 : index
    %119 = vector.load %arg9[%c0_108, %c0_109] : memref<1x3xf32, #tpu.memory_space<vmem>>, vector<1x3xf32>
    %120 = vector.broadcast %119 : vector<1x3xf32> to vector<256x3xf32>
    %121 = arith.addf %118, %120 : vector<256x3xf32>
    %122 = arith.index_cast %arg0 : i32 to index
    %123 = memref.load %arg2[%122] : memref<2xf32, #tpu.memory_space<smem>>
    %c0_110 = arith.constant 0 : index
    %c0_111 = arith.constant 0 : index
    %c0_112 = arith.constant 0 : index
    %124 = vector.load %arg5[%c0_110, %c0_111, %c0_112] : memref<1x3x256xf32, #tpu.memory_space<vmem>>, vector<1x3x256xf32>
    %125 = vector.shape_cast %124 : vector<1x3x256xf32> to vector<3x256xf32>
    %126 = vector.broadcast %123 : f32 to vector<3x256xf32>
    %127 = arith.mulf %126, %125 : vector<3x256xf32>
    %128 = arith.index_cast %arg0 : i32 to index
    %129 = memref.load %arg3[%128] : memref<2xf32, #tpu.memory_space<smem>>
    %130 = tpu.transpose %121, [1, 0] : vector<256x3xf32> -> vector<3x256xf32>
    %131 = vector.broadcast %129 : f32 to vector<3x256xf32>
    %132 = arith.mulf %131, %130 : vector<3x256xf32>
    %133 = arith.addf %127, %132 : vector<3x256xf32>
    %c0_113 = arith.constant 0 : index
    %c0_114 = arith.constant 0 : index
    %c0_115 = arith.constant 0 : index
    %134 = vector.load %arg10[%c0_113, %c0_114, %c0_115] : memref<1x3x256xf32, #tpu.memory_space<vmem>>, vector<1x3x256xf32>
    %135 = vector.shape_cast %134 : vector<1x3x256xf32> to vector<3x256xf32>
    %136 = vector.shape_cast %133 : vector<3x256xf32> to vector<1x3x256xf32>
    tpu.vector_store %arg10[%c0_113, %c0_114, %c0_115], %136 {strides = array<i32>} : memref<1x3x256xf32, #tpu.memory_space<vmem>>, vector<1x3x256xf32>,
    return
  }
  func.func @transform_0(%arg0: i32) -> i32 {
    %c0_i32 = arith.constant 0 : i32
    %c0_i32_0 = arith.constant 0 : i32
    return %c0_i32 : i32
  }
  func.func @transform_1(%arg0: i32) -> i32 {
    %c0_i32 = arith.constant 0 : i32
    %c0_i32_0 = arith.constant 0 : i32
    return %c0_i32 : i32
  }
  func.func @transform_2(%arg0: i32) -> i32 {
    %c0_i32 = arith.constant 0 : i32
    %c0_i32_0 = arith.constant 0 : i32
    return %c0_i32 : i32
  }
  func.func @transform_3(%arg0: i32) -> (i32, i32, i32, i32) {
    %c0_i32 = arith.constant 0 : i32
    %c0_i32_0 = arith.constant 0 : i32
    %c0_i32_1 = arith.constant 0 : i32
    %c0_i32_2 = arith.constant 0 : i32
    return %arg0, %c0_i32, %c0_i32_0, %c0_i32_1 : i32, i32, i32, i32
  }
  func.func @transform_4(%arg0: i32) -> (i32, i32, i32) {
    %c0_i32 = arith.constant 0 : i32
    %c0_i32_0 = arith.constant 0 : i32
    %c0_i32_1 = arith.constant 0 : i32
    return %arg0, %c0_i32, %c0_i32_0 : i32, i32, i32
  }
  func.func @transform_5(%arg0: i32) -> (i32, i32) {
    %c0_i32 = arith.constant 0 : i32
    %c0_i32_0 = arith.constant 0 : i32
    %c0_i32_1 = arith.constant 0 : i32
    return %c0_i32, %c0_i32_0 : i32, i32
  }
  func.func @transform_6(%arg0: i32) -> (i32, i32) {
    %c0_i32 = arith.constant 0 : i32
    %c0_i32_0 = arith.constant 0 : i32
    %c0_i32_1 = arith.constant 0 : i32
    return %c0_i32, %c0_i32_0 : i32, i32
  }
  func.func @transform_7(%arg0: i32) -> (i32, i32) {
    %c0_i32 = arith.constant 0 : i32
    %c0_i32_0 = arith.constant 0 : i32
    %c0_i32_1 = arith.constant 0 : i32
    return %c0_i32, %c0_i32_0 : i32, i32
  }
  func.func @transform_8(%arg0: i32) -> (i32, i32) {
    %c0_i32 = arith.constant 0 : i32
    %c0_i32_0 = arith.constant 0 : i32
    %c0_i32_1 = arith.constant 0 : i32
    return %c0_i32, %c0_i32_0 : i32, i32
  }
  func.func @transform_9(%arg0: i32) -> (i32, i32, i32) {
    %c0_i32 = arith.constant 0 : i32
    %c0_i32_0 = arith.constant 0 : i32
    %c0_i32_1 = arith.constant 0 : i32
    return %arg0, %c0_i32, %c0_i32_0 : i32, i32, i32
  }
}

</mosaic_0001>

<llo_original>
// kernel: edm_precond_forward.1
$region0: #{edm_precond_forward.1}
  #allocation0 [shape = 'u32[]', space=smem, size = 0x4, offset = 0x4, fixed_abs, tag = 'smem constant byte address 0x4 - core index']
  #allocation1 [shape = 'u32[72,128]{1,0:T(1,128)}', space=vmem, size = 0x9000, scoped, tag = 'internal scratch']
  #allocation2 [shape = 'f32[18,18,32]{2,1,0:T(8,128)}', space=vmem, size = 0x36000, scoped, tag = 'scratch operand']
  %s0 = inlined_call_operand.vmem [shape: f32[2], index: 0, kind: input, shape index: {}]
  %s1 = inlined_call_operand.vmem [shape: f32[2], index: 1, kind: input, shape index: {}]
  %s2 = inlined_call_operand.vmem [shape: f32[2], index: 2, kind: input, shape index: {}]
  %s3 = inlined_call_operand.vmem [shape: f32[2,18,18,3], index: 3, kind: input, shape index: {}]
  %s4 = inlined_call_operand.vmem [shape: f32[2,3,256], index: 4, kind: input, shape index: {}]
  %s5 = inlined_call_operand.vmem [shape: f32[2,32], index: 5, kind: input, shape index: {}]
  %s6 = inlined_call_operand.vmem [shape: f32[27,32], index: 6, kind: input, shape index: {}]
  %s7 = inlined_call_operand.vmem [shape: f32[288,3], index: 7, kind: input, shape index: {}]
  %s8 = inlined_call_operand.vmem [shape: f32[1,3], index: 8, kind: input, shape index: {}]
  %s9 = inlined_call_operand.vmem [shape: f32[2,3,256], index: 9, kind: output, shape index: {}]
  %s10 = sld [smem:[#allocation0]]
  $region81: #{edm_precond_forward.1} parent=0
    _
  %s12 = ssub.s32 1, %s10
  %s13 = scalar_select 0, %s12, %s10
  $region1: #{edm_precond_forward.1} parent=0
    #allocation3 [shape = 'u8[512]{0}', space=smem, size = 0x200, scoped, tag = 'input window, operand 0, single buffered']
    #allocation4 [shape = 's32[2]{0}', space=sflag, size = 0x8, scoped, tag = 'scoped memory for edm_precond_forward.1']
    #allocation5 [shape = 'u8[512]{0}', space=smem, size = 0x200, scoped, tag = 'input window, operand 1, single buffered']
    #allocation6 [shape = 's32[1]{0}', space=sflag, size = 0x4, scoped, tag = 'scoped memory for edm_precond_forward.1']
    #allocation7 [shape = 'u8[512]{0}', space=smem, size = 0x200, scoped, tag = 'input window, operand 2, single buffered']
    %14 = vsyncpa [#allocation4], 0
    %15 = vsyncpa [#allocation6], 0
    loop: start=0, step=1, limit=4
    $region2: #{edm_precond_forward.1} parent=1 // loop_pre_header
      _
    $region3: #{edm_precond_forward.1} parent=1 // loop_header
      %s17 = sphi 0, %s21
      %p18 = scmp.ge.s32.totalorder %s17, 4
      %s25 = sphi 0, %s25
      %s27 = sphi 0, %s25
      %s28 = sphi 0, %s27
      %s42 = sphi 0, %s28
      %s46 = sphi 0, %s46
      %s48 = sphi 0, %s46
      %s49 = sphi 0, %s48
      %s63 = sphi 0, %s49
      %s67 = sphi 0, %s67
      %s69 = sphi 0, %s67
      %s70 = sphi 0, %s69
      %s84 = sphi 0, %s70
      %s90 = sphi 0, %s92
      %s93 = sphi 0, %s90
      %s94 = sphi 0, %s93
      %s110 = sphi 0, %s94
      %s116 = sphi 0, %s118
      %s119 = sphi 0, %s116
      %s120 = sphi 0, %s119
      %s136 = sphi 0, %s120
      %s140 = sphi 0, %s140
      %s142 = sphi 0, %s140
      %s143 = sphi 0, %s142
      %s157 = sphi 0, %s143
      %s161 = sphi 0, %s161
      %s163 = sphi 0, %s161
      %s164 = sphi 0, %s163
      %s178 = sphi 0, %s164
      %s182 = sphi 0, %s182
      %s184 = sphi 0, %s182
      %s185 = sphi 0, %s184
      %s199 = sphi 0, %s185
      %s203 = sphi 0, %s203
      %s205 = sphi 0, %s203
      %s206 = sphi 0, %s205
      %s220 = sphi 0, %s206
      %s226 = sphi 0, %s228
      %s229 = sphi 0, %s226
      %s230 = sphi 0, %s229
      %s246 = sphi 0, %s230
    $region4: #{edm_precond_forward.1} parent=1 // loop_header_branch
      %20 = sbr.rel (%p18) target = $region8
    $region5: #{edm_precond_forward.1} parent=1 // loop_body
      %s22 = ssub.s32 %s17, 1
      %s23 = ssub.s32 %s17, 2
      %s24 = sadd.s32 %s17, 1
      %s26 = sadd.s32 %s25, 1
      %p29 = scmp.eq.s32.totalorder %s17, 1
      %p30 = scmp.ne.s32.totalorder %s25, %s27
      %p31 = scmp.eq.s32.totalorder %s17, 0
      %p32 = por %p30, %p31
      %p33 = scmp.ne.s32.totalorder %s25, %s27
      %p34 = scmp.eq.s32.totalorder %s22, 1
      %p35 = por %p33, %p34
      %p36 = scmp.ne.s32.totalorder %s27, %s28
      %p37 = scmp.eq.s32.totalorder %s22, 0
      %p38 = por %p36, %p37
      %p39 = scmp.ne.s32.totalorder %s27, %s28
      %p40 = scmp.eq.s32.totalorder %s23, 1
      %p41 = por %p39, %p40
      %p43 = scmp.ne.s32.totalorder %s28, %s42
      %p44 = scmp.eq.s32.totalorder %s23, 0
      %p45 = por %p43, %p44
      %s47 = sadd.s32 %s46, 1
      %p50 = scmp.eq.s32.totalorder %s17, 1
      %p51 = scmp.ne.s32.totalorder %s46, %s48
      %p52 = scmp.eq.s32.totalorder %s17, 0
      %p53 = por %p51, %p52
      %p54 = scmp.ne.s32.totalorder %s46, %s48
      %p55 = scmp.eq.s32.totalorder %s22, 1
      %p56 = por %p54, %p55
      %p57 = scmp.ne.s32.totalorder %s48, %s49
      %p58 = scmp.eq.s32.totalorder %s22, 0
      %p59 = por %p57, %p58
      %p60 = scmp.ne.s32.totalorder %s48, %s49
      %p61 = scmp.eq.s32.totalorder %s23, 1
      %p62 = por %p60, %p61
      %p64 = scmp.ne.s32.totalorder %s49, %s63
      %p65 = scmp.eq.s32.totalorder %s23, 0
      %p66 = por %p64, %p65
      %s68 = sadd.s32 %s67, 1
      %p71 = scmp.eq.s32.totalorder %s17, 1
      %p72 = scmp.ne.s32.totalorder %s67, %s69
      %p73 = scmp.eq.s32.totalorder %s17, 0
      %p74 = por %p72, %p73
      %p75 = scmp.ne.s32.totalorder %s67, %s69
      %p76 = scmp.eq.s32.totalorder %s22, 1
      %p77 = por %p75, %p76
      %p78 = scmp.ne.s32.totalorder %s69, %s70
      %p79 = scmp.eq.s32.totalorder %s22, 0
      %p80 = por %p78, %p79
      %p81 = scmp.ne.s32.totalorder %s69, %s70
      %p82 = scmp.eq.s32.totalorder %s23, 1
      %p83 = por %p81, %p82
      %p85 = scmp.ne.s32.totalorder %s70, %s84
      %p86 = scmp.eq.s32.totalorder %s23, 0
      %p87 = por %p85, %p86
      %s88 = ssub.s32 %s17, %s24
      %p89 = scmp.eq.s32.totalorder %s88, 0
      %s91 = sadd.s32 %s90, 1
      %s92 = scalar_select %p89, %s90, %s91
      %p95 = pneg %p89
      %p96 = scmp.eq.s32.totalorder %s17, 1
      %p97 = por %p95, %p96
      %p98 = scmp.ne.s32.totalorder %s90, %s93
      %p99 = scmp.eq.s32.totalorder %s17, 0
      %p100 = por %p98, %p99
      %p101 = scmp.ne.s32.totalorder %s90, %s93
      %p102 = scmp.eq.s32.totalorder %s22, 1
      %p103 = por %p101, %p102
      %p104 = scmp.ne.s32.totalorder %s93, %s94
      %p105 = scmp.eq.s32.totalorder %s22, 0
      %p106 = por %p104, %p105
      %p107 = scmp.ne.s32.totalorder %s93, %s94
      %p108 = scmp.eq.s32.totalorder %s23, 1
      %p109 = por %p107, %p108
      %p111 = scmp.ne.s32.totalorder %s94, %s110
      %p112 = scmp.eq.s32.totalorder %s23, 0
      %p113 = por %p111, %p112
      %s114 = ssub.s32 %s17, %s24
      %p115 = scmp.eq.s32.totalorder %s114, 0
      %s117 = sadd.s32 %s116, 1
      %s118 = scalar_select %p115, %s116, %s117
      %p121 = pneg %p115
      %p122 = scmp.eq.s32.totalorder %s17, 1
      %p123 = por %p121, %p122
      %p124 = scmp.ne.s32.totalorder %s116, %s119
      %p125 = scmp.eq.s32.totalorder %s17, 0
      %p126 = por %p124, %p125
      %p127 = scmp.ne.s32.totalorder %s116, %s119
      %p128 = scmp.eq.s32.totalorder %s22, 1
      %p129 = por %p127, %p128
      %p130 = scmp.ne.s32.totalorder %s119, %s120
      %p131 = scmp.eq.s32.totalorder %s22, 0
      %p132 = por %p130, %p131
      %p133 = scmp.ne.s32.totalorder %s119, %s120
      %p134 = scmp.eq.s32.totalorder %s23, 1
      %p135 = por %p133, %p134
      %p137 = scmp.ne.s32.totalorder %s120, %s136
      %p138 = scmp.eq.s32.totalorder %s23, 0
      %p139 = por %p137, %p138
      %s141 = sadd.s32 %s140, 1
      %p144 = scmp.eq.s32.totalorder %s17, 1
      %p145 = scmp.ne.s32.totalorder %s140, %s142
      %p146 = scmp.eq.s32.totalorder %s17, 0
      %p147 = por %p145, %p146
      %p148 = scmp.ne.s32.totalorder %s140, %s142
      %p149 = scmp.eq.s32.totalorder %s22, 1
      %p150 = por %p148, %p149
      %p151 = scmp.ne.s32.totalorder %s142, %s143
      %p152 = scmp.eq.s32.totalorder %s22, 0
      %p153 = por %p151, %p152
      %p154 = scmp.ne.s32.totalorder %s142, %s143
      %p155 = scmp.eq.s32.totalorder %s23, 1
      %p156 = por %p154, %p155
      %p158 = scmp.ne.s32.totalorder %s143, %s157
      %p159 = scmp.eq.s32.totalorder %s23, 0
      %p160 = por %p158, %p159
      %s162 = sadd.s32 %s161, 1
      %p165 = scmp.eq.s32.totalorder %s17, 1
      %p166 = scmp.ne.s32.totalorder %s161, %s163
      %p167 = scmp.eq.s32.totalorder %s17, 0
      %p168 = por %p166, %p167
      %p169 = scmp.ne.s32.totalorder %s161, %s163
      %p170 = scmp.eq.s32.totalorder %s22, 1
      %p171 = por %p169, %p170
      %p172 = scmp.ne.s32.totalorder %s163, %s164
      %p173 = scmp.eq.s32.totalorder %s22, 0
      %p174 = por %p172, %p173
      %p175 = scmp.ne.s32.totalorder %s163, %s164
      %p176 = scmp.eq.s32.totalorder %s23, 1
      %p177 = por %p175, %p176
      %p179 = scmp.ne.s32.totalorder %s164, %s178
      %p180 = scmp.eq.s32.totalorder %s23, 0
      %p181 = por %p179, %p180
      %s183 = sadd.s32 %s182, 1
      %p186 = scmp.eq.s32.totalorder %s17, 1
      %p187 = scmp.ne.s32.totalorder %s182, %s184
      %p188 = scmp.eq.s32.totalorder %s17, 0
      %p189 = por %p187, %p188
      %p190 = scmp.ne.s32.totalorder %s182, %s184
      %p191 = scmp.eq.s32.totalorder %s22, 1
      %p192 = por %p190, %p191
      %p193 = scmp.ne.s32.totalorder %s184, %s185
      %p194 = scmp.eq.s32.totalorder %s22, 0
      %p195 = por %p193, %p194
      %p196 = scmp.ne.s32.totalorder %s184, %s185
      %p197 = scmp.eq.s32.totalorder %s23, 1
      %p198 = por %p196, %p197
      %p200 = scmp.ne.s32.totalorder %s185, %s199
      %p201 = scmp.eq.s32.totalorder %s23, 0
      %p202 = por %p200, %p201
      %s204 = sadd.s32 %s203, 1
      %p207 = scmp.eq.s32.totalorder %s17, 1
      %p208 = scmp.ne.s32.totalorder %s203, %s205
      %p209 = scmp.eq.s32.totalorder %s17, 0
      %p210 = por %p208, %p209
      %p211 = scmp.ne.s32.totalorder %s203, %s205
      %p212 = scmp.eq.s32.totalorder %s22, 1
      %p213 = por %p211, %p212
      %p214 = scmp.ne.s32.totalorder %s205, %s206
      %p215 = scmp.eq.s32.totalorder %s22, 0
      %p216 = por %p214, %p215
      %p217 = scmp.ne.s32.totalorder %s205, %s206
      %p218 = scmp.eq.s32.totalorder %s23, 1
      %p219 = por %p217, %p218
      %p221 = scmp.ne.s32.totalorder %s206, %s220
      %p222 = scmp.eq.s32.totalorder %s23, 0
      %p223 = por %p221, %p222
      %s224 = ssub.s32 %s17, %s24
      %p225 = scmp.eq.s32.totalorder %s224, 0
      %s227 = sadd.s32 %s226, 1
      %s228 = scalar_select %p225, %s226, %s227
      %p231 = pneg %p225
      %p232 = scmp.eq.s32.totalorder %s17, 1
      %p233 = por %p231, %p232
      %p234 = scmp.ne.s32.totalorder %s226, %s229
      %p235 = scmp.eq.s32.totalorder %s17, 0
      %p236 = por %p234, %p235
      %p237 = scmp.ne.s32.totalorder %s226, %s229
      %p238 = scmp.eq.s32.totalorder %s22, 1
      %p239 = por %p237, %p238
      %p240 = scmp.ne.s32.totalorder %s229, %s230
      %p241 = scmp.eq.s32.totalorder %s22, 0
      %p242 = por %p240, %p241
      %p243 = scmp.ne.s32.totalorder %s229, %s230
      %p244 = scmp.eq.s32.totalorder %s23, 1
      %p245 = por %p243, %p244
      %p247 = scmp.ne.s32.totalorder %s230, %s246
      %p248 = scmp.eq.s32.totalorder %s23, 0
      %p249 = por %p247, %p248
      %p250 = scmp.le.s32.totalorder 1, %s17
      %p251 = scmp.lt.s32.totalorder %s17, 3
      %p252 = pnand %p250, %p251
      %p253 = pneg %p252
      // Predicated region
      $region9: #{edm_precond_forward.1} parent=5 // pred_check
        _
      $region10: #{edm_precond_forward.1} parent=5 // pred_check_branch
        %255 = sbr.rel (%p252) target = $region12
      $region11: #{edm_precond_forward.1} parent=5 // pred_region
        %s256 = ssub.s32 %s17, 1
        // Predicated region
        $region13: #{edm_precond_forward.1} parent=11 // pred_check
          %p257 = pneg %p38
        $region14: #{edm_precond_forward.1} parent=11 // pred_check_branch
          %259 = sbr.rel (%p257) target = $region16
        $region15: #{edm_precond_forward.1} parent=11 // pred_region
          %261 = vsyncadd [#allocation4], 0
          %s263 = sshll.u32 %s0, 4
          %s264 = int_to_ptr.vmem [resolvable:$true] %s263
          %266 = dma.vmem_to_smem %s264, 16, [#allocation3], [#allocation4]
        $region16: #{edm_precond_forward.1} parent=11 // pred_fallthru
          _
        // Predicated region
        $region17: #{edm_precond_forward.1} parent=11 // pred_check
          %p267 = pneg %p59
        $region18: #{edm_precond_forward.1} parent=11 // pred_check_branch
          %269 = sbr.rel (%p267) target = $region20
        $region19: #{edm_precond_forward.1} parent=11 // pred_region
          %271 = vsyncadd [#allocation6], 0
          %s273 = sshll.u32 %s1, 4
          %s274 = int_to_ptr.vmem [resolvable:$true] %s273
          %276 = dma.vmem_to_smem %s274, 16, [#allocation5], [#allocation6]
        $region20: #{edm_precond_forward.1} parent=11 // pred_fallthru
          _
        // Predicated region
        $region21: #{edm_precond_forward.1} parent=11 // pred_check
          %p277 = pneg %p80
        $region22: #{edm_precond_forward.1} parent=11 // pred_check_branch
          %279 = sbr.rel (%p277) target = $region24
        $region23: #{edm_precond_forward.1} parent=11 // pred_region
          %281 = vsyncadd [#allocation6], 0
          %s283 = sshll.u32 %s2, 4
          %s284 = int_to_ptr.vmem [resolvable:$true] %s283
          %286 = dma.vmem_to_smem %s284, 16, [#allocation7], [#allocation6]
        $region24: #{edm_precond_forward.1} parent=11 // pred_fallthru
          _
        // Predicated region
        $region25: #{edm_precond_forward.1} parent=11 // pred_check
          %p287 = pneg %p153
        $region26: #{edm_precond_forward.1} parent=11 // pred_check_branch
          %289 = sbr.rel (%p287) target = $region28
        $region27: #{edm_precond_forward.1} parent=11 // pred_region
          _
        $region28: #{edm_precond_forward.1} parent=11 // pred_fallthru
          _
        // Predicated region
        $region29: #{edm_precond_forward.1} parent=11 // pred_check
          %p290 = pneg %p174
        $region30: #{edm_precond_forward.1} parent=11 // pred_check_branch
          %292 = sbr.rel (%p290) target = $region32
        $region31: #{edm_precond_forward.1} parent=11 // pred_region
          _
        $region32: #{edm_precond_forward.1} parent=11 // pred_fallthru
          _
        // Predicated region
        $region33: #{edm_precond_forward.1} parent=11 // pred_check
          %p293 = pneg %p195
        $region34: #{edm_precond_forward.1} parent=11 // pred_check_branch
          %295 = sbr.rel (%p293) target = $region36
        $region35: #{edm_precond_forward.1} parent=11 // pred_region
          _
        $region36: #{edm_precond_forward.1} parent=11 // pred_fallthru
          _
        // Predicated region
        $region37: #{edm_precond_forward.1} parent=11 // pred_check
          %p296 = pneg %p216
        $region38: #{edm_precond_forward.1} parent=11 // pred_check_branch
          %298 = sbr.rel (%p296) target = $region40
        $region39: #{edm_precond_forward.1} parent=11 // pred_region
          _
        $region40: #{edm_precond_forward.1} parent=11 // pred_fallthru
          _
      $region12: #{edm_precond_forward.1} parent=5 // pred_fallthru
        _
      %p299 = scmp.lt.s32.totalorder %s17, 2
      // Predicated region
      $region41: #{edm_precond_forward.1} parent=5 // pred_check
        %p300 = pneg %p299
      $region42: #{edm_precond_forward.1} parent=5 // pred_check_branch
        %302 = sbr.rel (%p300) target = $region44
      $region43: #{edm_precond_forward.1} parent=5 // pred_region
        // Predicated region
        $region45: #{edm_precond_forward.1} parent=43 // pred_check
          %p303 = pneg %p100
        $region46: #{edm_precond_forward.1} parent=43 // pred_check_branch
          %305 = sbr.rel (%p303) target = $region48
        $region47: #{edm_precond_forward.1} parent=43 // pred_region
          %p306 = scmp.lt.s32.totalorder %s17, 1
          %s307 = scalar_select %p306, %s17, 1
          %s308 = smul.addr %s307, 54
          %s309 = smul.addr %s308, 8
          %s310 = scalar_lea.vmem %s3, %s309
        $region48: #{edm_precond_forward.1} parent=43 // pred_fallthru
          _
        // Predicated region
        $region49: #{edm_precond_forward.1} parent=43 // pred_check
          %p311 = pneg %p126
        $region50: #{edm_precond_forward.1} parent=43 // pred_check_branch
          %313 = sbr.rel (%p311) target = $region52
        $region51: #{edm_precond_forward.1} parent=43 // pred_region
          %p314 = scmp.lt.s32.totalorder %s17, 1
          %s315 = scalar_select %p314, %s17, 1
          %s316 = smul.addr %s315, 2
          %s317 = smul.addr %s316, 4
          %s318 = scalar_lea.vmem %s4, %s317
        $region52: #{edm_precond_forward.1} parent=43 // pred_fallthru
          _
      $region44: #{edm_precond_forward.1} parent=5 // pred_fallthru
        _
      %p319 = scmp.le.s32.totalorder 1, %s17
      %p320 = scmp.lt.s32.totalorder %s17, 3
      %p321 = pnand %p319, %p320
      %p322 = pneg %p321
      // Predicated region
      $region53: #{edm_precond_forward.1} parent=5 // pred_check
        _
      $region54: #{edm_precond_forward.1} parent=5 // pred_check_branch
        %324 = sbr.rel (%p321) target = $region56
      $region55: #{edm_precond_forward.1} parent=5 // pred_region
        %s325 = ssub.s32 %s17, 1
        // Predicated region
        $region57: #{edm_precond_forward.1} parent=55 // pred_check
          %p326 = pneg %p38
        $region58: #{edm_precond_forward.1} parent=55 // pred_check_branch
          %328 = sbr.rel (%p326) target = $region60
        $region59: #{edm_precond_forward.1} parent=55 // pred_region
          %330 = dma.done [#allocation4], 16
        $region60: #{edm_precond_forward.1} parent=55 // pred_fallthru
          _
        // Predicated region
        $region61: #{edm_precond_forward.1} parent=55 // pred_check
          %p331 = pneg %p59
        $region62: #{edm_precond_forward.1} parent=55 // pred_check_branch
          %333 = sbr.rel (%p331) target = $region64
        $region63: #{edm_precond_forward.1} parent=55 // pred_region
          %335 = dma.done [#allocation6], 16
        $region64: #{edm_precond_forward.1} parent=55 // pred_fallthru
          _
        // Predicated region
        $region65: #{edm_precond_forward.1} parent=55 // pred_check
          %p336 = pneg %p80
        $region66: #{edm_precond_forward.1} parent=55 // pred_check_branch
          %338 = sbr.rel (%p336) target = $region68
        $region67: #{edm_precond_forward.1} parent=55 // pred_region
          %340 = dma.done [#allocation6], 16
        $region68: #{edm_precond_forward.1} parent=55 // pred_fallthru
          _
        %341 = sfence
        %p342 = pneg %p38
        %p343 = pneg %p35
        %p344 = pneg %p59
        %p345 = pneg %p56
        %p346 = pneg %p80
        %p347 = pneg %p77
        %p348 = scmp.lt.s32.totalorder %s22, 1
        %s349 = scalar_select %p348, %s22, 1
        %s350 = smul.addr %s349, 54
        %s351 = smul.addr %s350, 8
        %s352 = scalar_lea.vmem %s3, %s351
        %p353 = pneg %p106
        %p354 = pneg %p103
        %p355 = scmp.lt.s32.totalorder %s22, 1
        %s356 = scalar_select %p355, %s22, 1
        %s357 = smul.addr %s356, 2
        %s358 = smul.addr %s357, 4
        %s359 = scalar_lea.vmem %s4, %s358
        %p360 = pneg %p132
        %p361 = pneg %p129
        %p362 = pneg %p153
        %p363 = pneg %p150
        %p364 = pneg %p174
        %p365 = pneg %p171
        %p366 = pneg %p195
        %p367 = pneg %p192
        %p368 = pneg %p216
        %p369 = pneg %p213
        %p370 = pneg %p242
        %p371 = pneg %p239
        %p372 = scmp.lt.s32.totalorder %s22, 1
        %s373 = scalar_select %p372, %s22, 1
        %s374 = smul.addr %s373, 2
        %s375 = smul.addr %s374, 4
        %s376 = scalar_lea.vmem %s9, %s375
        %p377 = scmp.lt.s32.totalorder %s22, 1
        %s378 = scalar_select %p377, %s22, 1
        %s379 = smul.addr %s378, 54
        %s380 = smul.addr %s379, 8
        %s381 = scalar_lea.vmem %s3, %s380
        %p382 = scmp.lt.s32.totalorder %s22, 1
        %s383 = scalar_select %p382, %s22, 1
        %s384 = smul.addr %s383, 2
        %s385 = smul.addr %s384, 4
        %s386 = scalar_lea.vmem %s4, %s385
        %p387 = scmp.lt.s32.totalorder %s22, 1
        %s388 = scalar_select %p387, %s22, 1
        %s389 = smul.addr %s388, 2
        %s390 = smul.addr %s389, 4
        %s391 = scalar_lea.vmem %s9, %s390
        %v392 = vld [vmem:[%s381] sm:$0xff]
        %v393 = vld [vmem:[%s381 + $0x8] sm:$0xff]
        %v394 = vld [vmem:[%s381 + $0x18] sm:$0xff]
        %v395 = vld [vmem:[%s381 + $0x20] sm:$0xff]
        %v396 = vld [vmem:[%s381 + $0x30] sm:$0xff]
        %v397 = vld [vmem:[%s381 + $0x38] sm:$0xff]
        %v398 = vld [vmem:[%s381 + $0x48] sm:$0xff]
        %v399 = vld [vmem:[%s381 + $0x50] sm:$0xff]
        %v400 = vld [vmem:[%s381 + $0x60] sm:$0xff]
        %v401 = vld [vmem:[%s381 + $0x68] sm:$0xff]
        %v402 = vld [vmem:[%s381 + $0x78] sm:$0xff]
        %v403 = vld [vmem:[%s381 + $0x80] sm:$0xff]
        %v404 = vld [vmem:[%s381 + $0x90] sm:$0xff]
        %v405 = vld [vmem:[%s381 + $0x98] sm:$0xff]
        %v406 = vld [vmem:[%s381 + $0xa8] sm:$0xff]
        %v407 = vld [vmem:[%s381 + $0xb0] sm:$0xff]
        %v408 = vld [vmem:[%s381 + $0xc0] sm:$0xff]
        %v409 = vld [vmem:[%s381 + $0xc8] sm:$0xff]
        %v410 = vld [vmem:[%s381 + $0xd8] sm:$0xff]
        %v411 = vld [vmem:[%s381 + $0xe0] sm:$0xff]
        %v412 = vld [vmem:[%s381 + $0xf0] sm:$0xff]
        %v413 = vld [vmem:[%s381 + $0xf8] sm:$0xff]
        %v414 = vld [vmem:[%s381 + $0x108] sm:$0xff]
        %v415 = vld [vmem:[%s381 + $0x110] sm:$0xff]
        %v416 = vld [vmem:[%s381 + $0x120] sm:$0xff]
        %v417 = vld [vmem:[%s381 + $0x128] sm:$0xff]
        %v418 = vld [vmem:[%s381 + $0x138] sm:$0xff]
        %v419 = vld [vmem:[%s381 + $0x140] sm:$0xff]
        %v420 = vld [vmem:[%s381 + $0x150] sm:$0xff]
        %v421 = vld [vmem:[%s381 + $0x158] sm:$0xff]
        %v422 = vld [vmem:[%s381 + $0x168] sm:$0xff]
        %v423 = vld [vmem:[%s381 + $0x170] sm:$0xff]
        %v424 = vld [vmem:[%s6] sm:$0x7]
        %v425 = vld [vmem:[%s381 + $0x1] sm:$0xff]
        %v426 = vld [vmem:[%s381 + $0x9] sm:$0xff]
        %v427 = vld [vmem:[%s381 + $0x19] sm:$0xff]
        %v428 = vld [vmem:[%s381 + $0x21] sm:$0xff]
        %v429 = vld [vmem:[%s381 + $0x31] sm:$0xff]
        %v430 = vld [vmem:[%s381 + $0x39] sm:$0xff]
        %v431 = vld [vmem:[%s381 + $0x49] sm:$0xff]
        %v432 = vld [vmem:[%s381 + $0x51] sm:$0xff]
        %v433 = vld [vmem:[%s381 + $0x61] sm:$0xff]
        %v434 = vld [vmem:[%s381 + $0x69] sm:$0xff]
        %v435 = vld [vmem:[%s381 + $0x79] sm:$0xff]
        %v436 = vld [vmem:[%s381 + $0x81] sm:$0xff]
        %v437 = vld [vmem:[%s381 + $0x91] sm:$0xff]
        %v438 = vld [vmem:[%s381 + $0x99] sm:$0xff]
        %v439 = vld [vmem:[%s381 + $0xa9] sm:$0xff]
        %v440 = vld [vmem:[%s381 + $0xb1] sm:$0xff]
        %v441 = vld [vmem:[%s381 + $0xc1] sm:$0xff]
        %v442 = vld [vmem:[%s381 + $0xc9] sm:$0xff]
        %v443 = vld [vmem:[%s381 + $0xd9] sm:$0xff]
        %v444 = vld [vmem:[%s381 + $0xe1] sm:$0xff]
        %v445 = vld [vmem:[%s381 + $0xf1] sm:$0xff]
        %v446 = vld [vmem:[%s381 + $0xf9] sm:$0xff]
        %v447 = vld [vmem:[%s381 + $0x109] sm:$0xff]
        %v448 = vld [vmem:[%s381 + $0x111] sm:$0xff]
        %v449 = vld [vmem:[%s381 + $0x121] sm:$0xff]
        %v450 = vld [vmem:[%s381 + $0x129] sm:$0xff]
        %v451 = vld [vmem:[%s381 + $0x139] sm:$0xff]
        %v452 = vld [vmem:[%s381 + $0x141] sm:$0xff]
        %v453 = vld [vmem:[%s381 + $0x151] sm:$0xff]
        %v454 = vld [vmem:[%s381 + $0x159] sm:$0xff]
        %v455 = vld [vmem:[%s381 + $0x169] sm:$0xff]
        %v456 = vld [vmem:[%s381 + $0x171] sm:$0xff]
        %v457 = vld [vmem:[%s6 + $0x3] sm:$0x7]
        %vm458 = vcmask 23552
        %v460 = vsel %vm458, %v425, 0
        %v463 = vsel %vm458, %v426, 0
        %v466 = vsel %vm458, %v427, 0
        %v469 = vsel %vm458, %v428, 0
        %v472 = vsel %vm458, %v429, 0
        %v475 = vsel %vm458, %v430, 0
        %v478 = vsel %vm458, %v431, 0
        %v481 = vsel %vm458, %v432, 0
        %v484 = vsel %vm458, %v433, 0
        %v487 = vsel %vm458, %v434, 0
        %v490 = vsel %vm458, %v435, 0
        %v493 = vsel %vm458, %v436, 0
        %v496 = vsel %vm458, %v437, 0
        %v499 = vsel %vm458, %v438, 0
        %v502 = vsel %vm458, %v439, 0
        %v505 = vsel %vm458, %v440, 0
        %v508 = vsel %vm458, %v441, 0
        %v511 = vsel %vm458, %v442, 0
        %v514 = vsel %vm458, %v443, 0
        %v517 = vsel %vm458, %v444, 0
        %v520 = vsel %vm458, %v445, 0
        %v523 = vsel %vm458, %v446, 0
        %v526 = vsel %vm458, %v447, 0
        %v529 = vsel %vm458, %v448, 0
        %v532 = vsel %vm458, %v449, 0
        %v535 = vsel %vm458, %v450, 0
        %v538 = vsel %vm458, %v451, 0
        %v541 = vsel %vm458, %v452, 0
        %v544 = vsel %vm458, %v453, 0
        %v547 = vsel %vm458, %v454, 0
        %v550 = vsel %vm458, %v455, 0
        %v553 = vsel %vm458, %v456, 0
        %vm555 = vcmask 1042432
        %v557 = vsel %vm555, %v457, 0
        %559 = vmatpush.msra.mxu0 0.0
        %560 = vmatpush.msra.mxu0 0.0
        %561 = vmatpush.msra.mxu0 0.0
        %562 = vmatpush.msra.mxu0 0.0
        %563 = vmatpush.msra.mxu0 0.0
        %564 = vmatpush.msra.mxu0 0.0
        %565 = vmatpush.msra.mxu0 0.0
        %566 = vmatpush.msra.mxu0 0.0
        %567 = vmatpush.msra.mxu0 0.0
        %568 = vmatpush.msra.mxu0 0.0
        %569 = vmatpush.msra.mxu0 0.0
        %570 = vmatpush.msra.mxu0 0.0
        %571 = vmatpush.msra.mxu0 0.0
        %572 = vmatpush.msra.mxu0 0.0
        %573 = vmatpush.msra.mxu0 0.0
        %574 = vmatpush.msra.mxu0 %v557
        %575 = vmatmul.f32.gmra.mxu0 %v460
        %v576 = vpop.f32.mrf.mxu0
        %v577 = vadd.f32 0.0, %v576
        %578 = vmatmul.f32.gmra.mxu0 %v463
        %v579 = vpop.f32.mrf.mxu0
        %v580 = vadd.f32 0.0, %v579
        %581 = vmatmul.f32.gmra.mxu0 %v466
        %v582 = vpop.f32.mrf.mxu0
        %v583 = vadd.f32 0.0, %v582
        %584 = vmatmul.f32.gmra.mxu0 %v469
        %v585 = vpop.f32.mrf.mxu0
        %v586 = vadd.f32 0.0, %v585
        %587 = vmatmul.f32.gmra.mxu0 %v472
        %v588 = vpop.f32.mrf.mxu0
        %v589 = vadd.f32 0.0, %v588
        %590 = vmatmul.f32.gmra.mxu0 %v475
        %v591 = vpop.f32.mrf.mxu0
        %v592 = vadd.f32 0.0, %v591
        %593 = vmatmul.f32.gmra.mxu0 %v478
        %v594 = vpop.f32.mrf.mxu0
        %v595 = vadd.f32 0.0, %v594
        %596 = vmatmul.f32.gmra.mxu0 %v481
        %v597 = vpop.f32.mrf.mxu0
        %v598 = vadd.f32 0.0, %v597
        %599 = vmatmul.f32.gmra.mxu0 %v484
        %v600 = vpop.f32.mrf.mxu0
        %v601 = vadd.f32 0.0, %v600
        %602 = vmatmul.f32.gmra.mxu0 %v487
        %v603 = vpop.f32.mrf.mxu0
        %v604 = vadd.f32 0.0, %v603
        %605 = vmatmul.f32.gmra.mxu0 %v490
        %v606 = vpop.f32.mrf.mxu0
        %v607 = vadd.f32 0.0, %v606
        %608 = vmatmul.f32.gmra.mxu0 %v493
        %v609 = vpop.f32.mrf.mxu0
        %v610 = vadd.f32 0.0, %v609
        %611 = vmatmul.f32.gmra.mxu0 %v496
        %v612 = vpop.f32.mrf.mxu0
        %v613 = vadd.f32 0.0, %v612
        %614 = vmatmul.f32.gmra.mxu0 %v499
        %v615 = vpop.f32.mrf.mxu0
        %v616 = vadd.f32 0.0, %v615
        %617 = vmatmul.f32.gmra.mxu0 %v502
        %v618 = vpop.f32.mrf.mxu0
        %v619 = vadd.f32 0.0, %v618
        %620 = vmatmul.f32.gmra.mxu0 %v505
        %v621 = vpop.f32.mrf.mxu0
        %v622 = vadd.f32 0.0, %v621
        %623 = vmatmul.f32.gmra.mxu0 %v508
        %v624 = vpop.f32.mrf.mxu0
        %v625 = vadd.f32 0.0, %v624
        %626 = vmatmul.f32.gmra.mxu0 %v511
        %v627 = vpop.f32.mrf.mxu0
        %v628 = vadd.f32 0.0, %v627
        %629 = vmatmul.f32.gmra.mxu0 %v514
        %v630 = vpop.f32.mrf.mxu0
        %v631 = vadd.f32 0.0, %v630
        %632 = vmatmul.f32.gmra.mxu0 %v517
        %v633 = vpop.f32.mrf.mxu0
        %v634 = vadd.f32 0.0, %v633
        %635 = vmatmul.f32.gmra.mxu0 %v520
        %v636 = vpop.f32.mrf.mxu0
        %v637 = vadd.f32 0.0, %v636
        %638 = vmatmul.f32.gmra.mxu0 %v523
        %v639 = vpop.f32.mrf.mxu0
        %v640 = vadd.f32 0.0, %v639
        %641 = vmatmul.f32.gmra.mxu0 %v526
        %v642 = vpop.f32.mrf.mxu0
        %v643 = vadd.f32 0.0, %v642
        %644 = vmatmul.f32.gmra.mxu0 %v529
        %v645 = vpop.f32.mrf.mxu0
        %v646 = vadd.f32 0.0, %v645
        %647 = vmatmul.f32.gmra.mxu0 %v532
        %v648 = vpop.f32.mrf.mxu0
        %v649 = vadd.f32 0.0, %v648
        %650 = vmatmul.f32.gmra.mxu0 %v535
        %v651 = vpop.f32.mrf.mxu0
        %v652 = vadd.f32 0.0, %v651
        %653 = vmatmul.f32.gmra.mxu0 %v538
        %v654 = vpop.f32.mrf.mxu0
        %v655 = vadd.f32 0.0, %v654
        %656 = vmatmul.f32.gmra.mxu0 %v541
        %v657 = vpop.f32.mrf.mxu0
        %v658 = vadd.f32 0.0, %v657
        %659 = vmatmul.f32.gmra.mxu0 %v544
        %v660 = vpop.f32.mrf.mxu0
        %v661 = vadd.f32 0.0, %v660
        %662 = vmatmul.f32.gmra.mxu0 %v547
        %v663 = vpop.f32.mrf.mxu0
        %v664 = vadd.f32 0.0, %v663
        %665 = vmatmul.f32.gmra.mxu0 %v550
        %v666 = vpop.f32.mrf.mxu0
        %v667 = vadd.f32 0.0, %v666
        %668 = vmatmul.f32.gmra.mxu0 %v553
        %v669 = vpop.f32.mrf.mxu0
        %v670 = vadd.f32 0.0, %v669
        %671 = vdwg.mxu0
        %v673 = vsel %vm458, %v392, 0
        %v676 = vsel %vm458, %v393, 0
        %v679 = vsel %vm458, %v394, 0
        %v682 = vsel %vm458, %v395, 0
        %v685 = vsel %vm458, %v396, 0
        %v688 = vsel %vm458, %v397, 0
        %v691 = vsel %vm458, %v398, 0
        %v694 = vsel %vm458, %v399, 0
        %v697 = vsel %vm458, %v400, 0
        %v700 = vsel %vm458, %v401, 0
        %v703 = vsel %vm458, %v402, 0
        %v706 = vsel %vm458, %v403, 0
        %v709 = vsel %vm458, %v404, 0
        %v712 = vsel %vm458, %v405, 0
        %v715 = vsel %vm458, %v406, 0
        %v718 = vsel %vm458, %v407, 0
        %v721 = vsel %vm458, %v408, 0
        %v724 = vsel %vm458, %v409, 0
        %v727 = vsel %vm458, %v410, 0
        %v730 = vsel %vm458, %v411, 0
        %v733 = vsel %vm458, %v412, 0
        %v736 = vsel %vm458, %v413, 0
        %v739 = vsel %vm458, %v414, 0
        %v742 = vsel %vm458, %v415, 0
        %v745 = vsel %vm458, %v416, 0
        %v748 = vsel %vm458, %v417, 0
        %v751 = vsel %vm458, %v418, 0
        %v754 = vsel %vm458, %v419, 0
        %v757 = vsel %vm458, %v420, 0
        %v760 = vsel %vm458, %v421, 0
        %v763 = vsel %vm458, %v422, 0
        %v766 = vsel %vm458, %v423, 0
        %v769 = vsel %vm555, %v424, 0
        %771 = vmatpush.msra.mxu0 0.0
        %772 = vmatpush.msra.mxu0 0.0
        %773 = vmatpush.msra.mxu0 0.0
        %774 = vmatpush.msra.mxu0 0.0
        %775 = vmatpush.msra.mxu0 0.0
        %776 = vmatpush.msra.mxu0 0.0
        %777 = vmatpush.msra.mxu0 0.0
        %778 = vmatpush.msra.mxu0 0.0
        %779 = vmatpush.msra.mxu0 0.0
        %780 = vmatpush.msra.mxu0 0.0
        %781 = vmatpush.msra.mxu0 0.0
        %782 = vmatpush.msra.mxu0 0.0
        %783 = vmatpush.msra.mxu0 0.0
        %784 = vmatpush.msra.mxu0 0.0
        %785 = vmatpush.msra.mxu0 0.0
        %786 = vmatpush.msra.mxu0 %v769
        %787 = vmatmul.f32.gmra.mxu0 %v673
        %v788 = vpop.f32.mrf.mxu0
        %v789 = vadd.f32 %v577, %v788
        %790 = vmatmul.f32.gmra.mxu0 %v676
        %v791 = vpop.f32.mrf.mxu0
        %v792 = vadd.f32 %v580, %v791
        %793 = vmatmul.f32.gmra.mxu0 %v679
        %v794 = vpop.f32.mrf.mxu0
        %v795 = vadd.f32 %v583, %v794
        %796 = vmatmul.f32.gmra.mxu0 %v682
        %v797 = vpop.f32.mrf.mxu0
        %v798 = vadd.f32 %v586, %v797
        %799 = vmatmul.f32.gmra.mxu0 %v685
        %v800 = vpop.f32.mrf.mxu0
        %v801 = vadd.f32 %v589, %v800
        %802 = vmatmul.f32.gmra.mxu0 %v688
        %v803 = vpop.f32.mrf.mxu0
        %v804 = vadd.f32 %v592, %v803
        %805 = vmatmul.f32.gmra.mxu0 %v691
        %v806 = vpop.f32.mrf.mxu0
        %v807 = vadd.f32 %v595, %v806
        %808 = vmatmul.f32.gmra.mxu0 %v694
        %v809 = vpop.f32.mrf.mxu0
        %v810 = vadd.f32 %v598, %v809
        %811 = vmatmul.f32.gmra.mxu0 %v697
        %v812 = vpop.f32.mrf.mxu0
        %v813 = vadd.f32 %v601, %v812
        %814 = vmatmul.f32.gmra.mxu0 %v700
        %v815 = vpop.f32.mrf.mxu0
        %v816 = vadd.f32 %v604, %v815
        %817 = vmatmul.f32.gmra.mxu0 %v703
        %v818 = vpop.f32.mrf.mxu0
        %v819 = vadd.f32 %v607, %v818
        %820 = vmatmul.f32.gmra.mxu0 %v706
        %v821 = vpop.f32.mrf.mxu0
        %v822 = vadd.f32 %v610, %v821
        %823 = vmatmul.f32.gmra.mxu0 %v709
        %v824 = vpop.f32.mrf.mxu0
        %v825 = vadd.f32 %v613, %v824
        %826 = vmatmul.f32.gmra.mxu0 %v712
        %v827 = vpop.f32.mrf.mxu0
        %v828 = vadd.f32 %v616, %v827
        %829 = vmatmul.f32.gmra.mxu0 %v715
        %v830 = vpop.f32.mrf.mxu0
        %v831 = vadd.f32 %v619, %v830
        %832 = vmatmul.f32.gmra.mxu0 %v718
        %v833 = vpop.f32.mrf.mxu0
        %v834 = vadd.f32 %v622, %v833
        %835 = vmatmul.f32.gmra.mxu0 %v721
        %v836 = vpop.f32.mrf.mxu0
        %v837 = vadd.f32 %v625, %v836
        %838 = vmatmul.f32.gmra.mxu0 %v724
        %v839 = vpop.f32.mrf.mxu0
        %v840 = vadd.f32 %v628, %v839
        %841 = vmatmul.f32.gmra.mxu0 %v727
        %v842 = vpop.f32.mrf.mxu0
        %v843 = vadd.f32 %v631, %v842
        %844 = vmatmul.f32.gmra.mxu0 %v730
        %v845 = vpop.f32.mrf.mxu0
        %v846 = vadd.f32 %v634, %v845
        %847 = vmatmul.f32.gmra.mxu0 %v733
        %v848 = vpop.f32.mrf.mxu0
        %v849 = vadd.f32 %v637, %v848
        %850 = vmatmul.f32.gmra.mxu0 %v736
        %v851 = vpop.f32.mrf.mxu0
        %v852 = vadd.f32 %v640, %v851
        %853 = vmatmul.f32.gmra.mxu0 %v739
        %v854 = vpop.f32.mrf.mxu0
        %v855 = vadd.f32 %v643, %v854
        %856 = vmatmul.f32.gmra.mxu0 %v742
        %v857 = vpop.f32.mrf.mxu0
        %v858 = vadd.f32 %v646, %v857
        %859 = vmatmul.f32.gmra.mxu0 %v745
        %v860 = vpop.f32.mrf.mxu0
        %v861 = vadd.f32 %v649, %v860
        %862 = vmatmul.f32.gmra.mxu0 %v748
        %v863 = vpop.f32.mrf.mxu0
        %v864 = vadd.f32 %v652, %v863
        %865 = vmatmul.f32.gmra.mxu0 %v751
        %v866 = vpop.f32.mrf.mxu0
        %v867 = vadd.f32 %v655, %v866
        %868 = vmatmul.f32.gmra.mxu0 %v754
        %v869 = vpop.f32.mrf.mxu0
        %v870 = vadd.f32 %v658, %v869
        %871 = vmatmul.f32.gmra.mxu0 %v757
        %v872 = vpop.f32.mrf.mxu0
        %v873 = vadd.f32 %v661, %v872
        %874 = vmatmul.f32.gmra.mxu0 %v760
        %v875 = vpop.f32.mrf.mxu0
        %v876 = vadd.f32 %v664, %v875
        %877 = vmatmul.f32.gmra.mxu0 %v763
        %v878 = vpop.f32.mrf.mxu0
        %v879 = vadd.f32 %v667, %v878
        %880 = vmatmul.f32.gmra.mxu0 %v766
        %v881 = vpop.f32.mrf.mxu0
        %v882 = vadd.f32 %v670, %v881
        %883 = vdwg.mxu0
        %v884 = vld [vmem:[%s381 + $0x2] sm:$0xff]
        %v885 = vld [vmem:[%s381 + $0xa] sm:$0xff]
        %v886 = vld [vmem:[%s381 + $0x1a] sm:$0xff]
        %v887 = vld [vmem:[%s381 + $0x22] sm:$0xff]
        %v888 = vld [vmem:[%s381 + $0x32] sm:$0xff]
        %v889 = vld [vmem:[%s381 + $0x3a] sm:$0xff]
        %v890 = vld [vmem:[%s381 + $0x4a] sm:$0xff]
        %v891 = vld [vmem:[%s381 + $0x52] sm:$0xff]
        %v892 = vld [vmem:[%s381 + $0x62] sm:$0xff]
        %v893 = vld [vmem:[%s381 + $0x6a] sm:$0xff]
        %v894 = vld [vmem:[%s381 + $0x7a] sm:$0xff]
        %v895 = vld [vmem:[%s381 + $0x82] sm:$0xff]
        %v896 = vld [vmem:[%s381 + $0x92] sm:$0xff]
        %v897 = vld [vmem:[%s381 + $0x9a] sm:$0xff]
        %v898 = vld [vmem:[%s381 + $0xaa] sm:$0xff]
        %v899 = vld [vmem:[%s381 + $0xb2] sm:$0xff]
        %v900 = vld [vmem:[%s381 + $0xc2] sm:$0xff]
        %v901 = vld [vmem:[%s381 + $0xca] sm:$0xff]
        %v902 = vld [vmem:[%s381 + $0xda] sm:$0xff]
        %v903 = vld [vmem:[%s381 + $0xe2] sm:$0xff]
        %v904 = vld [vmem:[%s381 + $0xf2] sm:$0xff]
        %v905 = vld [vmem:[%s381 + $0xfa] sm:$0xff]
        %v906 = vld [vmem:[%s381 + $0x10a] sm:$0xff]
        %v907 = vld [vmem:[%s381 + $0x112] sm:$0xff]
        %v908 = vld [vmem:[%s381 + $0x122] sm:$0xff]
        %v909 = vld [vmem:[%s381 + $0x12a] sm:$0xff]
        %v910 = vld [vmem:[%s381 + $0x13a] sm:$0xff]
        %v911 = vld [vmem:[%s381 + $0x142] sm:$0xff]
        %v912 = vld [vmem:[%s381 + $0x152] sm:$0xff]
        %v913 = vld [vmem:[%s381 + $0x15a] sm:$0xff]
        %v914 = vld [vmem:[%s381 + $0x16a] sm:$0xff]
        %v915 = vld [vmem:[%s381 + $0x172] sm:$0xff]
        %v916 = vld [vmem:[%s6 + $0x6] sm:$0x7]
        %v918 = vsel %vm458, %v884, 0
        %v921 = vsel %vm458, %v885, 0
        %v924 = vsel %vm458, %v886, 0
        %v927 = vsel %vm458, %v887, 0
        %v930 = vsel %vm458, %v888, 0
        %v933 = vsel %vm458, %v889, 0
        %v936 = vsel %vm458, %v890, 0
        %v939 = vsel %vm458, %v891, 0
        %v942 = vsel %vm458, %v892, 0
        %v945 = vsel %vm458, %v893, 0
        %v948 = vsel %vm458, %v894, 0
        %v951 = vsel %vm458, %v895, 0
        %v954 = vsel %vm458, %v896, 0
        %v957 = vsel %vm458, %v897, 0
        %v960 = vsel %vm458, %v898, 0
        %v963 = vsel %vm458, %v899, 0
        %v966 = vsel %vm458, %v900, 0
        %v969 = vsel %vm458, %v901, 0
        %v972 = vsel %vm458, %v902, 0
        %v975 = vsel %vm458, %v903, 0
        %v978 = vsel %vm458, %v904, 0
        %v981 = vsel %vm458, %v905, 0
        %v984 = vsel %vm458, %v906, 0
        %v987 = vsel %vm458, %v907, 0
        %v990 = vsel %vm458, %v908, 0
        %v993 = vsel %vm458, %v909, 0
        %v996 = vsel %vm458, %v910, 0
        %v999 = vsel %vm458, %v911, 0
        %v1002 = vsel %vm458, %v912, 0
        %v1005 = vsel %vm458, %v913, 0
        %v1008 = vsel %vm458, %v914, 0
        %v1011 = vsel %vm458, %v915, 0
        %v1014 = vsel %vm555, %v916, 0
        %1016 = vmatpush.msra.mxu0 0.0
        %1017 = vmatpush.msra.mxu0 0.0
        %1018 = vmatpush.msra.mxu0 0.0
        %1019 = vmatpush.msra.mxu0 0.0
        %1020 = vmatpush.msra.mxu0 0.0
        %1021 = vmatpush.msra.mxu0 0.0
        %1022 = vmatpush.msra.mxu0 0.0
        %1023 = vmatpush.msra.mxu0 0.0
        %1024 = vmatpush.msra.mxu0 0.0
        %1025 = vmatpush.msra.mxu0 0.0
        %1026 = vmatpush.msra.mxu0 0.0
        %1027 = vmatpush.msra.mxu0 0.0
        %1028 = vmatpush.msra.mxu0 0.0
        %1029 = vmatpush.msra.mxu0 0.0
        %1030 = vmatpush.msra.mxu0 0.0
        %1031 = vmatpush.msra.mxu0 %v1014
        %1032 = vmatmul.f32.gmra.mxu0 %v918
        %v1033 = vpop.f32.mrf.mxu0
        %v1034 = vadd.f32 0.0, %v1033
        %1035 = vmatmul.f32.gmra.mxu0 %v921
        %v1036 = vpop.f32.mrf.mxu0
        %v1037 = vadd.f32 0.0, %v1036
        %1038 = vmatmul.f32.gmra.mxu0 %v924
        %v1039 = vpop.f32.mrf.mxu0
        %v1040 = vadd.f32 0.0, %v1039
        %1041 = vmatmul.f32.gmra.mxu0 %v927
        %v1042 = vpop.f32.mrf.mxu0
        %v1043 = vadd.f32 0.0, %v1042
        %1044 = vmatmul.f32.gmra.mxu0 %v930
        %v1045 = vpop.f32.mrf.mxu0
        %v1046 = vadd.f32 0.0, %v1045
        %1047 = vmatmul.f32.gmra.mxu0 %v933
        %v1048 = vpop.f32.mrf.mxu0
        %v1049 = vadd.f32 0.0, %v1048
        %1050 = vmatmul.f32.gmra.mxu0 %v936
        %v1051 = vpop.f32.mrf.mxu0
        %v1052 = vadd.f32 0.0, %v1051
        %1053 = vmatmul.f32.gmra.mxu0 %v939
        %v1054 = vpop.f32.mrf.mxu0
        %v1055 = vadd.f32 0.0, %v1054
        %1056 = vmatmul.f32.gmra.mxu0 %v942
        %v1057 = vpop.f32.mrf.mxu0
        %v1058 = vadd.f32 0.0, %v1057
        %1059 = vmatmul.f32.gmra.mxu0 %v945
        %v1060 = vpop.f32.mrf.mxu0
        %v1061 = vadd.f32 0.0, %v1060
        %1062 = vmatmul.f32.gmra.mxu0 %v948
        %v1063 = vpop.f32.mrf.mxu0
        %v1064 = vadd.f32 0.0, %v1063
        %1065 = vmatmul.f32.gmra.mxu0 %v951
        %v1066 = vpop.f32.mrf.mxu0
        %v1067 = vadd.f32 0.0, %v1066
        %1068 = vmatmul.f32.gmra.mxu0 %v954
        %v1069 = vpop.f32.mrf.mxu0
        %v1070 = vadd.f32 0.0, %v1069
        %1071 = vmatmul.f32.gmra.mxu0 %v957
        %v1072 = vpop.f32.mrf.mxu0
        %v1073 = vadd.f32 0.0, %v1072
        %1074 = vmatmul.f32.gmra.mxu0 %v960
        %v1075 = vpop.f32.mrf.mxu0
        %v1076 = vadd.f32 0.0, %v1075
        %1077 = vmatmul.f32.gmra.mxu0 %v963
        %v1078 = vpop.f32.mrf.mxu0
        %v1079 = vadd.f32 0.0, %v1078
        %1080 = vmatmul.f32.gmra.mxu0 %v966
        %v1081 = vpop.f32.mrf.mxu0
        %v1082 = vadd.f32 0.0, %v1081
        %1083 = vmatmul.f32.gmra.mxu0 %v969
        %v1084 = vpop.f32.mrf.mxu0
        %v1085 = vadd.f32 0.0, %v1084
        %1086 = vmatmul.f32.gmra.mxu0 %v972
        %v1087 = vpop.f32.mrf.mxu0
        %v1088 = vadd.f32 0.0, %v1087
        %1089 = vmatmul.f32.gmra.mxu0 %v975
        %v1090 = vpop.f32.mrf.mxu0
        %v1091 = vadd.f32 0.0, %v1090
        %1092 = vmatmul.f32.gmra.mxu0 %v978
        %v1093 = vpop.f32.mrf.mxu0
        %v1094 = vadd.f32 0.0, %v1093
        %1095 = vmatmul.f32.gmra.mxu0 %v981
        %v1096 = vpop.f32.mrf.mxu0
        %v1097 = vadd.f32 0.0, %v1096
        %1098 = vmatmul.f32.gmra.mxu0 %v984
        %v1099 = vpop.f32.mrf.mxu0
        %v1100 = vadd.f32 0.0, %v1099
        %1101 = vmatmul.f32.gmra.mxu0 %v987
        %v1102 = vpop.f32.mrf.mxu0
        %v1103 = vadd.f32 0.0, %v1102
        %1104 = vmatmul.f32.gmra.mxu0 %v990
        %v1105 = vpop.f32.mrf.mxu0
        %v1106 = vadd.f32 0.0, %v1105
        %1107 = vmatmul.f32.gmra.mxu0 %v993
        %v1108 = vpop.f32.mrf.mxu0
        %v1109 = vadd.f32 0.0, %v1108
        %1110 = vmatmul.f32.gmra.mxu0 %v996
        %v1111 = vpop.f32.mrf.mxu0
        %v1112 = vadd.f32 0.0, %v1111
        %1113 = vmatmul.f32.gmra.mxu0 %v999
        %v1114 = vpop.f32.mrf.mxu0
        %v1115 = vadd.f32 0.0, %v1114
        %1116 = vmatmul.f32.gmra.mxu0 %v1002
        %v1117 = vpop.f32.mrf.mxu0
        %v1118 = vadd.f32 0.0, %v1117
        %1119 = vmatmul.f32.gmra.mxu0 %v1005
        %v1120 = vpop.f32.mrf.mxu0
        %v1121 = vadd.f32 0.0, %v1120
        %1122 = vmatmul.f32.gmra.mxu0 %v1008
        %v1123 = vpop.f32.mrf.mxu0
        %v1124 = vadd.f32 0.0, %v1123
        %1125 = vmatmul.f32.gmra.mxu0 %v1011
        %v1126 = vpop.f32.mrf.mxu0
        %v1127 = vadd.f32 0.0, %v1126
        %1128 = vdwg.mxu0
        %v1129 = vadd.f32 %v789, %v1034
        %v1130 = vadd.f32 %v792, %v1037
        %v1131 = vadd.f32 %v795, %v1040
        %v1132 = vadd.f32 %v798, %v1043
        %v1133 = vadd.f32 %v801, %v1046
        %v1134 = vadd.f32 %v804, %v1049
        %v1135 = vadd.f32 %v807, %v1052
        %v1136 = vadd.f32 %v810, %v1055
        %v1137 = vadd.f32 %v813, %v1058
        %v1138 = vadd.f32 %v816, %v1061
        %v1139 = vadd.f32 %v819, %v1064
        %v1140 = vadd.f32 %v822, %v1067
        %v1141 = vadd.f32 %v825, %v1070
        %v1142 = vadd.f32 %v828, %v1073
        %v1143 = vadd.f32 %v831, %v1076
        %v1144 = vadd.f32 %v834, %v1079
        %v1145 = vadd.f32 %v837, %v1082
        %v1146 = vadd.f32 %v840, %v1085
        %v1147 = vadd.f32 %v843, %v1088
        %v1148 = vadd.f32 %v846, %v1091
        %v1149 = vadd.f32 %v849, %v1094
        %v1150 = vadd.f32 %v852, %v1097
        %v1151 = vadd.f32 %v855, %v1100
        %v1152 = vadd.f32 %v858, %v1103
        %v1153 = vadd.f32 %v861, %v1106
        %v1154 = vadd.f32 %v864, %v1109
        %v1155 = vadd.f32 %v867, %v1112
        %v1156 = vadd.f32 %v870, %v1115
        %v1157 = vadd.f32 %v873, %v1118
        %v1158 = vadd.f32 %v876, %v1121
        %v1159 = vadd.f32 %v879, %v1124
        %v1160 = vadd.f32 %v882, %v1127
        %s1161 = scalar_lea.vmem %s381, 24
        %v1162 = vld [vmem:[%s1161] sm:$0xff]
        %v1163 = vld [vmem:[%s1161 + $0x8] sm:$0xff]
        %v1164 = vld [vmem:[%s1161 + $0x18] sm:$0xff]
        %v1165 = vld [vmem:[%s1161 + $0x20] sm:$0xff]
        %v1166 = vld [vmem:[%s1161 + $0x30] sm:$0xff]
        %v1167 = vld [vmem:[%s1161 + $0x38] sm:$0xff]
        %v1168 = vld [vmem:[%s1161 + $0x48] sm:$0xff]
        %v1169 = vld [vmem:[%s1161 + $0x50] sm:$0xff]
        %v1170 = vld [vmem:[%s1161 + $0x60] sm:$0xff]
        %v1171 = vld [vmem:[%s1161 + $0x68] sm:$0xff]
        %v1172 = vld [vmem:[%s1161 + $0x78] sm:$0xff]
        %v1173 = vld [vmem:[%s1161 + $0x80] sm:$0xff]
        %v1174 = vld [vmem:[%s1161 + $0x90] sm:$0xff]
        %v1175 = vld [vmem:[%s1161 + $0x98] sm:$0xff]
        %v1176 = vld [vmem:[%s1161 + $0xa8] sm:$0xff]
        %v1177 = vld [vmem:[%s1161 + $0xb0] sm:$0xff]
        %v1178 = vld [vmem:[%s1161 + $0xc0] sm:$0xff]
        %v1179 = vld [vmem:[%s1161 + $0xc8] sm:$0xff]
        %v1180 = vld [vmem:[%s1161 + $0xd8] sm:$0xff]
        %v1181 = vld [vmem:[%s1161 + $0xe0] sm:$0xff]
        %v1182 = vld [vmem:[%s1161 + $0xf0] sm:$0xff]
        %v1183 = vld [vmem:[%s1161 + $0xf8] sm:$0xff]
        %v1184 = vld [vmem:[%s1161 + $0x108] sm:$0xff]
        %v1185 = vld [vmem:[%s1161 + $0x110] sm:$0xff]
        %v1186 = vld [vmem:[%s1161 + $0x120] sm:$0xff]
        %v1187 = vld [vmem:[%s1161 + $0x128] sm:$0xff]
        %v1188 = vld [vmem:[%s1161 + $0x138] sm:$0xff]
        %v1189 = vld [vmem:[%s1161 + $0x140] sm:$0xff]
        %v1190 = vld [vmem:[%s1161 + $0x150] sm:$0xff]
        %v1191 = vld [vmem:[%s1161 + $0x158] sm:$0xff]
        %v1192 = vld [vmem:[%s1161 + $0x168] sm:$0xff]
        %v1193 = vld [vmem:[%s1161 + $0x170] sm:$0xff]
        %v1194 = vld [vmem:[%s6 + $0x9] sm:$0x7]
        %v1196 = vsel %vm458, %v1162, 0
        %v1199 = vsel %vm458, %v1163, 0
        %v1202 = vsel %vm458, %v1164, 0
        %v1205 = vsel %vm458, %v1165, 0
        %v1208 = vsel %vm458, %v1166, 0
        %v1211 = vsel %vm458, %v1167, 0
        %v1214 = vsel %vm458, %v1168, 0
        %v1217 = vsel %vm458, %v1169, 0
        %v1220 = vsel %vm458, %v1170, 0
        %v1223 = vsel %vm458, %v1171, 0
        %v1226 = vsel %vm458, %v1172, 0
        %v1229 = vsel %vm458, %v1173, 0
        %v1232 = vsel %vm458, %v1174, 0
        %v1235 = vsel %vm458, %v1175, 0
        %v1238 = vsel %vm458, %v1176, 0
        %v1241 = vsel %vm458, %v1177, 0
        %v1244 = vsel %vm458, %v1178, 0
        %v1247 = vsel %vm458, %v1179, 0
        %v1250 = vsel %vm458, %v1180, 0
        %v1253 = vsel %vm458, %v1181, 0
        %v1256 = vsel %vm458, %v1182, 0
        %v1259 = vsel %vm458, %v1183, 0
        %v1262 = vsel %vm458, %v1184, 0
        %v1265 = vsel %vm458, %v1185, 0
        %v1268 = vsel %vm458, %v1186, 0
        %v1271 = vsel %vm458, %v1187, 0
        %v1274 = vsel %vm458, %v1188, 0
        %v1277 = vsel %vm458, %v1189, 0
        %v1280 = vsel %vm458, %v1190, 0
        %v1283 = vsel %vm458, %v1191, 0
        %v1286 = vsel %vm458, %v1192, 0
        %v1289 = vsel %vm458, %v1193, 0
        %v1292 = vsel %vm555, %v1194, 0
        %1294 = vmatpush.msra.mxu0 0.0
        %1295 = vmatpush.msra.mxu0 0.0
        %1296 = vmatpush.msra.mxu0 0.0
        %1297 = vmatpush.msra.mxu0 0.0
        %1298 = vmatpush.msra.mxu0 0.0
        %1299 = vmatpush.msra.mxu0 0.0
        %1300 = vmatpush.msra.mxu0 0.0
        %1301 = vmatpush.msra.mxu0 0.0
        %1302 = vmatpush.msra.mxu0 0.0
        %1303 = vmatpush.msra.mxu0 0.0
        %1304 = vmatpush.msra.mxu0 0.0
        %1305 = vmatpush.msra.mxu0 0.0
        %1306 = vmatpush.msra.mxu0 0.0
        %1307 = vmatpush.msra.mxu0 0.0
        %1308 = vmatpush.msra.mxu0 0.0
        %1309 = vmatpush.msra.mxu0 %v1292
        %1310 = vmatmul.f32.gmra.mxu0 %v1196
        %v1311 = vpop.f32.mrf.mxu0
        %v1312 = vadd.f32 0.0, %v1311
        %1313 = vmatmul.f32.gmra.mxu0 %v1199
        %v1314 = vpop.f32.mrf.mxu0
        %v1315 = vadd.f32 0.0, %v1314
        %1316 = vmatmul.f32.gmra.mxu0 %v1202
        %v1317 = vpop.f32.mrf.mxu0
        %v1318 = vadd.f32 0.0, %v1317
        %1319 = vmatmul.f32.gmra.mxu0 %v1205
        %v1320 = vpop.f32.mrf.mxu0
        %v1321 = vadd.f32 0.0, %v1320
        %1322 = vmatmul.f32.gmra.mxu0 %v1208
        %v1323 = vpop.f32.mrf.mxu0
        %v1324 = vadd.f32 0.0, %v1323
        %1325 = vmatmul.f32.gmra.mxu0 %v1211
        %v1326 = vpop.f32.mrf.mxu0
        %v1327 = vadd.f32 0.0, %v1326
        %1328 = vmatmul.f32.gmra.mxu0 %v1214
        %v1329 = vpop.f32.mrf.mxu0
        %v1330 = vadd.f32 0.0, %v1329
        %1331 = vmatmul.f32.gmra.mxu0 %v1217
        %v1332 = vpop.f32.mrf.mxu0
        %v1333 = vadd.f32 0.0, %v1332
        %1334 = vmatmul.f32.gmra.mxu0 %v1220
        %v1335 = vpop.f32.mrf.mxu0
        %v1336 = vadd.f32 0.0, %v1335
        %1337 = vmatmul.f32.gmra.mxu0 %v1223
        %v1338 = vpop.f32.mrf.mxu0
        %v1339 = vadd.f32 0.0, %v1338
        %1340 = vmatmul.f32.gmra.mxu0 %v1226
        %v1341 = vpop.f32.mrf.mxu0
        %v1342 = vadd.f32 0.0, %v1341
        %1343 = vmatmul.f32.gmra.mxu0 %v1229
        %v1344 = vpop.f32.mrf.mxu0
        %v1345 = vadd.f32 0.0, %v1344
        %1346 = vmatmul.f32.gmra.mxu0 %v1232
        %v1347 = vpop.f32.mrf.mxu0
        %v1348 = vadd.f32 0.0, %v1347
        %1349 = vmatmul.f32.gmra.mxu0 %v1235
        %v1350 = vpop.f32.mrf.mxu0
        %v1351 = vadd.f32 0.0, %v1350
        %1352 = vmatmul.f32.gmra.mxu0 %v1238
        %v1353 = vpop.f32.mrf.mxu0
        %v1354 = vadd.f32 0.0, %v1353
        %1355 = vmatmul.f32.gmra.mxu0 %v1241
        %v1356 = vpop.f32.mrf.mxu0
        %v1357 = vadd.f32 0.0, %v1356
        %1358 = vmatmul.f32.gmra.mxu0 %v1244
        %v1359 = vpop.f32.mrf.mxu0
        %v1360 = vadd.f32 0.0, %v1359
        %1361 = vmatmul.f32.gmra.mxu0 %v1247
        %v1362 = vpop.f32.mrf.mxu0
        %v1363 = vadd.f32 0.0, %v1362
        %1364 = vmatmul.f32.gmra.mxu0 %v1250
        %v1365 = vpop.f32.mrf.mxu0
        %v1366 = vadd.f32 0.0, %v1365
        %1367 = vmatmul.f32.gmra.mxu0 %v1253
        %v1368 = vpop.f32.mrf.mxu0
        %v1369 = vadd.f32 0.0, %v1368
        %1370 = vmatmul.f32.gmra.mxu0 %v1256
        %v1371 = vpop.f32.mrf.mxu0
        %v1372 = vadd.f32 0.0, %v1371
        %1373 = vmatmul.f32.gmra.mxu0 %v1259
        %v1374 = vpop.f32.mrf.mxu0
        %v1375 = vadd.f32 0.0, %v1374
        %1376 = vmatmul.f32.gmra.mxu0 %v1262
        %v1377 = vpop.f32.mrf.mxu0
        %v1378 = vadd.f32 0.0, %v1377
        %1379 = vmatmul.f32.gmra.mxu0 %v1265
        %v1380 = vpop.f32.mrf.mxu0
        %v1381 = vadd.f32 0.0, %v1380
        %1382 = vmatmul.f32.gmra.mxu0 %v1268
        %v1383 = vpop.f32.mrf.mxu0
        %v1384 = vadd.f32 0.0, %v1383
        %1385 = vmatmul.f32.gmra.mxu0 %v1271
        %v1386 = vpop.f32.mrf.mxu0
        %v1387 = vadd.f32 0.0, %v1386
        %1388 = vmatmul.f32.gmra.mxu0 %v1274
        %v1389 = vpop.f32.mrf.mxu0
        %v1390 = vadd.f32 0.0, %v1389
        %1391 = vmatmul.f32.gmra.mxu0 %v1277
        %v1392 = vpop.f32.mrf.mxu0
        %v1393 = vadd.f32 0.0, %v1392
        %1394 = vmatmul.f32.gmra.mxu0 %v1280
        %v1395 = vpop.f32.mrf.mxu0
        %v1396 = vadd.f32 0.0, %v1395
        %1397 = vmatmul.f32.gmra.mxu0 %v1283
        %v1398 = vpop.f32.mrf.mxu0
        %v1399 = vadd.f32 0.0, %v1398
        %1400 = vmatmul.f32.gmra.mxu0 %v1286
        %v1401 = vpop.f32.mrf.mxu0
        %v1402 = vadd.f32 0.0, %v1401
        %1403 = vmatmul.f32.gmra.mxu0 %v1289
        %v1404 = vpop.f32.mrf.mxu0
        %v1405 = vadd.f32 0.0, %v1404
        %1406 = vdwg.mxu0
        %v1407 = vadd.f32 %v1129, %v1312
        %v1408 = vadd.f32 %v1130, %v1315
        %v1409 = vadd.f32 %v1131, %v1318
        %v1410 = vadd.f32 %v1132, %v1321
        %v1411 = vadd.f32 %v1133, %v1324
        %v1412 = vadd.f32 %v1134, %v1327
        %v1413 = vadd.f32 %v1135, %v1330
        %v1414 = vadd.f32 %v1136, %v1333
        %v1415 = vadd.f32 %v1137, %v1336
        %v1416 = vadd.f32 %v1138, %v1339
        %v1417 = vadd.f32 %v1139, %v1342
        %v1418 = vadd.f32 %v1140, %v1345
        %v1419 = vadd.f32 %v1141, %v1348
        %v1420 = vadd.f32 %v1142, %v1351
        %v1421 = vadd.f32 %v1143, %v1354
        %v1422 = vadd.f32 %v1144, %v1357
        %v1423 = vadd.f32 %v1145, %v1360
        %v1424 = vadd.f32 %v1146, %v1363
        %v1425 = vadd.f32 %v1147, %v1366
        %v1426 = vadd.f32 %v1148, %v1369
        %v1427 = vadd.f32 %v1149, %v1372
        %v1428 = vadd.f32 %v1150, %v1375
        %v1429 = vadd.f32 %v1151, %v1378
        %v1430 = vadd.f32 %v1152, %v1381
        %v1431 = vadd.f32 %v1153, %v1384
        %v1432 = vadd.f32 %v1154, %v1387
        %v1433 = vadd.f32 %v1155, %v1390
        %v1434 = vadd.f32 %v1156, %v1393
        %v1435 = vadd.f32 %v1157, %v1396
        %v1436 = vadd.f32 %v1158, %v1399
        %v1437 = vadd.f32 %v1159, %v1402
        %v1438 = vadd.f32 %v1160, %v1405
        %v1439 = vld [vmem:[%s1161 + $0x1] sm:$0xff]
        %v1440 = vld [vmem:[%s1161 + $0x9] sm:$0xff]
        %v1441 = vld [vmem:[%s1161 + $0x19] sm:$0xff]
        %v1442 = vld [vmem:[%s1161 + $0x21] sm:$0xff]
        %v1443 = vld [vmem:[%s1161 + $0x31] sm:$0xff]
        %v1444 = vld [vmem:[%s1161 + $0x39] sm:$0xff]
        %v1445 = vld [vmem:[%s1161 + $0x49] sm:$0xff]
        %v1446 = vld [vmem:[%s1161 + $0x51] sm:$0xff]
        %v1447 = vld [vmem:[%s1161 + $0x61] sm:$0xff]
        %v1448 = vld [vmem:[%s1161 + $0x69] sm:$0xff]
        %v1449 = vld [vmem:[%s1161 + $0x79] sm:$0xff]
        %v1450 = vld [vmem:[%s1161 + $0x81] sm:$0xff]
        %v1451 = vld [vmem:[%s1161 + $0x91] sm:$0xff]
        %v1452 = vld [vmem:[%s1161 + $0x99] sm:$0xff]
        %v1453 = vld [vmem:[%s1161 + $0xa9] sm:$0xff]
        %v1454 = vld [vmem:[%s1161 + $0xb1] sm:$0xff]
        %v1455 = vld [vmem:[%s1161 + $0xc1] sm:$0xff]
        %v1456 = vld [vmem:[%s1161 + $0xc9] sm:$0xff]
        %v1457 = vld [vmem:[%s1161 + $0xd9] sm:$0xff]
        %v1458 = vld [vmem:[%s1161 + $0xe1] sm:$0xff]
        %v1459 = vld [vmem:[%s1161 + $0xf1] sm:$0xff]
        %v1460 = vld [vmem:[%s1161 + $0xf9] sm:$0xff]
        %v1461 = vld [vmem:[%s1161 + $0x109] sm:$0xff]
        %v1462 = vld [vmem:[%s1161 + $0x111] sm:$0xff]
        %v1463 = vld [vmem:[%s1161 + $0x121] sm:$0xff]
        %v1464 = vld [vmem:[%s1161 + $0x129] sm:$0xff]
        %v1465 = vld [vmem:[%s1161 + $0x139] sm:$0xff]
        %v1466 = vld [vmem:[%s1161 + $0x141] sm:$0xff]
        %v1467 = vld [vmem:[%s1161 + $0x151] sm:$0xff]
        %v1468 = vld [vmem:[%s1161 + $0x159] sm:$0xff]
        %v1469 = vld [vmem:[%s1161 + $0x169] sm:$0xff]
        %v1470 = vld [vmem:[%s1161 + $0x171] sm:$0xff]
        %v1471 = vld [vmem:[%s6 + $0xc] sm:$0x7]
        %v1473 = vsel %vm458, %v1439, 0
        %v1476 = vsel %vm458, %v1440, 0
        %v1479 = vsel %vm458, %v1441, 0
        %v1482 = vsel %vm458, %v1442, 0
        %v1485 = vsel %vm458, %v1443, 0
        %v1488 = vsel %vm458, %v1444, 0
        %v1491 = vsel %vm458, %v1445, 0
        %v1494 = vsel %vm458, %v1446, 0
        %v1497 = vsel %vm458, %v1447, 0
        %v1500 = vsel %vm458, %v1448, 0
        %v1503 = vsel %vm458, %v1449, 0
        %v1506 = vsel %vm458, %v1450, 0
        %v1509 = vsel %vm458, %v1451, 0
        %v1512 = vsel %vm458, %v1452, 0
        %v1515 = vsel %vm458, %v1453, 0
        %v1518 = vsel %vm458, %v1454, 0
        %v1521 = vsel %vm458, %v1455, 0
        %v1524 = vsel %vm458, %v1456, 0
        %v1527 = vsel %vm458, %v1457, 0
        %v1530 = vsel %vm458, %v1458, 0
        %v1533 = vsel %vm458, %v1459, 0
        %v1536 = vsel %vm458, %v1460, 0
        %v1539 = vsel %vm458, %v1461, 0
        %v1542 = vsel %vm458, %v1462, 0
        %v1545 = vsel %vm458, %v1463, 0
        %v1548 = vsel %vm458, %v1464, 0
        %v1551 = vsel %vm458, %v1465, 0
        %v1554 = vsel %vm458, %v1466, 0
        %v1557 = vsel %vm458, %v1467, 0
        %v1560 = vsel %vm458, %v1468, 0
        %v1563 = vsel %vm458, %v1469, 0
        %v1566 = vsel %vm458, %v1470, 0
        %v1569 = vsel %vm555, %v1471, 0
        %1571 = vmatpush.msra.mxu0 0.0
        %1572 = vmatpush.msra.mxu0 0.0
        %1573 = vmatpush.msra.mxu0 0.0
        %1574 = vmatpush.msra.mxu0 0.0
        %1575 = vmatpush.msra.mxu0 0.0
        %1576 = vmatpush.msra.mxu0 0.0
        %1577 = vmatpush.msra.mxu0 0.0
        %1578 = vmatpush.msra.mxu0 0.0
        %1579 = vmatpush.msra.mxu0 0.0
        %1580 = vmatpush.msra.mxu0 0.0
        %1581 = vmatpush.msra.mxu0 0.0
        %1582 = vmatpush.msra.mxu0 0.0
        %1583 = vmatpush.msra.mxu0 0.0
        %1584 = vmatpush.msra.mxu0 0.0
        %1585 = vmatpush.msra.mxu0 0.0
        %1586 = vmatpush.msra.mxu0 %v1569
        %1587 = vmatmul.f32.gmra.mxu0 %v1473
        %v1588 = vpop.f32.mrf.mxu0
        %v1589 = vadd.f32 0.0, %v1588
        %1590 = vmatmul.f32.gmra.mxu0 %v1476
        %v1591 = vpop.f32.mrf.mxu0
        %v1592 = vadd.f32 0.0, %v1591
        %1593 = vmatmul.f32.gmra.mxu0 %v1479
        %v1594 = vpop.f32.mrf.mxu0
        %v1595 = vadd.f32 0.0, %v1594
        %1596 = vmatmul.f32.gmra.mxu0 %v1482
        %v1597 = vpop.f32.mrf.mxu0
        %v1598 = vadd.f32 0.0, %v1597
        %1599 = vmatmul.f32.gmra.mxu0 %v1485
        %v1600 = vpop.f32.mrf.mxu0
        %v1601 = vadd.f32 0.0, %v1600
        %1602 = vmatmul.f32.gmra.mxu0 %v1488
        %v1603 = vpop.f32.mrf.mxu0
        %v1604 = vadd.f32 0.0, %v1603
        %1605 = vmatmul.f32.gmra.mxu0 %v1491
        %v1606 = vpop.f32.mrf.mxu0
        %v1607 = vadd.f32 0.0, %v1606
        %1608 = vmatmul.f32.gmra.mxu0 %v1494
        %v1609 = vpop.f32.mrf.mxu0
        %v1610 = vadd.f32 0.0, %v1609
        %1611 = vmatmul.f32.gmra.mxu0 %v1497
        %v1612 = vpop.f32.mrf.mxu0
        %v1613 = vadd.f32 0.0, %v1612
        %1614 = vmatmul.f32.gmra.mxu0 %v1500
        %v1615 = vpop.f32.mrf.mxu0
        %v1616 = vadd.f32 0.0, %v1615
        %1617 = vmatmul.f32.gmra.mxu0 %v1503
        %v1618 = vpop.f32.mrf.mxu0
        %v1619 = vadd.f32 0.0, %v1618
        %1620 = vmatmul.f32.gmra.mxu0 %v1506
        %v1621 = vpop.f32.mrf.mxu0
        %v1622 = vadd.f32 0.0, %v1621
        %1623 = vmatmul.f32.gmra.mxu0 %v1509
        %v1624 = vpop.f32.mrf.mxu0
        %v1625 = vadd.f32 0.0, %v1624
        %1626 = vmatmul.f32.gmra.mxu0 %v1512
        %v1627 = vpop.f32.mrf.mxu0
        %v1628 = vadd.f32 0.0, %v1627
        %1629 = vmatmul.f32.gmra.mxu0 %v1515
        %v1630 = vpop.f32.mrf.mxu0
        %v1631 = vadd.f32 0.0, %v1630
        %1632 = vmatmul.f32.gmra.mxu0 %v1518
        %v1633 = vpop.f32.mrf.mxu0
        %v1634 = vadd.f32 0.0, %v1633
        %1635 = vmatmul.f32.gmra.mxu0 %v1521
        %v1636 = vpop.f32.mrf.mxu0
        %v1637 = vadd.f32 0.0, %v1636
        %1638 = vmatmul.f32.gmra.mxu0 %v1524
        %v1639 = vpop.f32.mrf.mxu0
        %v1640 = vadd.f32 0.0, %v1639
        %1641 = vmatmul.f32.gmra.mxu0 %v1527
        %v1642 = vpop.f32.mrf.mxu0
        %v1643 = vadd.f32 0.0, %v1642
        %1644 = vmatmul.f32.gmra.mxu0 %v1530
        %v1645 = vpop.f32.mrf.mxu0
        %v1646 = vadd.f32 0.0, %v1645
        %1647 = vmatmul.f32.gmra.mxu0 %v1533
        %v1648 = vpop.f32.mrf.mxu0
        %v1649 = vadd.f32 0.0, %v1648
        %1650 = vmatmul.f32.gmra.mxu0 %v1536
        %v1651 = vpop.f32.mrf.mxu0
        %v1652 = vadd.f32 0.0, %v1651
        %1653 = vmatmul.f32.gmra.mxu0 %v1539
        %v1654 = vpop.f32.mrf.mxu0
        %v1655 = vadd.f32 0.0, %v1654
        %1656 = vmatmul.f32.gmra.mxu0 %v1542
        %v1657 = vpop.f32.mrf.mxu0
        %v1658 = vadd.f32 0.0, %v1657
        %1659 = vmatmul.f32.gmra.mxu0 %v1545
        %v1660 = vpop.f32.mrf.mxu0
        %v1661 = vadd.f32 0.0, %v1660
        %1662 = vmatmul.f32.gmra.mxu0 %v1548
        %v1663 = vpop.f32.mrf.mxu0
        %v1664 = vadd.f32 0.0, %v1663
        %1665 = vmatmul.f32.gmra.mxu0 %v1551
        %v1666 = vpop.f32.mrf.mxu0
        %v1667 = vadd.f32 0.0, %v1666
        %1668 = vmatmul.f32.gmra.mxu0 %v1554
        %v1669 = vpop.f32.mrf.mxu0
        %v1670 = vadd.f32 0.0, %v1669
        %1671 = vmatmul.f32.gmra.mxu0 %v1557
        %v1672 = vpop.f32.mrf.mxu0
        %v1673 = vadd.f32 0.0, %v1672
        %1674 = vmatmul.f32.gmra.mxu0 %v1560
        %v1675 = vpop.f32.mrf.mxu0
        %v1676 = vadd.f32 0.0, %v1675
        %1677 = vmatmul.f32.gmra.mxu0 %v1563
        %v1678 = vpop.f32.mrf.mxu0
        %v1679 = vadd.f32 0.0, %v1678
        %1680 = vmatmul.f32.gmra.mxu0 %v1566
        %v1681 = vpop.f32.mrf.mxu0
        %v1682 = vadd.f32 0.0, %v1681
        %1683 = vdwg.mxu0
        %v1684 = vadd.f32 %v1407, %v1589
        %v1685 = vadd.f32 %v1408, %v1592
        %v1686 = vadd.f32 %v1409, %v1595
        %v1687 = vadd.f32 %v1410, %v1598
        %v1688 = vadd.f32 %v1411, %v1601
        %v1689 = vadd.f32 %v1412, %v1604
        %v1690 = vadd.f32 %v1413, %v1607
        %v1691 = vadd.f32 %v1414, %v1610
        %v1692 = vadd.f32 %v1415, %v1613
        %v1693 = vadd.f32 %v1416, %v1616
        %v1694 = vadd.f32 %v1417, %v1619
        %v1695 = vadd.f32 %v1418, %v1622
        %v1696 = vadd.f32 %v1419, %v1625
        %v1697 = vadd.f32 %v1420, %v1628
        %v1698 = vadd.f32 %v1421, %v1631
        %v1699 = vadd.f32 %v1422, %v1634
        %v1700 = vadd.f32 %v1423, %v1637
        %v1701 = vadd.f32 %v1424, %v1640
        %v1702 = vadd.f32 %v1425, %v1643
        %v1703 = vadd.f32 %v1426, %v1646
        %v1704 = vadd.f32 %v1427, %v1649
        %v1705 = vadd.f32 %v1428, %v1652
        %v1706 = vadd.f32 %v1429, %v1655
        %v1707 = vadd.f32 %v1430, %v1658
        %v1708 = vadd.f32 %v1431, %v1661
        %v1709 = vadd.f32 %v1432, %v1664
        %v1710 = vadd.f32 %v1433, %v1667
        %v1711 = vadd.f32 %v1434, %v1670
        %v1712 = vadd.f32 %v1435, %v1673
        %v1713 = vadd.f32 %v1436, %v1676
        %v1714 = vadd.f32 %v1437, %v1679
        %v1715 = vadd.f32 %v1438, %v1682
        %v1716 = vld [vmem:[%s1161 + $0x2] sm:$0xff]
        %v1717 = vld [vmem:[%s1161 + $0xa] sm:$0xff]
        %v1718 = vld [vmem:[%s1161 + $0x1a] sm:$0xff]
        %v1719 = vld [vmem:[%s1161 + $0x22] sm:$0xff]
        %v1720 = vld [vmem:[%s1161 + $0x32] sm:$0xff]
        %v1721 = vld [vmem:[%s1161 + $0x3a] sm:$0xff]
        %v1722 = vld [vmem:[%s1161 + $0x4a] sm:$0xff]
        %v1723 = vld [vmem:[%s1161 + $0x52] sm:$0xff]
        %v1724 = vld [vmem:[%s1161 + $0x62] sm:$0xff]
        %v1725 = vld [vmem:[%s1161 + $0x6a] sm:$0xff]
        %v1726 = vld [vmem:[%s1161 + $0x7a] sm:$0xff]
        %v1727 = vld [vmem:[%s1161 + $0x82] sm:$0xff]
        %v1728 = vld [vmem:[%s1161 + $0x92] sm:$0xff]
        %v1729 = vld [vmem:[%s1161 + $0x9a] sm:$0xff]
        %v1730 = vld [vmem:[%s1161 + $0xaa] sm:$0xff]
        %v1731 = vld [vmem:[%s1161 + $0xb2] sm:$0xff]
        %v1732 = vld [vmem:[%s1161 + $0xc2] sm:$0xff]
        %v1733 = vld [vmem:[%s1161 + $0xca] sm:$0xff]
        %v1734 = vld [vmem:[%s1161 + $0xda] sm:$0xff]
        %v1735 = vld [vmem:[%s1161 + $0xe2] sm:$0xff]
        %v1736 = vld [vmem:[%s1161 + $0xf2] sm:$0xff]
        %v1737 = vld [vmem:[%s1161 + $0xfa] sm:$0xff]
        %v1738 = vld [vmem:[%s1161 + $0x10a] sm:$0xff]
        %v1739 = vld [vmem:[%s1161 + $0x112] sm:$0xff]
        %v1740 = vld [vmem:[%s1161 + $0x122] sm:$0xff]
        %v1741 = vld [vmem:[%s1161 + $0x12a] sm:$0xff]
        %v1742 = vld [vmem:[%s1161 + $0x13a] sm:$0xff]
        %v1743 = vld [vmem:[%s1161 + $0x142] sm:$0xff]
        %v1744 = vld [vmem:[%s1161 + $0x152] sm:$0xff]
        %v1745 = vld [vmem:[%s1161 + $0x15a] sm:$0xff]
        %v1746 = vld [vmem:[%s1161 + $0x16a] sm:$0xff]
        %v1747 = vld [vmem:[%s1161 + $0x172] sm:$0xff]
        %v1748 = vld [vmem:[%s6 + $0xf] sm:$0x7]
        %v1750 = vsel %vm458, %v1716, 0
        %v1753 = vsel %vm458, %v1717, 0
        %v1756 = vsel %vm458, %v1718, 0
        %v1759 = vsel %vm458, %v1719, 0
        %v1762 = vsel %vm458, %v1720, 0
        %v1765 = vsel %vm458, %v1721, 0
        %v1768 = vsel %vm458, %v1722, 0
        %v1771 = vsel %vm458, %v1723, 0
        %v1774 = vsel %vm458, %v1724, 0
        %v1777 = vsel %vm458, %v1725, 0
        %v1780 = vsel %vm458, %v1726, 0
        %v1783 = vsel %vm458, %v1727, 0
        %v1786 = vsel %vm458, %v1728, 0
        %v1789 = vsel %vm458, %v1729, 0
        %v1792 = vsel %vm458, %v1730, 0
        %v1795 = vsel %vm458, %v1731, 0
        %v1798 = vsel %vm458, %v1732, 0
        %v1801 = vsel %vm458, %v1733, 0
        %v1804 = vsel %vm458, %v1734, 0
        %v1807 = vsel %vm458, %v1735, 0
        %v1810 = vsel %vm458, %v1736, 0
        %v1813 = vsel %vm458, %v1737, 0
        %v1816 = vsel %vm458, %v1738, 0
        %v1819 = vsel %vm458, %v1739, 0
        %v1822 = vsel %vm458, %v1740, 0
        %v1825 = vsel %vm458, %v1741, 0
        %v1828 = vsel %vm458, %v1742, 0
        %v1831 = vsel %vm458, %v1743, 0
        %v1834 = vsel %vm458, %v1744, 0
        %v1837 = vsel %vm458, %v1745, 0
        %v1840 = vsel %vm458, %v1746, 0
        %v1843 = vsel %vm458, %v1747, 0
        %v1846 = vsel %vm555, %v1748, 0
        %1848 = vmatpush.msra.mxu0 0.0
        %1849 = vmatpush.msra.mxu0 0.0
        %1850 = vmatpush.msra.mxu0 0.0
        %1851 = vmatpush.msra.mxu0 0.0
        %1852 = vmatpush.msra.mxu0 0.0
        %1853 = vmatpush.msra.mxu0 0.0
        %1854 = vmatpush.msra.mxu0 0.0
        %1855 = vmatpush.msra.mxu0 0.0
        %1856 = vmatpush.msra.mxu0 0.0
        %1857 = vmatpush.msra.mxu0 0.0
        %1858 = vmatpush.msra.mxu0 0.0
        %1859 = vmatpush.msra.mxu0 0.0
        %1860 = vmatpush.msra.mxu0 0.0
        %1861 = vmatpush.msra.mxu0 0.0
        %1862 = vmatpush.msra.mxu0 0.0
        %1863 = vmatpush.msra.mxu0 %v1846
        %1864 = vmatmul.f32.gmra.mxu0 %v1750
        %v1865 = vpop.f32.mrf.mxu0
        %v1866 = vadd.f32 0.0, %v1865
        %1867 = vmatmul.f32.gmra.mxu0 %v1753
        %v1868 = vpop.f32.mrf.mxu0
        %v1869 = vadd.f32 0.0, %v1868
        %1870 = vmatmul.f32.gmra.mxu0 %v1756
        %v1871 = vpop.f32.mrf.mxu0
        %v1872 = vadd.f32 0.0, %v1871
        %1873 = vmatmul.f32.gmra.mxu0 %v1759
        %v1874 = vpop.f32.mrf.mxu0
        %v1875 = vadd.f32 0.0, %v1874
        %1876 = vmatmul.f32.gmra.mxu0 %v1762
        %v1877 = vpop.f32.mrf.mxu0
        %v1878 = vadd.f32 0.0, %v1877
        %1879 = vmatmul.f32.gmra.mxu0 %v1765
        %v1880 = vpop.f32.mrf.mxu0
        %v1881 = vadd.f32 0.0, %v1880
        %1882 = vmatmul.f32.gmra.mxu0 %v1768
        %v1883 = vpop.f32.mrf.mxu0
        %v1884 = vadd.f32 0.0, %v1883
        %1885 = vmatmul.f32.gmra.mxu0 %v1771
        %v1886 = vpop.f32.mrf.mxu0
        %v1887 = vadd.f32 0.0, %v1886
        %1888 = vmatmul.f32.gmra.mxu0 %v1774
        %v1889 = vpop.f32.mrf.mxu0
        %v1890 = vadd.f32 0.0, %v1889
        %1891 = vmatmul.f32.gmra.mxu0 %v1777
        %v1892 = vpop.f32.mrf.mxu0
        %v1893 = vadd.f32 0.0, %v1892
        %1894 = vmatmul.f32.gmra.mxu0 %v1780
        %v1895 = vpop.f32.mrf.mxu0
        %v1896 = vadd.f32 0.0, %v1895
        %1897 = vmatmul.f32.gmra.mxu0 %v1783
        %v1898 = vpop.f32.mrf.mxu0
        %v1899 = vadd.f32 0.0, %v1898
        %1900 = vmatmul.f32.gmra.mxu0 %v1786
        %v1901 = vpop.f32.mrf.mxu0
        %v1902 = vadd.f32 0.0, %v1901
        %1903 = vmatmul.f32.gmra.mxu0 %v1789
        %v1904 = vpop.f32.mrf.mxu0
        %v1905 = vadd.f32 0.0, %v1904
        %1906 = vmatmul.f32.gmra.mxu0 %v1792
        %v1907 = vpop.f32.mrf.mxu0
        %v1908 = vadd.f32 0.0, %v1907
        %1909 = vmatmul.f32.gmra.mxu0 %v1795
        %v1910 = vpop.f32.mrf.mxu0
        %v1911 = vadd.f32 0.0, %v1910
        %1912 = vmatmul.f32.gmra.mxu0 %v1798
        %v1913 = vpop.f32.mrf.mxu0
        %v1914 = vadd.f32 0.0, %v1913
        %1915 = vmatmul.f32.gmra.mxu0 %v1801
        %v1916 = vpop.f32.mrf.mxu0
        %v1917 = vadd.f32 0.0, %v1916
        %1918 = vmatmul.f32.gmra.mxu0 %v1804
        %v1919 = vpop.f32.mrf.mxu0
        %v1920 = vadd.f32 0.0, %v1919
        %1921 = vmatmul.f32.gmra.mxu0 %v1807
        %v1922 = vpop.f32.mrf.mxu0
        %v1923 = vadd.f32 0.0, %v1922
        %1924 = vmatmul.f32.gmra.mxu0 %v1810
        %v1925 = vpop.f32.mrf.mxu0
        %v1926 = vadd.f32 0.0, %v1925
        %1927 = vmatmul.f32.gmra.mxu0 %v1813
        %v1928 = vpop.f32.mrf.mxu0
        %v1929 = vadd.f32 0.0, %v1928
        %1930 = vmatmul.f32.gmra.mxu0 %v1816
        %v1931 = vpop.f32.mrf.mxu0
        %v1932 = vadd.f32 0.0, %v1931
        %1933 = vmatmul.f32.gmra.mxu0 %v1819
        %v1934 = vpop.f32.mrf.mxu0
        %v1935 = vadd.f32 0.0, %v1934
        %1936 = vmatmul.f32.gmra.mxu0 %v1822
        %v1937 = vpop.f32.mrf.mxu0
        %v1938 = vadd.f32 0.0, %v1937
        %1939 = vmatmul.f32.gmra.mxu0 %v1825
        %v1940 = vpop.f32.mrf.mxu0
        %v1941 = vadd.f32 0.0, %v1940
        %1942 = vmatmul.f32.gmra.mxu0 %v1828
        %v1943 = vpop.f32.mrf.mxu0
        %v1944 = vadd.f32 0.0, %v1943
        %1945 = vmatmul.f32.gmra.mxu0 %v1831
        %v1946 = vpop.f32.mrf.mxu0
        %v1947 = vadd.f32 0.0, %v1946
        %1948 = vmatmul.f32.gmra.mxu0 %v1834
        %v1949 = vpop.f32.mrf.mxu0
        %v1950 = vadd.f32 0.0, %v1949
        %1951 = vmatmul.f32.gmra.mxu0 %v1837
        %v1952 = vpop.f32.mrf.mxu0
        %v1953 = vadd.f32 0.0, %v1952
        %1954 = vmatmul.f32.gmra.mxu0 %v1840
        %v1955 = vpop.f32.mrf.mxu0
        %v1956 = vadd.f32 0.0, %v1955
        %1957 = vmatmul.f32.gmra.mxu0 %v1843
        %v1958 = vpop.f32.mrf.mxu0
        %v1959 = vadd.f32 0.0, %v1958
        %1960 = vdwg.mxu0
        %v1961 = vadd.f32 %v1684, %v1866
        %v1962 = vadd.f32 %v1685, %v1869
        %v1963 = vadd.f32 %v1686, %v1872
        %v1964 = vadd.f32 %v1687, %v1875
        %v1965 = vadd.f32 %v1688, %v1878
        %v1966 = vadd.f32 %v1689, %v1881
        %v1967 = vadd.f32 %v1690, %v1884
        %v1968 = vadd.f32 %v1691, %v1887
        %v1969 = vadd.f32 %v1692, %v1890
        %v1970 = vadd.f32 %v1693, %v1893
        %v1971 = vadd.f32 %v1694, %v1896
        %v1972 = vadd.f32 %v1695, %v1899
        %v1973 = vadd.f32 %v1696, %v1902
        %v1974 = vadd.f32 %v1697, %v1905
        %v1975 = vadd.f32 %v1698, %v1908
        %v1976 = vadd.f32 %v1699, %v1911
        %v1977 = vadd.f32 %v1700, %v1914
        %v1978 = vadd.f32 %v1701, %v1917
        %v1979 = vadd.f32 %v1702, %v1920
        %v1980 = vadd.f32 %v1703, %v1923
        %v1981 = vadd.f32 %v1704, %v1926
        %v1982 = vadd.f32 %v1705, %v1929
        %v1983 = vadd.f32 %v1706, %v1932
        %v1984 = vadd.f32 %v1707, %v1935
        %v1985 = vadd.f32 %v1708, %v1938
        %v1986 = vadd.f32 %v1709, %v1941
        %v1987 = vadd.f32 %v1710, %v1944
        %v1988 = vadd.f32 %v1711, %v1947
        %v1989 = vadd.f32 %v1712, %v1950
        %v1990 = vadd.f32 %v1713, %v1953
        %v1991 = vadd.f32 %v1714, %v1956
        %v1992 = vadd.f32 %v1715, %v1959
        %s1993 = scalar_lea.vmem %s381, 48
        %v1994 = vld [vmem:[%s1993] sm:$0xff]
        %v1995 = vld [vmem:[%s1993 + $0x8] sm:$0xff]
        %v1996 = vld [vmem:[%s1993 + $0x18] sm:$0xff]
        %v1997 = vld [vmem:[%s1993 + $0x20] sm:$0xff]
        %v1998 = vld [vmem:[%s1993 + $0x30] sm:$0xff]
        %v1999 = vld [vmem:[%s1993 + $0x38] sm:$0xff]
        %v2000 = vld [vmem:[%s1993 + $0x48] sm:$0xff]
        %v2001 = vld [vmem:[%s1993 + $0x50] sm:$0xff]
        %v2002 = vld [vmem:[%s1993 + $0x60] sm:$0xff]
        %v2003 = vld [vmem:[%s1993 + $0x68] sm:$0xff]
        %v2004 = vld [vmem:[%s1993 + $0x78] sm:$0xff]
        %v2005 = vld [vmem:[%s1993 + $0x80] sm:$0xff]
        %v2006 = vld [vmem:[%s1993 + $0x90] sm:$0xff]
        %v2007 = vld [vmem:[%s1993 + $0x98] sm:$0xff]
        %v2008 = vld [vmem:[%s1993 + $0xa8] sm:$0xff]
        %v2009 = vld [vmem:[%s1993 + $0xb0] sm:$0xff]
        %v2010 = vld [vmem:[%s1993 + $0xc0] sm:$0xff]
        %v2011 = vld [vmem:[%s1993 + $0xc8] sm:$0xff]
        %v2012 = vld [vmem:[%s1993 + $0xd8] sm:$0xff]
        %v2013 = vld [vmem:[%s1993 + $0xe0] sm:$0xff]
        %v2014 = vld [vmem:[%s1993 + $0xf0] sm:$0xff]
        %v2015 = vld [vmem:[%s1993 + $0xf8] sm:$0xff]
        %v2016 = vld [vmem:[%s1993 + $0x108] sm:$0xff]
        %v2017 = vld [vmem:[%s1993 + $0x110] sm:$0xff]
        %v2018 = vld [vmem:[%s1993 + $0x120] sm:$0xff]
        %v2019 = vld [vmem:[%s1993 + $0x128] sm:$0xff]
        %v2020 = vld [vmem:[%s1993 + $0x138] sm:$0xff]
        %v2021 = vld [vmem:[%s1993 + $0x140] sm:$0xff]
        %v2022 = vld [vmem:[%s1993 + $0x150] sm:$0xff]
        %v2023 = vld [vmem:[%s1993 + $0x158] sm:$0xff]
        %v2024 = vld [vmem:[%s1993 + $0x168] sm:$0xff]
        %v2025 = vld [vmem:[%s1993 + $0x170] sm:$0xff]
        %v2026 = vld [vmem:[%s6 + $0x12] sm:$0x7]
        %v2028 = vsel %vm458, %v1994, 0
        %v2031 = vsel %vm458, %v1995, 0
        %v2034 = vsel %vm458, %v1996, 0
        %v2037 = vsel %vm458, %v1997, 0
        %v2040 = vsel %vm458, %v1998, 0
        %v2043 = vsel %vm458, %v1999, 0
        %v2046 = vsel %vm458, %v2000, 0
        %v2049 = vsel %vm458, %v2001, 0
        %v2052 = vsel %vm458, %v2002, 0
        %v2055 = vsel %vm458, %v2003, 0
        %v2058 = vsel %vm458, %v2004, 0
        %v2061 = vsel %vm458, %v2005, 0
        %v2064 = vsel %vm458, %v2006, 0
        %v2067 = vsel %vm458, %v2007, 0
        %v2070 = vsel %vm458, %v2008, 0
        %v2073 = vsel %vm458, %v2009, 0
        %v2076 = vsel %vm458, %v2010, 0
        %v2079 = vsel %vm458, %v2011, 0
        %v2082 = vsel %vm458, %v2012, 0
        %v2085 = vsel %vm458, %v2013, 0
        %v2088 = vsel %vm458, %v2014, 0
        %v2091 = vsel %vm458, %v2015, 0
        %v2094 = vsel %vm458, %v2016, 0
        %v2097 = vsel %vm458, %v2017, 0
        %v2100 = vsel %vm458, %v2018, 0
        %v2103 = vsel %vm458, %v2019, 0
        %v2106 = vsel %vm458, %v2020, 0
        %v2109 = vsel %vm458, %v2021, 0
        %v2112 = vsel %vm458, %v2022, 0
        %v2115 = vsel %vm458, %v2023, 0
        %v2118 = vsel %vm458, %v2024, 0
        %v2121 = vsel %vm458, %v2025, 0
        %v2124 = vsel %vm555, %v2026, 0
        %2126 = vmatpush.msra.mxu0 0.0
        %2127 = vmatpush.msra.mxu0 0.0
        %2128 = vmatpush.msra.mxu0 0.0
        %2129 = vmatpush.msra.mxu0 0.0
        %2130 = vmatpush.msra.mxu0 0.0
        %2131 = vmatpush.msra.mxu0 0.0
        %2132 = vmatpush.msra.mxu0 0.0
        %2133 = vmatpush.msra.mxu0 0.0
        %2134 = vmatpush.msra.mxu0 0.0
        %2135 = vmatpush.msra.mxu0 0.0
        %2136 = vmatpush.msra.mxu0 0.0
        %2137 = vmatpush.msra.mxu0 0.0
        %2138 = vmatpush.msra.mxu0 0.0
        %2139 = vmatpush.msra.mxu0 0.0
        %2140 = vmatpush.msra.mxu0 0.0
        %2141 = vmatpush.msra.mxu0 %v2124
        %2142 = vmatmul.f32.gmra.mxu0 %v2028
        %v2143 = vpop.f32.mrf.mxu0
        %v2144 = vadd.f32 0.0, %v2143
        %2145 = vmatmul.f32.gmra.mxu0 %v2031
        %v2146 = vpop.f32.mrf.mxu0
        %v2147 = vadd.f32 0.0, %v2146
        %2148 = vmatmul.f32.gmra.mxu0 %v2034
        %v2149 = vpop.f32.mrf.mxu0
        %v2150 = vadd.f32 0.0, %v2149
        %2151 = vmatmul.f32.gmra.mxu0 %v2037
        %v2152 = vpop.f32.mrf.mxu0
        %v2153 = vadd.f32 0.0, %v2152
        %2154 = vmatmul.f32.gmra.mxu0 %v2040
        %v2155 = vpop.f32.mrf.mxu0
        %v2156 = vadd.f32 0.0, %v2155
        %2157 = vmatmul.f32.gmra.mxu0 %v2043
        %v2158 = vpop.f32.mrf.mxu0
        %v2159 = vadd.f32 0.0, %v2158
        %2160 = vmatmul.f32.gmra.mxu0 %v2046
        %v2161 = vpop.f32.mrf.mxu0
        %v2162 = vadd.f32 0.0, %v2161
        %2163 = vmatmul.f32.gmra.mxu0 %v2049
        %v2164 = vpop.f32.mrf.mxu0
        %v2165 = vadd.f32 0.0, %v2164
        %2166 = vmatmul.f32.gmra.mxu0 %v2052
        %v2167 = vpop.f32.mrf.mxu0
        %v2168 = vadd.f32 0.0, %v2167
        %2169 = vmatmul.f32.gmra.mxu0 %v2055
        %v2170 = vpop.f32.mrf.mxu0
        %v2171 = vadd.f32 0.0, %v2170
        %2172 = vmatmul.f32.gmra.mxu0 %v2058
        %v2173 = vpop.f32.mrf.mxu0
        %v2174 = vadd.f32 0.0, %v2173
        %2175 = vmatmul.f32.gmra.mxu0 %v2061
        %v2176 = vpop.f32.mrf.mxu0
        %v2177 = vadd.f32 0.0, %v2176
        %2178 = vmatmul.f32.gmra.mxu0 %v2064
        %v2179 = vpop.f32.mrf.mxu0
        %v2180 = vadd.f32 0.0, %v2179
        %2181 = vmatmul.f32.gmra.mxu0 %v2067
        %v2182 = vpop.f32.mrf.mxu0
        %v2183 = vadd.f32 0.0, %v2182
        %2184 = vmatmul.f32.gmra.mxu0 %v2070
        %v2185 = vpop.f32.mrf.mxu0
        %v2186 = vadd.f32 0.0, %v2185
        %2187 = vmatmul.f32.gmra.mxu0 %v2073
        %v2188 = vpop.f32.mrf.mxu0
        %v2189 = vadd.f32 0.0, %v2188
        %2190 = vmatmul.f32.gmra.mxu0 %v2076
        %v2191 = vpop.f32.mrf.mxu0
        %v2192 = vadd.f32 0.0, %v2191
        %2193 = vmatmul.f32.gmra.mxu0 %v2079
        %v2194 = vpop.f32.mrf.mxu0
        %v2195 = vadd.f32 0.0, %v2194
        %2196 = vmatmul.f32.gmra.mxu0 %v2082
        %v2197 = vpop.f32.mrf.mxu0
        %v2198 = vadd.f32 0.0, %v2197
        %2199 = vmatmul.f32.gmra.mxu0 %v2085
        %v2200 = vpop.f32.mrf.mxu0
        %v2201 = vadd.f32 0.0, %v2200
        %2202 = vmatmul.f32.gmra.mxu0 %v2088
        %v2203 = vpop.f32.mrf.mxu0
        %v2204 = vadd.f32 0.0, %v2203
        %2205 = vmatmul.f32.gmra.mxu0 %v2091
        %v2206 = vpop.f32.mrf.mxu0
        %v2207 = vadd.f32 0.0, %v2206
        %2208 = vmatmul.f32.gmra.mxu0 %v2094
        %v2209 = vpop.f32.mrf.mxu0
        %v2210 = vadd.f32 0.0, %v2209
        %2211 = vmatmul.f32.gmra.mxu0 %v2097
        %v2212 = vpop.f32.mrf.mxu0
        %v2213 = vadd.f32 0.0, %v2212
        %2214 = vmatmul.f32.gmra.mxu0 %v2100
        %v2215 = vpop.f32.mrf.mxu0
        %v2216 = vadd.f32 0.0, %v2215
        %2217 = vmatmul.f32.gmra.mxu0 %v2103
        %v2218 = vpop.f32.mrf.mxu0
        %v2219 = vadd.f32 0.0, %v2218
        %2220 = vmatmul.f32.gmra.mxu0 %v2106
        %v2221 = vpop.f32.mrf.mxu0
        %v2222 = vadd.f32 0.0, %v2221
        %2223 = vmatmul.f32.gmra.mxu0 %v2109
        %v2224 = vpop.f32.mrf.mxu0
        %v2225 = vadd.f32 0.0, %v2224
        %2226 = vmatmul.f32.gmra.mxu0 %v2112
        %v2227 = vpop.f32.mrf.mxu0
        %v2228 = vadd.f32 0.0, %v2227
        %2229 = vmatmul.f32.gmra.mxu0 %v2115
        %v2230 = vpop.f32.mrf.mxu0
        %v2231 = vadd.f32 0.0, %v2230
        %2232 = vmatmul.f32.gmra.mxu0 %v2118
        %v2233 = vpop.f32.mrf.mxu0
        %v2234 = vadd.f32 0.0, %v2233
        %2235 = vmatmul.f32.gmra.mxu0 %v2121
        %v2236 = vpop.f32.mrf.mxu0
        %v2237 = vadd.f32 0.0, %v2236
        %2238 = vdwg.mxu0
        %v2239 = vadd.f32 %v1961, %v2144
        %v2240 = vadd.f32 %v1962, %v2147
        %v2241 = vadd.f32 %v1963, %v2150
        %v2242 = vadd.f32 %v1964, %v2153
        %v2243 = vadd.f32 %v1965, %v2156
        %v2244 = vadd.f32 %v1966, %v2159
        %v2245 = vadd.f32 %v1967, %v2162
        %v2246 = vadd.f32 %v1968, %v2165
        %v2247 = vadd.f32 %v1969, %v2168
        %v2248 = vadd.f32 %v1970, %v2171
        %v2249 = vadd.f32 %v1971, %v2174
        %v2250 = vadd.f32 %v1972, %v2177
        %v2251 = vadd.f32 %v1973, %v2180
        %v2252 = vadd.f32 %v1974, %v2183
        %v2253 = vadd.f32 %v1975, %v2186
        %v2254 = vadd.f32 %v1976, %v2189
        %v2255 = vadd.f32 %v1977, %v2192
        %v2256 = vadd.f32 %v1978, %v2195
        %v2257 = vadd.f32 %v1979, %v2198
        %v2258 = vadd.f32 %v1980, %v2201
        %v2259 = vadd.f32 %v1981, %v2204
        %v2260 = vadd.f32 %v1982, %v2207
        %v2261 = vadd.f32 %v1983, %v2210
        %v2262 = vadd.f32 %v1984, %v2213
        %v2263 = vadd.f32 %v1985, %v2216
        %v2264 = vadd.f32 %v1986, %v2219
        %v2265 = vadd.f32 %v1987, %v2222
        %v2266 = vadd.f32 %v1988, %v2225
        %v2267 = vadd.f32 %v1989, %v2228
        %v2268 = vadd.f32 %v1990, %v2231
        %v2269 = vadd.f32 %v1991, %v2234
        %v2270 = vadd.f32 %v1992, %v2237
        %v2271 = vld [vmem:[%s1993 + $0x1] sm:$0xff]
        %v2272 = vld [vmem:[%s1993 + $0x9] sm:$0xff]
        %v2273 = vld [vmem:[%s1993 + $0x19] sm:$0xff]
        %v2274 = vld [vmem:[%s1993 + $0x21] sm:$0xff]
        %v2275 = vld [vmem:[%s1993 + $0x31] sm:$0xff]
        %v2276 = vld [vmem:[%s1993 + $0x39] sm:$0xff]
        %v2277 = vld [vmem:[%s1993 + $0x49] sm:$0xff]
        %v2278 = vld [vmem:[%s1993 + $0x51] sm:$0xff]
        %v2279 = vld [vmem:[%s1993 + $0x61] sm:$0xff]
        %v2280 = vld [vmem:[%s1993 + $0x69] sm:$0xff]
        %v2281 = vld [vmem:[%s1993 + $0x79] sm:$0xff]
        %v2282 = vld [vmem:[%s1993 + $0x81] sm:$0xff]
        %v2283 = vld [vmem:[%s1993 + $0x91] sm:$0xff]
        %v2284 = vld [vmem:[%s1993 + $0x99] sm:$0xff]
        %v2285 = vld [vmem:[%s1993 + $0xa9] sm:$0xff]
        %v2286 = vld [vmem:[%s1993 + $0xb1] sm:$0xff]
        %v2287 = vld [vmem:[%s1993 + $0xc1] sm:$0xff]
        %v2288 = vld [vmem:[%s1993 + $0xc9] sm:$0xff]
        %v2289 = vld [vmem:[%s1993 + $0xd9] sm:$0xff]
        %v2290 = vld [vmem:[%s1993 + $0xe1] sm:$0xff]
        %v2291 = vld [vmem:[%s1993 + $0xf1] sm:$0xff]
        %v2292 = vld [vmem:[%s1993 + $0xf9] sm:$0xff]
        %v2293 = vld [vmem:[%s1993 + $0x109] sm:$0xff]
        %v2294 = vld [vmem:[%s1993 + $0x111] sm:$0xff]
        %v2295 = vld [vmem:[%s1993 + $0x121] sm:$0xff]
        %v2296 = vld [vmem:[%s1993 + $0x129] sm:$0xff]
        %v2297 = vld [vmem:[%s1993 + $0x139] sm:$0xff]
        %v2298 = vld [vmem:[%s1993 + $0x141] sm:$0xff]
        %v2299 = vld [vmem:[%s1993 + $0x151] sm:$0xff]
        %v2300 = vld [vmem:[%s1993 + $0x159] sm:$0xff]
        %v2301 = vld [vmem:[%s1993 + $0x169] sm:$0xff]
        %v2302 = vld [vmem:[%s1993 + $0x171] sm:$0xff]
        %v2303 = vld [vmem:[%s6 + $0x15] sm:$0x7]
        %v2305 = vsel %vm458, %v2271, 0
        %v2308 = vsel %vm458, %v2272, 0
        %v2311 = vsel %vm458, %v2273, 0
        %v2314 = vsel %vm458, %v2274, 0
        %v2317 = vsel %vm458, %v2275, 0
        %v2320 = vsel %vm458, %v2276, 0
        %v2323 = vsel %vm458, %v2277, 0
        %v2326 = vsel %vm458, %v2278, 0
        %v2329 = vsel %vm458, %v2279, 0
        %v2332 = vsel %vm458, %v2280, 0
        %v2335 = vsel %vm458, %v2281, 0
        %v2338 = vsel %vm458, %v2282, 0
        %v2341 = vsel %vm458, %v2283, 0
        %v2344 = vsel %vm458, %v2284, 0
        %v2347 = vsel %vm458, %v2285, 0
        %v2350 = vsel %vm458, %v2286, 0
        %v2353 = vsel %vm458, %v2287, 0
        %v2356 = vsel %vm458, %v2288, 0
        %v2359 = vsel %vm458, %v2289, 0
        %v2362 = vsel %vm458, %v2290, 0
        %v2365 = vsel %vm458, %v2291, 0
        %v2368 = vsel %vm458, %v2292, 0
        %v2371 = vsel %vm458, %v2293, 0
        %v2374 = vsel %vm458, %v2294, 0
        %v2377 = vsel %vm458, %v2295, 0
        %v2380 = vsel %vm458, %v2296, 0
        %v2383 = vsel %vm458, %v2297, 0
        %v2386 = vsel %vm458, %v2298, 0
        %v2389 = vsel %vm458, %v2299, 0
        %v2392 = vsel %vm458, %v2300, 0
        %v2395 = vsel %vm458, %v2301, 0
        %v2398 = vsel %vm458, %v2302, 0
        %v2401 = vsel %vm555, %v2303, 0
        %2403 = vmatpush.msra.mxu0 0.0
        %2404 = vmatpush.msra.mxu0 0.0
        %2405 = vmatpush.msra.mxu0 0.0
        %2406 = vmatpush.msra.mxu0 0.0
        %2407 = vmatpush.msra.mxu0 0.0
        %2408 = vmatpush.msra.mxu0 0.0
        %2409 = vmatpush.msra.mxu0 0.0
        %2410 = vmatpush.msra.mxu0 0.0
        %2411 = vmatpush.msra.mxu0 0.0
        %2412 = vmatpush.msra.mxu0 0.0
        %2413 = vmatpush.msra.mxu0 0.0
        %2414 = vmatpush.msra.mxu0 0.0
        %2415 = vmatpush.msra.mxu0 0.0
        %2416 = vmatpush.msra.mxu0 0.0
        %2417 = vmatpush.msra.mxu0 0.0
        %2418 = vmatpush.msra.mxu0 %v2401
        %2419 = vmatmul.f32.gmra.mxu0 %v2305
        %v2420 = vpop.f32.mrf.mxu0
        %v2421 = vadd.f32 0.0, %v2420
        %2422 = vmatmul.f32.gmra.mxu0 %v2308
        %v2423 = vpop.f32.mrf.mxu0
        %v2424 = vadd.f32 0.0, %v2423
        %2425 = vmatmul.f32.gmra.mxu0 %v2311
        %v2426 = vpop.f32.mrf.mxu0
        %v2427 = vadd.f32 0.0, %v2426
        %2428 = vmatmul.f32.gmra.mxu0 %v2314
        %v2429 = vpop.f32.mrf.mxu0
        %v2430 = vadd.f32 0.0, %v2429
        %2431 = vmatmul.f32.gmra.mxu0 %v2317
        %v2432 = vpop.f32.mrf.mxu0
        %v2433 = vadd.f32 0.0, %v2432
        %2434 = vmatmul.f32.gmra.mxu0 %v2320
        %v2435 = vpop.f32.mrf.mxu0
        %v2436 = vadd.f32 0.0, %v2435
        %2437 = vmatmul.f32.gmra.mxu0 %v2323
        %v2438 = vpop.f32.mrf.mxu0
        %v2439 = vadd.f32 0.0, %v2438
        %2440 = vmatmul.f32.gmra.mxu0 %v2326
        %v2441 = vpop.f32.mrf.mxu0
        %v2442 = vadd.f32 0.0, %v2441
        %2443 = vmatmul.f32.gmra.mxu0 %v2329
        %v2444 = vpop.f32.mrf.mxu0
        %v2445 = vadd.f32 0.0, %v2444
        %2446 = vmatmul.f32.gmra.mxu0 %v2332
        %v2447 = vpop.f32.mrf.mxu0
        %v2448 = vadd.f32 0.0, %v2447
        %2449 = vmatmul.f32.gmra.mxu0 %v2335
        %v2450 = vpop.f32.mrf.mxu0
        %v2451 = vadd.f32 0.0, %v2450
        %2452 = vmatmul.f32.gmra.mxu0 %v2338
        %v2453 = vpop.f32.mrf.mxu0
        %v2454 = vadd.f32 0.0, %v2453
        %2455 = vmatmul.f32.gmra.mxu0 %v2341
        %v2456 = vpop.f32.mrf.mxu0
        %v2457 = vadd.f32 0.0, %v2456
        %2458 = vmatmul.f32.gmra.mxu0 %v2344
        %v2459 = vpop.f32.mrf.mxu0
        %v2460 = vadd.f32 0.0, %v2459
        %2461 = vmatmul.f32.gmra.mxu0 %v2347
        %v2462 = vpop.f32.mrf.mxu0
        %v2463 = vadd.f32 0.0, %v2462
        %2464 = vmatmul.f32.gmra.mxu0 %v2350
        %v2465 = vpop.f32.mrf.mxu0
        %v2466 = vadd.f32 0.0, %v2465
        %2467 = vmatmul.f32.gmra.mxu0 %v2353
        %v2468 = vpop.f32.mrf.mxu0
        %v2469 = vadd.f32 0.0, %v2468
        %2470 = vmatmul.f32.gmra.mxu0 %v2356
        %v2471 = vpop.f32.mrf.mxu0
        %v2472 = vadd.f32 0.0, %v2471
        %2473 = vmatmul.f32.gmra.mxu0 %v2359
        %v2474 = vpop.f32.mrf.mxu0
        %v2475 = vadd.f32 0.0, %v2474
        %2476 = vmatmul.f32.gmra.mxu0 %v2362
        %v2477 = vpop.f32.mrf.mxu0
        %v2478 = vadd.f32 0.0, %v2477
        %2479 = vmatmul.f32.gmra.mxu0 %v2365
        %v2480 = vpop.f32.mrf.mxu0
        %v2481 = vadd.f32 0.0, %v2480
        %2482 = vmatmul.f32.gmra.mxu0 %v2368
        %v2483 = vpop.f32.mrf.mxu0
        %v2484 = vadd.f32 0.0, %v2483
        %2485 = vmatmul.f32.gmra.mxu0 %v2371
        %v2486 = vpop.f32.mrf.mxu0
        %v2487 = vadd.f32 0.0, %v2486
        %2488 = vmatmul.f32.gmra.mxu0 %v2374
        %v2489 = vpop.f32.mrf.mxu0
        %v2490 = vadd.f32 0.0, %v2489
        %2491 = vmatmul.f32.gmra.mxu0 %v2377
        %v2492 = vpop.f32.mrf.mxu0
        %v2493 = vadd.f32 0.0, %v2492
        %2494 = vmatmul.f32.gmra.mxu0 %v2380
        %v2495 = vpop.f32.mrf.mxu0
        %v2496 = vadd.f32 0.0, %v2495
        %2497 = vmatmul.f32.gmra.mxu0 %v2383
        %v2498 = vpop.f32.mrf.mxu0
        %v2499 = vadd.f32 0.0, %v2498
        %2500 = vmatmul.f32.gmra.mxu0 %v2386
        %v2501 = vpop.f32.mrf.mxu0
        %v2502 = vadd.f32 0.0, %v2501
        %2503 = vmatmul.f32.gmra.mxu0 %v2389
        %v2504 = vpop.f32.mrf.mxu0
        %v2505 = vadd.f32 0.0, %v2504
        %2506 = vmatmul.f32.gmra.mxu0 %v2392
        %v2507 = vpop.f32.mrf.mxu0
        %v2508 = vadd.f32 0.0, %v2507
        %2509 = vmatmul.f32.gmra.mxu0 %v2395
        %v2510 = vpop.f32.mrf.mxu0
        %v2511 = vadd.f32 0.0, %v2510
        %2512 = vmatmul.f32.gmra.mxu0 %v2398
        %v2513 = vpop.f32.mrf.mxu0
        %v2514 = vadd.f32 0.0, %v2513
        %2515 = vdwg.mxu0
        %v2516 = vadd.f32 %v2239, %v2421
        %v2517 = vadd.f32 %v2240, %v2424
        %v2518 = vadd.f32 %v2241, %v2427
        %v2519 = vadd.f32 %v2242, %v2430
        %v2520 = vadd.f32 %v2243, %v2433
        %v2521 = vadd.f32 %v2244, %v2436
        %v2522 = vadd.f32 %v2245, %v2439
        %v2523 = vadd.f32 %v2246, %v2442
        %v2524 = vadd.f32 %v2247, %v2445
        %v2525 = vadd.f32 %v2248, %v2448
        %v2526 = vadd.f32 %v2249, %v2451
        %v2527 = vadd.f32 %v2250, %v2454
        %v2528 = vadd.f32 %v2251, %v2457
        %v2529 = vadd.f32 %v2252, %v2460
        %v2530 = vadd.f32 %v2253, %v2463
        %v2531 = vadd.f32 %v2254, %v2466
        %v2532 = vadd.f32 %v2255, %v2469
        %v2533 = vadd.f32 %v2256, %v2472
        %v2534 = vadd.f32 %v2257, %v2475
        %v2535 = vadd.f32 %v2258, %v2478
        %v2536 = vadd.f32 %v2259, %v2481
        %v2537 = vadd.f32 %v2260, %v2484
        %v2538 = vadd.f32 %v2261, %v2487
        %v2539 = vadd.f32 %v2262, %v2490
        %v2540 = vadd.f32 %v2263, %v2493
        %v2541 = vadd.f32 %v2264, %v2496
        %v2542 = vadd.f32 %v2265, %v2499
        %v2543 = vadd.f32 %v2266, %v2502
        %v2544 = vadd.f32 %v2267, %v2505
        %v2545 = vadd.f32 %v2268, %v2508
        %v2546 = vadd.f32 %v2269, %v2511
        %v2547 = vadd.f32 %v2270, %v2514
        %v2548 = vld [vmem:[%s1993 + $0x2] sm:$0xff]
        %v2549 = vld [vmem:[%s1993 + $0xa] sm:$0xff]
        %v2550 = vld [vmem:[%s1993 + $0x1a] sm:$0xff]
        %v2551 = vld [vmem:[%s1993 + $0x22] sm:$0xff]
        %v2552 = vld [vmem:[%s1993 + $0x32] sm:$0xff]
        %v2553 = vld [vmem:[%s1993 + $0x3a] sm:$0xff]
        %v2554 = vld [vmem:[%s1993 + $0x4a] sm:$0xff]
        %v2555 = vld [vmem:[%s1993 + $0x52] sm:$0xff]
        %v2556 = vld [vmem:[%s1993 + $0x62] sm:$0xff]
        %v2557 = vld [vmem:[%s1993 + $0x6a] sm:$0xff]
        %v2558 = vld [vmem:[%s1993 + $0x7a] sm:$0xff]
        %v2559 = vld [vmem:[%s1993 + $0x82] sm:$0xff]
        %v2560 = vld [vmem:[%s1993 + $0x92] sm:$0xff]
        %v2561 = vld [vmem:[%s1993 + $0x9a] sm:$0xff]
        %v2562 = vld [vmem:[%s1993 + $0xaa] sm:$0xff]
        %v2563 = vld [vmem:[%s1993 + $0xb2] sm:$0xff]
        %v2564 = vld [vmem:[%s1993 + $0xc2] sm:$0xff]
        %v2565 = vld [vmem:[%s1993 + $0xca] sm:$0xff]
        %v2566 = vld [vmem:[%s1993 + $0xda] sm:$0xff]
        %v2567 = vld [vmem:[%s1993 + $0xe2] sm:$0xff]
        %v2568 = vld [vmem:[%s1993 + $0xf2] sm:$0xff]
        %v2569 = vld [vmem:[%s1993 + $0xfa] sm:$0xff]
        %v2570 = vld [vmem:[%s1993 + $0x10a] sm:$0xff]
        %v2571 = vld [vmem:[%s1993 + $0x112] sm:$0xff]
        %v2572 = vld [vmem:[%s1993 + $0x122] sm:$0xff]
        %v2573 = vld [vmem:[%s1993 + $0x12a] sm:$0xff]
        %v2574 = vld [vmem:[%s1993 + $0x13a] sm:$0xff]
        %v2575 = vld [vmem:[%s1993 + $0x142] sm:$0xff]
        %v2576 = vld [vmem:[%s1993 + $0x152] sm:$0xff]
        %v2577 = vld [vmem:[%s1993 + $0x15a] sm:$0xff]
        %v2578 = vld [vmem:[%s1993 + $0x16a] sm:$0xff]
        %v2579 = vld [vmem:[%s1993 + $0x172] sm:$0xff]
        %v2580 = vld [vmem:[%s6 + $0x18] sm:$0x7]
        %v2582 = vsel %vm458, %v2548, 0
        %v2585 = vsel %vm458, %v2549, 0
        %v2588 = vsel %vm458, %v2550, 0
        %v2591 = vsel %vm458, %v2551, 0
        %v2594 = vsel %vm458, %v2552, 0
        %v2597 = vsel %vm458, %v2553, 0
        %v2600 = vsel %vm458, %v2554, 0
        %v2603 = vsel %vm458, %v2555, 0
        %v2606 = vsel %vm458, %v2556, 0
        %v2609 = vsel %vm458, %v2557, 0
        %v2612 = vsel %vm458, %v2558, 0
        %v2615 = vsel %vm458, %v2559, 0
        %v2618 = vsel %vm458, %v2560, 0
        %v2621 = vsel %vm458, %v2561, 0
        %v2624 = vsel %vm458, %v2562, 0
        %v2627 = vsel %vm458, %v2563, 0
        %v2630 = vsel %vm458, %v2564, 0
        %v2633 = vsel %vm458, %v2565, 0
        %v2636 = vsel %vm458, %v2566, 0
        %v2639 = vsel %vm458, %v2567, 0
        %v2642 = vsel %vm458, %v2568, 0
        %v2645 = vsel %vm458, %v2569, 0
        %v2648 = vsel %vm458, %v2570, 0
        %v2651 = vsel %vm458, %v2571, 0
        %v2654 = vsel %vm458, %v2572, 0
        %v2657 = vsel %vm458, %v2573, 0
        %v2660 = vsel %vm458, %v2574, 0
        %v2663 = vsel %vm458, %v2575, 0
        %v2666 = vsel %vm458, %v2576, 0
        %v2669 = vsel %vm458, %v2577, 0
        %v2672 = vsel %vm458, %v2578, 0
        %v2675 = vsel %vm458, %v2579, 0
        %v2678 = vsel %vm555, %v2580, 0
        %2680 = vmatpush.msra.mxu0 0.0
        %2681 = vmatpush.msra.mxu0 0.0
        %2682 = vmatpush.msra.mxu0 0.0
        %2683 = vmatpush.msra.mxu0 0.0
        %2684 = vmatpush.msra.mxu0 0.0
        %2685 = vmatpush.msra.mxu0 0.0
        %2686 = vmatpush.msra.mxu0 0.0
        %2687 = vmatpush.msra.mxu0 0.0
        %2688 = vmatpush.msra.mxu0 0.0
        %2689 = vmatpush.msra.mxu0 0.0
        %2690 = vmatpush.msra.mxu0 0.0
        %2691 = vmatpush.msra.mxu0 0.0
        %2692 = vmatpush.msra.mxu0 0.0
        %2693 = vmatpush.msra.mxu0 0.0
        %2694 = vmatpush.msra.mxu0 0.0
        %2695 = vmatpush.msra.mxu0 %v2678
        %2696 = vmatmul.f32.gmra.mxu0 %v2582
        %v2697 = vpop.f32.mrf.mxu0
        %v2698 = vadd.f32 0.0, %v2697
        %2699 = vmatmul.f32.gmra.mxu0 %v2585
        %v2700 = vpop.f32.mrf.mxu0
        %v2701 = vadd.f32 0.0, %v2700
        %2702 = vmatmul.f32.gmra.mxu0 %v2588
        %v2703 = vpop.f32.mrf.mxu0
        %v2704 = vadd.f32 0.0, %v2703
        %2705 = vmatmul.f32.gmra.mxu0 %v2591
        %v2706 = vpop.f32.mrf.mxu0
        %v2707 = vadd.f32 0.0, %v2706
        %2708 = vmatmul.f32.gmra.mxu0 %v2594
        %v2709 = vpop.f32.mrf.mxu0
        %v2710 = vadd.f32 0.0, %v2709
        %2711 = vmatmul.f32.gmra.mxu0 %v2597
        %v2712 = vpop.f32.mrf.mxu0
        %v2713 = vadd.f32 0.0, %v2712
        %2714 = vmatmul.f32.gmra.mxu0 %v2600
        %v2715 = vpop.f32.mrf.mxu0
        %v2716 = vadd.f32 0.0, %v2715
        %2717 = vmatmul.f32.gmra.mxu0 %v2603
        %v2718 = vpop.f32.mrf.mxu0
        %v2719 = vadd.f32 0.0, %v2718
        %2720 = vmatmul.f32.gmra.mxu0 %v2606
        %v2721 = vpop.f32.mrf.mxu0
        %v2722 = vadd.f32 0.0, %v2721
        %2723 = vmatmul.f32.gmra.mxu0 %v2609
        %v2724 = vpop.f32.mrf.mxu0
        %v2725 = vadd.f32 0.0, %v2724
        %2726 = vmatmul.f32.gmra.mxu0 %v2612
        %v2727 = vpop.f32.mrf.mxu0
        %v2728 = vadd.f32 0.0, %v2727
        %2729 = vmatmul.f32.gmra.mxu0 %v2615
        %v2730 = vpop.f32.mrf.mxu0
        %v2731 = vadd.f32 0.0, %v2730
        %2732 = vmatmul.f32.gmra.mxu0 %v2618
        %v2733 = vpop.f32.mrf.mxu0
        %v2734 = vadd.f32 0.0, %v2733
        %2735 = vmatmul.f32.gmra.mxu0 %v2621
        %v2736 = vpop.f32.mrf.mxu0
        %v2737 = vadd.f32 0.0, %v2736
        %2738 = vmatmul.f32.gmra.mxu0 %v2624
        %v2739 = vpop.f32.mrf.mxu0
        %v2740 = vadd.f32 0.0, %v2739
        %2741 = vmatmul.f32.gmra.mxu0 %v2627
        %v2742 = vpop.f32.mrf.mxu0
        %v2743 = vadd.f32 0.0, %v2742
        %2744 = vmatmul.f32.gmra.mxu0 %v2630
        %v2745 = vpop.f32.mrf.mxu0
        %v2746 = vadd.f32 0.0, %v2745
        %2747 = vmatmul.f32.gmra.mxu0 %v2633
        %v2748 = vpop.f32.mrf.mxu0
        %v2749 = vadd.f32 0.0, %v2748
        %2750 = vmatmul.f32.gmra.mxu0 %v2636
        %v2751 = vpop.f32.mrf.mxu0
        %v2752 = vadd.f32 0.0, %v2751
        %2753 = vmatmul.f32.gmra.mxu0 %v2639
        %v2754 = vpop.f32.mrf.mxu0
        %v2755 = vadd.f32 0.0, %v2754
        %2756 = vmatmul.f32.gmra.mxu0 %v2642
        %v2757 = vpop.f32.mrf.mxu0
        %v2758 = vadd.f32 0.0, %v2757
        %2759 = vmatmul.f32.gmra.mxu0 %v2645
        %v2760 = vpop.f32.mrf.mxu0
        %v2761 = vadd.f32 0.0, %v2760
        %2762 = vmatmul.f32.gmra.mxu0 %v2648
        %v2763 = vpop.f32.mrf.mxu0
        %v2764 = vadd.f32 0.0, %v2763
        %2765 = vmatmul.f32.gmra.mxu0 %v2651
        %v2766 = vpop.f32.mrf.mxu0
        %v2767 = vadd.f32 0.0, %v2766
        %2768 = vmatmul.f32.gmra.mxu0 %v2654
        %v2769 = vpop.f32.mrf.mxu0
        %v2770 = vadd.f32 0.0, %v2769
        %2771 = vmatmul.f32.gmra.mxu0 %v2657
        %v2772 = vpop.f32.mrf.mxu0
        %v2773 = vadd.f32 0.0, %v2772
        %2774 = vmatmul.f32.gmra.mxu0 %v2660
        %v2775 = vpop.f32.mrf.mxu0
        %v2776 = vadd.f32 0.0, %v2775
        %2777 = vmatmul.f32.gmra.mxu0 %v2663
        %v2778 = vpop.f32.mrf.mxu0
        %v2779 = vadd.f32 0.0, %v2778
        %2780 = vmatmul.f32.gmra.mxu0 %v2666
        %v2781 = vpop.f32.mrf.mxu0
        %v2782 = vadd.f32 0.0, %v2781
        %2783 = vmatmul.f32.gmra.mxu0 %v2669
        %v2784 = vpop.f32.mrf.mxu0
        %v2785 = vadd.f32 0.0, %v2784
        %2786 = vmatmul.f32.gmra.mxu0 %v2672
        %v2787 = vpop.f32.mrf.mxu0
        %v2788 = vadd.f32 0.0, %v2787
        %2789 = vmatmul.f32.gmra.mxu0 %v2675
        %v2790 = vpop.f32.mrf.mxu0
        %v2791 = vadd.f32 0.0, %v2790
        %2792 = vdwg.mxu0
        %v2793 = vadd.f32 %v2516, %v2698
        %v2794 = vadd.f32 %v2517, %v2701
        %v2795 = vadd.f32 %v2518, %v2704
        %v2796 = vadd.f32 %v2519, %v2707
        %v2797 = vadd.f32 %v2520, %v2710
        %v2798 = vadd.f32 %v2521, %v2713
        %v2799 = vadd.f32 %v2522, %v2716
        %v2800 = vadd.f32 %v2523, %v2719
        %v2801 = vadd.f32 %v2524, %v2722
        %v2802 = vadd.f32 %v2525, %v2725
        %v2803 = vadd.f32 %v2526, %v2728
        %v2804 = vadd.f32 %v2527, %v2731
        %v2805 = vadd.f32 %v2528, %v2734
        %v2806 = vadd.f32 %v2529, %v2737
        %v2807 = vadd.f32 %v2530, %v2740
        %v2808 = vadd.f32 %v2531, %v2743
        %v2809 = vadd.f32 %v2532, %v2746
        %v2810 = vadd.f32 %v2533, %v2749
        %v2811 = vadd.f32 %v2534, %v2752
        %v2812 = vadd.f32 %v2535, %v2755
        %v2813 = vadd.f32 %v2536, %v2758
        %v2814 = vadd.f32 %v2537, %v2761
        %v2815 = vadd.f32 %v2538, %v2764
        %v2816 = vadd.f32 %v2539, %v2767
        %v2817 = vadd.f32 %v2540, %v2770
        %v2818 = vadd.f32 %v2541, %v2773
        %v2819 = vadd.f32 %v2542, %v2776
        %v2820 = vadd.f32 %v2543, %v2779
        %v2821 = vadd.f32 %v2544, %v2782
        %v2822 = vadd.f32 %v2545, %v2785
        %v2823 = vadd.f32 %v2546, %v2788
        %v2824 = vadd.f32 %v2547, %v2791
        %s2825 = sld [smem:[#allocation3 + %s22]]
        %v2826 = vstv %s2825
        %v2827 = vmul.f32 %v2826, %v2793
        %v2828 = vmul.f32 %v2826, %v2794
        %v2829 = vmul.f32 %v2826, %v2795
        %v2830 = vmul.f32 %v2826, %v2796
        %v2831 = vmul.f32 %v2826, %v2797
        %v2832 = vmul.f32 %v2826, %v2798
        %v2833 = vmul.f32 %v2826, %v2799
        %v2834 = vmul.f32 %v2826, %v2800
        %v2835 = vmul.f32 %v2826, %v2801
        %v2836 = vmul.f32 %v2826, %v2802
        %v2837 = vmul.f32 %v2826, %v2803
        %v2838 = vmul.f32 %v2826, %v2804
        %v2839 = vmul.f32 %v2826, %v2805
        %v2840 = vmul.f32 %v2826, %v2806
        %v2841 = vmul.f32 %v2826, %v2807
        %v2842 = vmul.f32 %v2826, %v2808
        %v2843 = vmul.f32 %v2826, %v2809
        %v2844 = vmul.f32 %v2826, %v2810
        %v2845 = vmul.f32 %v2826, %v2811
        %v2846 = vmul.f32 %v2826, %v2812
        %v2847 = vmul.f32 %v2826, %v2813
        %v2848 = vmul.f32 %v2826, %v2814
        %v2849 = vmul.f32 %v2826, %v2815
        %v2850 = vmul.f32 %v2826, %v2816
        %v2851 = vmul.f32 %v2826, %v2817
        %v2852 = vmul.f32 %v2826, %v2818
        %v2853 = vmul.f32 %v2826, %v2819
        %v2854 = vmul.f32 %v2826, %v2820
        %v2855 = vmul.f32 %v2826, %v2821
        %v2856 = vmul.f32 %v2826, %v2822
        %v2857 = vmul.f32 %v2826, %v2823
        %v2858 = vmul.f32 %v2826, %v2824
        %s2859 = scalar_lea.vmem %s5, %s22
        %v2860 = vld [vmem:[%s2859] sm:$0x1]
        %v2861 = vperm.slane %v2860, 0
        %v2862 = vadd.f32 %v2827, %v2861
        %v2863 = vadd.f32 %v2828, %v2861
        %v2864 = vadd.f32 %v2829, %v2861
        %v2865 = vadd.f32 %v2830, %v2861
        %v2866 = vadd.f32 %v2831, %v2861
        %v2867 = vadd.f32 %v2832, %v2861
        %v2868 = vadd.f32 %v2833, %v2861
        %v2869 = vadd.f32 %v2834, %v2861
        %v2870 = vadd.f32 %v2835, %v2861
        %v2871 = vadd.f32 %v2836, %v2861
        %v2872 = vadd.f32 %v2837, %v2861
        %v2873 = vadd.f32 %v2838, %v2861
        %v2874 = vadd.f32 %v2839, %v2861
        %v2875 = vadd.f32 %v2840, %v2861
        %v2876 = vadd.f32 %v2841, %v2861
        %v2877 = vadd.f32 %v2842, %v2861
        %v2878 = vadd.f32 %v2843, %v2861
        %v2879 = vadd.f32 %v2844, %v2861
        %v2880 = vadd.f32 %v2845, %v2861
        %v2881 = vadd.f32 %v2846, %v2861
        %v2882 = vadd.f32 %v2847, %v2861
        %v2883 = vadd.f32 %v2848, %v2861
        %v2884 = vadd.f32 %v2849, %v2861
        %v2885 = vadd.f32 %v2850, %v2861
        %v2886 = vadd.f32 %v2851, %v2861
        %v2887 = vadd.f32 %v2852, %v2861
        %v2888 = vadd.f32 %v2853, %v2861
        %v2889 = vadd.f32 %v2854, %v2861
        %v2890 = vadd.f32 %v2855, %v2861
        %v2891 = vadd.f32 %v2856, %v2861
        %v2892 = vadd.f32 %v2857, %v2861
        %v2893 = vadd.f32 %v2858, %v2861
        %v2894 = vxor.u32 %v2862, 2147483648
        %v2895 = vxor.u32 %v2863, 2147483648
        %v2896 = vxor.u32 %v2864, 2147483648
        %v2897 = vxor.u32 %v2865, 2147483648
        %v2898 = vxor.u32 %v2866, 2147483648
        %v2899 = vxor.u32 %v2867, 2147483648
        %v2900 = vxor.u32 %v2868, 2147483648
        %v2901 = vxor.u32 %v2869, 2147483648
        %v2902 = vxor.u32 %v2870, 2147483648
        %v2903 = vxor.u32 %v2871, 2147483648
        %v2904 = vxor.u32 %v2872, 2147483648
        %v2905 = vxor.u32 %v2873, 2147483648
        %v2906 = vxor.u32 %v2874, 2147483648
        %v2907 = vxor.u32 %v2875, 2147483648
        %v2908 = vxor.u32 %v2876, 2147483648
        %v2909 = vxor.u32 %v2877, 2147483648
        %v2910 = vxor.u32 %v2878, 2147483648
        %v2911 = vxor.u32 %v2879, 2147483648
        %v2912 = vxor.u32 %v2880, 2147483648
        %v2913 = vxor.u32 %v2881, 2147483648
        %v2914 = vxor.u32 %v2882, 2147483648
        %v2915 = vxor.u32 %v2883, 2147483648
        %v2916 = vxor.u32 %v2884, 2147483648
        %v2917 = vxor.u32 %v2885, 2147483648
        %v2918 = vxor.u32 %v2886, 2147483648
        %v2919 = vxor.u32 %v2887, 2147483648
        %v2920 = vxor.u32 %v2888, 2147483648
        %v2921 = vxor.u32 %v2889, 2147483648
        %v2922 = vxor.u32 %v2890, 2147483648
        %v2923 = vxor.u32 %v2891, 2147483648
        %v2924 = vxor.u32 %v2892, 2147483648
        %v2925 = vxor.u32 %v2893, 2147483648
        %v2926 = vmul.f32 %v2894, 1.442695
        %v2927 = vpow.pop %v2926
        %v2928 = vmul.f32 %v2895, 1.442695
        %v2929 = vpow.pop %v2928
        %v2930 = vmul.f32 %v2896, 1.442695
        %v2931 = vpow.pop %v2930
        %v2932 = vmul.f32 %v2897, 1.442695
        %v2933 = vpow.pop %v2932
        %v2934 = vmul.f32 %v2898, 1.442695
        %v2935 = vpow.pop %v2934
        %v2936 = vmul.f32 %v2899, 1.442695
        %v2937 = vpow.pop %v2936
        %v2938 = vmul.f32 %v2900, 1.442695
        %v2939 = vpow.pop %v2938
        %v2940 = vmul.f32 %v2901, 1.442695
        %v2941 = vpow.pop %v2940
        %v2942 = vmul.f32 %v2902, 1.442695
        %v2943 = vpow.pop %v2942
        %v2944 = vmul.f32 %v2903, 1.442695
        %v2945 = vpow.pop %v2944
        %v2946 = vmul.f32 %v2904, 1.442695
        %v2947 = vpow.pop %v2946
        %v2948 = vmul.f32 %v2905, 1.442695
        %v2949 = vpow.pop %v2948
        %v2950 = vmul.f32 %v2906, 1.442695
        %v2951 = vpow.pop %v2950
        %v2952 = vmul.f32 %v2907, 1.442695
        %v2953 = vpow.pop %v2952
        %v2954 = vmul.f32 %v2908, 1.442695
        %v2955 = vpow.pop %v2954
        %v2956 = vmul.f32 %v2909, 1.442695
        %v2957 = vpow.pop %v2956
        %v2958 = vmul.f32 %v2910, 1.442695
        %v2959 = vpow.pop %v2958
        %v2960 = vmul.f32 %v2911, 1.442695
        %v2961 = vpow.pop %v2960
        %v2962 = vmul.f32 %v2912, 1.442695
        %v2963 = vpow.pop %v2962
        %v2964 = vmul.f32 %v2913, 1.442695
        %v2965 = vpow.pop %v2964
        %v2966 = vmul.f32 %v2914, 1.442695
        %v2967 = vpow.pop %v2966
        %v2968 = vmul.f32 %v2915, 1.442695
        %v2969 = vpow.pop %v2968
        %v2970 = vmul.f32 %v2916, 1.442695
        %v2971 = vpow.pop %v2970
        %v2972 = vmul.f32 %v2917, 1.442695
        %v2973 = vpow.pop %v2972
        %v2974 = vmul.f32 %v2918, 1.442695
        %v2975 = vpow.pop %v2974
        %v2976 = vmul.f32 %v2919, 1.442695
        %v2977 = vpow.pop %v2976
        %v2978 = vmul.f32 %v2920, 1.442695
        %v2979 = vpow.pop %v2978
        %v2980 = vmul.f32 %v2921, 1.442695
        %v2981 = vpow.pop %v2980
        %v2982 = vmul.f32 %v2922, 1.442695
        %v2983 = vpow.pop %v2982
        %v2984 = vmul.f32 %v2923, 1.442695
        %v2985 = vpow.pop %v2984
        %v2986 = vmul.f32 %v2924, 1.442695
        %v2987 = vpow.pop %v2986
        %v2988 = vmul.f32 %v2925, 1.442695
        %v2989 = vpow.pop %v2988
        %v2990 = vadd.f32 %v2927, 1.0
        %v2991 = vadd.f32 %v2929, 1.0
        %v2992 = vadd.f32 %v2931, 1.0
        %v2993 = vadd.f32 %v2933, 1.0
        %v2994 = vadd.f32 %v2935, 1.0
        %v2995 = vadd.f32 %v2937, 1.0
        %v2996 = vadd.f32 %v2939, 1.0
        %v2997 = vadd.f32 %v2941, 1.0
        %v2998 = vadd.f32 %v2943, 1.0
        %v2999 = vadd.f32 %v2945, 1.0
        %v3000 = vadd.f32 %v2947, 1.0
        %v3001 = vadd.f32 %v2949, 1.0
        %v3002 = vadd.f32 %v2951, 1.0
        %v3003 = vadd.f32 %v2953, 1.0
        %v3004 = vadd.f32 %v2955, 1.0
        %v3005 = vadd.f32 %v2957, 1.0
        %v3006 = vadd.f32 %v2959, 1.0
        %v3007 = vadd.f32 %v2961, 1.0
        %v3008 = vadd.f32 %v2963, 1.0
        %v3009 = vadd.f32 %v2965, 1.0
        %v3010 = vadd.f32 %v2967, 1.0
        %v3011 = vadd.f32 %v2969, 1.0
        %v3012 = vadd.f32 %v2971, 1.0
        %v3013 = vadd.f32 %v2973, 1.0
        %v3014 = vadd.f32 %v2975, 1.0
        %v3015 = vadd.f32 %v2977, 1.0
        %v3016 = vadd.f32 %v2979, 1.0
        %v3017 = vadd.f32 %v2981, 1.0
        %v3018 = vadd.f32 %v2983, 1.0
        %v3019 = vadd.f32 %v2985, 1.0
        %v3020 = vadd.f32 %v2987, 1.0
        %v3021 = vadd.f32 %v2989, 1.0
        %v3022 = vrcp.pop %v2990
        %v3023 = vmul.f32 %v2990, %v3022
        %v3024 = vsub.f32 1.0, %v3023
        %v3025 = vmul.f32 %v3022, %v3024
        %v3026 = vadd.f32 %v3022, %v3025
        %vm3027 = vweird.f32 %v2990
        %vm3028 = vweird.f32 %v3022
        %vm3029 = vmor %vm3027, %vm3028
        %v3030 = vsel %vm3029, %v3022, %v3026
        %v3031 = vand.u32 2147483647, %v2990
        %vm3032 = vcmp.eq.f32.partialorder %v3031, 8.507059e+37
        %v3033 = vand.u32 %v2990, 2147483648
        %v3034 = vor.u32 1.1754944e-38, %v3033
        %v3035 = vsel %vm3032, %v3034, %v3030
        %v3036 = vmul.f32 1.0, %v3035
        %v3037 = vrcp.pop %v2991
        %v3038 = vmul.f32 %v2991, %v3037
        %v3039 = vsub.f32 1.0, %v3038
        %v3040 = vmul.f32 %v3037, %v3039
        %v3041 = vadd.f32 %v3037, %v3040
        %vm3042 = vweird.f32 %v2991
        %vm3043 = vweird.f32 %v3037
        %vm3044 = vmor %vm3042, %vm3043
        %v3045 = vsel %vm3044, %v3037, %v3041
        %v3046 = vand.u32 2147483647, %v2991
        %vm3047 = vcmp.eq.f32.partialorder %v3046, 8.507059e+37
        %v3048 = vand.u32 %v2991, 2147483648
        %v3049 = vor.u32 1.1754944e-38, %v3048
        %v3050 = vsel %vm3047, %v3049, %v3045
        %v3051 = vmul.f32 1.0, %v3050
        %v3052 = vrcp.pop %v2992
        %v3053 = vmul.f32 %v2992, %v3052
        %v3054 = vsub.f32 1.0, %v3053
        %v3055 = vmul.f32 %v3052, %v3054
        %v3056 = vadd.f32 %v3052, %v3055
        %vm3057 = vweird.f32 %v2992
        %vm3058 = vweird.f32 %v3052
        %vm3059 = vmor %vm3057, %vm3058
        %v3060 = vsel %vm3059, %v3052, %v3056
        %v3061 = vand.u32 2147483647, %v2992
        %vm3062 = vcmp.eq.f32.partialorder %v3061, 8.507059e+37
        %v3063 = vand.u32 %v2992, 2147483648
        %v3064 = vor.u32 1.1754944e-38, %v3063
        %v3065 = vsel %vm3062, %v3064, %v3060
        %v3066 = vmul.f32 1.0, %v3065
        %v3067 = vrcp.pop %v2993
        %v3068 = vmul.f32 %v2993, %v3067
        %v3069 = vsub.f32 1.0, %v3068
        %v3070 = vmul.f32 %v3067, %v3069
        %v3071 = vadd.f32 %v3067, %v3070
        %vm3072 = vweird.f32 %v2993
        %vm3073 = vweird.f32 %v3067
        %vm3074 = vmor %vm3072, %vm3073
        %v3075 = vsel %vm3074, %v3067, %v3071
        %v3076 = vand.u32 2147483647, %v2993
        %vm3077 = vcmp.eq.f32.partialorder %v3076, 8.507059e+37
        %v3078 = vand.u32 %v2993, 2147483648
        %v3079 = vor.u32 1.1754944e-38, %v3078
        %v3080 = vsel %vm3077, %v3079, %v3075
        %v3081 = vmul.f32 1.0, %v3080
        %v3082 = vrcp.pop %v2994
        %v3083 = vmul.f32 %v2994, %v3082
        %v3084 = vsub.f32 1.0, %v3083
        %v3085 = vmul.f32 %v3082, %v3084
        %v3086 = vadd.f32 %v3082, %v3085
        %vm3087 = vweird.f32 %v2994
        %vm3088 = vweird.f32 %v3082
        %vm3089 = vmor %vm3087, %vm3088
        %v3090 = vsel %vm3089, %v3082, %v3086
        %v3091 = vand.u32 2147483647, %v2994
        %vm3092 = vcmp.eq.f32.partialorder %v3091, 8.507059e+37
        %v3093 = vand.u32 %v2994, 2147483648
        %v3094 = vor.u32 1.1754944e-38, %v3093
        %v3095 = vsel %vm3092, %v3094, %v3090
        %v3096 = vmul.f32 1.0, %v3095
        %v3097 = vrcp.pop %v2995
        %v3098 = vmul.f32 %v2995, %v3097
        %v3099 = vsub.f32 1.0, %v3098
        %v3100 = vmul.f32 %v3097, %v3099
        %v3101 = vadd.f32 %v3097, %v3100
        %vm3102 = vweird.f32 %v2995
        %vm3103 = vweird.f32 %v3097
        %vm3104 = vmor %vm3102, %vm3103
        %v3105 = vsel %vm3104, %v3097, %v3101
        %v3106 = vand.u32 2147483647, %v2995
        %vm3107 = vcmp.eq.f32.partialorder %v3106, 8.507059e+37
        %v3108 = vand.u32 %v2995, 2147483648
        %v3109 = vor.u32 1.1754944e-38, %v3108
        %v3110 = vsel %vm3107, %v3109, %v3105
        %v3111 = vmul.f32 1.0, %v3110
        %v3112 = vrcp.pop %v2996
        %v3113 = vmul.f32 %v2996, %v3112
        %v3114 = vsub.f32 1.0, %v3113
        %v3115 = vmul.f32 %v3112, %v3114
        %v3116 = vadd.f32 %v3112, %v3115
        %vm3117 = vweird.f32 %v2996
        %vm3118 = vweird.f32 %v3112
        %vm3119 = vmor %vm3117, %vm3118
        %v3120 = vsel %vm3119, %v3112, %v3116
        %v3121 = vand.u32 2147483647, %v2996
        %vm3122 = vcmp.eq.f32.partialorder %v3121, 8.507059e+37
        %v3123 = vand.u32 %v2996, 2147483648
        %v3124 = vor.u32 1.1754944e-38, %v3123
        %v3125 = vsel %vm3122, %v3124, %v3120
        %v3126 = vmul.f32 1.0, %v3125
        %v3127 = vrcp.pop %v2997
        %v3128 = vmul.f32 %v2997, %v3127
        %v3129 = vsub.f32 1.0, %v3128
        %v3130 = vmul.f32 %v3127, %v3129
        %v3131 = vadd.f32 %v3127, %v3130
        %vm3132 = vweird.f32 %v2997
        %vm3133 = vweird.f32 %v3127
        %vm3134 = vmor %vm3132, %vm3133
        %v3135 = vsel %vm3134, %v3127, %v3131
        %v3136 = vand.u32 2147483647, %v2997
        %vm3137 = vcmp.eq.f32.partialorder %v3136, 8.507059e+37
        %v3138 = vand.u32 %v2997, 2147483648
        %v3139 = vor.u32 1.1754944e-38, %v3138
        %v3140 = vsel %vm3137, %v3139, %v3135
        %v3141 = vmul.f32 1.0, %v3140
        %v3142 = vrcp.pop %v2998
        %v3143 = vmul.f32 %v2998, %v3142
        %v3144 = vsub.f32 1.0, %v3143
        %v3145 = vmul.f32 %v3142, %v3144
        %v3146 = vadd.f32 %v3142, %v3145
        %vm3147 = vweird.f32 %v2998
        %vm3148 = vweird.f32 %v3142
        %vm3149 = vmor %vm3147, %vm3148
        %v3150 = vsel %vm3149, %v3142, %v3146
        %v3151 = vand.u32 2147483647, %v2998
        %vm3152 = vcmp.eq.f32.partialorder %v3151, 8.507059e+37
        %v3153 = vand.u32 %v2998, 2147483648
        %v3154 = vor.u32 1.1754944e-38, %v3153
        %v3155 = vsel %vm3152, %v3154, %v3150
        %v3156 = vmul.f32 1.0, %v3155
        %v3157 = vrcp.pop %v2999
        %v3158 = vmul.f32 %v2999, %v3157
        %v3159 = vsub.f32 1.0, %v3158
        %v3160 = vmul.f32 %v3157, %v3159
        %v3161 = vadd.f32 %v3157, %v3160
        %vm3162 = vweird.f32 %v2999
        %vm3163 = vweird.f32 %v3157
        %vm3164 = vmor %vm3162, %vm3163
        %v3165 = vsel %vm3164, %v3157, %v3161
        %v3166 = vand.u32 2147483647, %v2999
        %vm3167 = vcmp.eq.f32.partialorder %v3166, 8.507059e+37
        %v3168 = vand.u32 %v2999, 2147483648
        %v3169 = vor.u32 1.1754944e-38, %v3168
        %v3170 = vsel %vm3167, %v3169, %v3165
        %v3171 = vmul.f32 1.0, %v3170
        %v3172 = vrcp.pop %v3000
        %v3173 = vmul.f32 %v3000, %v3172
        %v3174 = vsub.f32 1.0, %v3173
        %v3175 = vmul.f32 %v3172, %v3174
        %v3176 = vadd.f32 %v3172, %v3175
        %vm3177 = vweird.f32 %v3000
        %vm3178 = vweird.f32 %v3172
        %vm3179 = vmor %vm3177, %vm3178
        %v3180 = vsel %vm3179, %v3172, %v3176
        %v3181 = vand.u32 2147483647, %v3000
        %vm3182 = vcmp.eq.f32.partialorder %v3181, 8.507059e+37
        %v3183 = vand.u32 %v3000, 2147483648
        %v3184 = vor.u32 1.1754944e-38, %v3183
        %v3185 = vsel %vm3182, %v3184, %v3180
        %v3186 = vmul.f32 1.0, %v3185
        %v3187 = vrcp.pop %v3001
        %v3188 = vmul.f32 %v3001, %v3187
        %v3189 = vsub.f32 1.0, %v3188
        %v3190 = vmul.f32 %v3187, %v3189
        %v3191 = vadd.f32 %v3187, %v3190
        %vm3192 = vweird.f32 %v3001
        %vm3193 = vweird.f32 %v3187
        %vm3194 = vmor %vm3192, %vm3193
        %v3195 = vsel %vm3194, %v3187, %v3191
        %v3196 = vand.u32 2147483647, %v3001
        %vm3197 = vcmp.eq.f32.partialorder %v3196, 8.507059e+37
        %v3198 = vand.u32 %v3001, 2147483648
        %v3199 = vor.u32 1.1754944e-38, %v3198
        %v3200 = vsel %vm3197, %v3199, %v3195
        %v3201 = vmul.f32 1.0, %v3200
        %v3202 = vrcp.pop %v3002
        %v3203 = vmul.f32 %v3002, %v3202
        %v3204 = vsub.f32 1.0, %v3203
        %v3205 = vmul.f32 %v3202, %v3204
        %v3206 = vadd.f32 %v3202, %v3205
        %vm3207 = vweird.f32 %v3002
        %vm3208 = vweird.f32 %v3202
        %vm3209 = vmor %vm3207, %vm3208
        %v3210 = vsel %vm3209, %v3202, %v3206
        %v3211 = vand.u32 2147483647, %v3002
        %vm3212 = vcmp.eq.f32.partialorder %v3211, 8.507059e+37
        %v3213 = vand.u32 %v3002, 2147483648
        %v3214 = vor.u32 1.1754944e-38, %v3213
        %v3215 = vsel %vm3212, %v3214, %v3210
        %v3216 = vmul.f32 1.0, %v3215
        %v3217 = vrcp.pop %v3003
        %v3218 = vmul.f32 %v3003, %v3217
        %v3219 = vsub.f32 1.0, %v3218
        %v3220 = vmul.f32 %v3217, %v3219
        %v3221 = vadd.f32 %v3217, %v3220
        %vm3222 = vweird.f32 %v3003
        %vm3223 = vweird.f32 %v3217
        %vm3224 = vmor %vm3222, %vm3223
        %v3225 = vsel %vm3224, %v3217, %v3221
        %v3226 = vand.u32 2147483647, %v3003
        %vm3227 = vcmp.eq.f32.partialorder %v3226, 8.507059e+37
        %v3228 = vand.u32 %v3003, 2147483648
        %v3229 = vor.u32 1.1754944e-38, %v3228
        %v3230 = vsel %vm3227, %v3229, %v3225
        %v3231 = vmul.f32 1.0, %v3230
        %v3232 = vrcp.pop %v3004
        %v3233 = vmul.f32 %v3004, %v3232
        %v3234 = vsub.f32 1.0, %v3233
        %v3235 = vmul.f32 %v3232, %v3234
        %v3236 = vadd.f32 %v3232, %v3235
        %vm3237 = vweird.f32 %v3004
        %vm3238 = vweird.f32 %v3232
        %vm3239 = vmor %vm3237, %vm3238
        %v3240 = vsel %vm3239, %v3232, %v3236
        %v3241 = vand.u32 2147483647, %v3004
        %vm3242 = vcmp.eq.f32.partialorder %v3241, 8.507059e+37
        %v3243 = vand.u32 %v3004, 2147483648
        %v3244 = vor.u32 1.1754944e-38, %v3243
        %v3245 = vsel %vm3242, %v3244, %v3240
        %v3246 = vmul.f32 1.0, %v3245
        %v3247 = vrcp.pop %v3005
        %v3248 = vmul.f32 %v3005, %v3247
        %v3249 = vsub.f32 1.0, %v3248
        %v3250 = vmul.f32 %v3247, %v3249
        %v3251 = vadd.f32 %v3247, %v3250
        %vm3252 = vweird.f32 %v3005
        %vm3253 = vweird.f32 %v3247
        %vm3254 = vmor %vm3252, %vm3253
        %v3255 = vsel %vm3254, %v3247, %v3251
        %v3256 = vand.u32 2147483647, %v3005
        %vm3257 = vcmp.eq.f32.partialorder %v3256, 8.507059e+37
        %v3258 = vand.u32 %v3005, 2147483648
        %v3259 = vor.u32 1.1754944e-38, %v3258
        %v3260 = vsel %vm3257, %v3259, %v3255
        %v3261 = vmul.f32 1.0, %v3260
        %v3262 = vrcp.pop %v3006
        %v3263 = vmul.f32 %v3006, %v3262
        %v3264 = vsub.f32 1.0, %v3263
        %v3265 = vmul.f32 %v3262, %v3264
        %v3266 = vadd.f32 %v3262, %v3265
        %vm3267 = vweird.f32 %v3006
        %vm3268 = vweird.f32 %v3262
        %vm3269 = vmor %vm3267, %vm3268
        %v3270 = vsel %vm3269, %v3262, %v3266
        %v3271 = vand.u32 2147483647, %v3006
        %vm3272 = vcmp.eq.f32.partialorder %v3271, 8.507059e+37
        %v3273 = vand.u32 %v3006, 2147483648
        %v3274 = vor.u32 1.1754944e-38, %v3273
        %v3275 = vsel %vm3272, %v3274, %v3270
        %v3276 = vmul.f32 1.0, %v3275
        %v3277 = vrcp.pop %v3007
        %v3278 = vmul.f32 %v3007, %v3277
        %v3279 = vsub.f32 1.0, %v3278
        %v3280 = vmul.f32 %v3277, %v3279
        %v3281 = vadd.f32 %v3277, %v3280
        %vm3282 = vweird.f32 %v3007
        %vm3283 = vweird.f32 %v3277
        %vm3284 = vmor %vm3282, %vm3283
        %v3285 = vsel %vm3284, %v3277, %v3281
        %v3286 = vand.u32 2147483647, %v3007
        %vm3287 = vcmp.eq.f32.partialorder %v3286, 8.507059e+37
        %v3288 = vand.u32 %v3007, 2147483648
        %v3289 = vor.u32 1.1754944e-38, %v3288
        %v3290 = vsel %vm3287, %v3289, %v3285
        %v3291 = vmul.f32 1.0, %v3290
        %v3292 = vrcp.pop %v3008
        %v3293 = vmul.f32 %v3008, %v3292
        %v3294 = vsub.f32 1.0, %v3293
        %v3295 = vmul.f32 %v3292, %v3294
        %v3296 = vadd.f32 %v3292, %v3295
        %vm3297 = vweird.f32 %v3008
        %vm3298 = vweird.f32 %v3292
        %vm3299 = vmor %vm3297, %vm3298
        %v3300 = vsel %vm3299, %v3292, %v3296
        %v3301 = vand.u32 2147483647, %v3008
        %vm3302 = vcmp.eq.f32.partialorder %v3301, 8.507059e+37
        %v3303 = vand.u32 %v3008, 2147483648
        %v3304 = vor.u32 1.1754944e-38, %v3303
        %v3305 = vsel %vm3302, %v3304, %v3300
        %v3306 = vmul.f32 1.0, %v3305
        %v3307 = vrcp.pop %v3009
        %v3308 = vmul.f32 %v3009, %v3307
        %v3309 = vsub.f32 1.0, %v3308
        %v3310 = vmul.f32 %v3307, %v3309
        %v3311 = vadd.f32 %v3307, %v3310
        %vm3312 = vweird.f32 %v3009
        %vm3313 = vweird.f32 %v3307
        %vm3314 = vmor %vm3312, %vm3313
        %v3315 = vsel %vm3314, %v3307, %v3311
        %v3316 = vand.u32 2147483647, %v3009
        %vm3317 = vcmp.eq.f32.partialorder %v3316, 8.507059e+37
        %v3318 = vand.u32 %v3009, 2147483648
        %v3319 = vor.u32 1.1754944e-38, %v3318
        %v3320 = vsel %vm3317, %v3319, %v3315
        %v3321 = vmul.f32 1.0, %v3320
        %v3322 = vrcp.pop %v3010
        %v3323 = vmul.f32 %v3010, %v3322
        %v3324 = vsub.f32 1.0, %v3323
        %v3325 = vmul.f32 %v3322, %v3324
        %v3326 = vadd.f32 %v3322, %v3325
        %vm3327 = vweird.f32 %v3010
        %vm3328 = vweird.f32 %v3322
        %vm3329 = vmor %vm3327, %vm3328
        %v3330 = vsel %vm3329, %v3322, %v3326
        %v3331 = vand.u32 2147483647, %v3010
        %vm3332 = vcmp.eq.f32.partialorder %v3331, 8.507059e+37
        %v3333 = vand.u32 %v3010, 2147483648
        %v3334 = vor.u32 1.1754944e-38, %v3333
        %v3335 = vsel %vm3332, %v3334, %v3330
        %v3336 = vmul.f32 1.0, %v3335
        %v3337 = vrcp.pop %v3011
        %v3338 = vmul.f32 %v3011, %v3337
        %v3339 = vsub.f32 1.0, %v3338
        %v3340 = vmul.f32 %v3337, %v3339
        %v3341 = vadd.f32 %v3337, %v3340
        %vm3342 = vweird.f32 %v3011
        %vm3343 = vweird.f32 %v3337
        %vm3344 = vmor %vm3342, %vm3343
        %v3345 = vsel %vm3344, %v3337, %v3341
        %v3346 = vand.u32 2147483647, %v3011
        %vm3347 = vcmp.eq.f32.partialorder %v3346, 8.507059e+37
        %v3348 = vand.u32 %v3011, 2147483648
        %v3349 = vor.u32 1.1754944e-38, %v3348
        %v3350 = vsel %vm3347, %v3349, %v3345
        %v3351 = vmul.f32 1.0, %v3350
        %v3352 = vrcp.pop %v3012
        %v3353 = vmul.f32 %v3012, %v3352
        %v3354 = vsub.f32 1.0, %v3353
        %v3355 = vmul.f32 %v3352, %v3354
        %v3356 = vadd.f32 %v3352, %v3355
        %vm3357 = vweird.f32 %v3012
        %vm3358 = vweird.f32 %v3352
        %vm3359 = vmor %vm3357, %vm3358
        %v3360 = vsel %vm3359, %v3352, %v3356
        %v3361 = vand.u32 2147483647, %v3012
        %vm3362 = vcmp.eq.f32.partialorder %v3361, 8.507059e+37
        %v3363 = vand.u32 %v3012, 2147483648
        %v3364 = vor.u32 1.1754944e-38, %v3363
        %v3365 = vsel %vm3362, %v3364, %v3360
        %v3366 = vmul.f32 1.0, %v3365
        %v3367 = vrcp.pop %v3013
        %v3368 = vmul.f32 %v3013, %v3367
        %v3369 = vsub.f32 1.0, %v3368
        %v3370 = vmul.f32 %v3367, %v3369
        %v3371 = vadd.f32 %v3367, %v3370
        %vm3372 = vweird.f32 %v3013
        %vm3373 = vweird.f32 %v3367
        %vm3374 = vmor %vm3372, %vm3373
        %v3375 = vsel %vm3374, %v3367, %v3371
        %v3376 = vand.u32 2147483647, %v3013
        %vm3377 = vcmp.eq.f32.partialorder %v3376, 8.507059e+37
        %v3378 = vand.u32 %v3013, 2147483648
        %v3379 = vor.u32 1.1754944e-38, %v3378
        %v3380 = vsel %vm3377, %v3379, %v3375
        %v3381 = vmul.f32 1.0, %v3380
        %v3382 = vrcp.pop %v3014
        %v3383 = vmul.f32 %v3014, %v3382
        %v3384 = vsub.f32 1.0, %v3383
        %v3385 = vmul.f32 %v3382, %v3384
        %v3386 = vadd.f32 %v3382, %v3385
        %vm3387 = vweird.f32 %v3014
        %vm3388 = vweird.f32 %v3382
        %vm3389 = vmor %vm3387, %vm3388
        %v3390 = vsel %vm3389, %v3382, %v3386
        %v3391 = vand.u32 2147483647, %v3014
        %vm3392 = vcmp.eq.f32.partialorder %v3391, 8.507059e+37
        %v3393 = vand.u32 %v3014, 2147483648
        %v3394 = vor.u32 1.1754944e-38, %v3393
        %v3395 = vsel %vm3392, %v3394, %v3390
        %v3396 = vmul.f32 1.0, %v3395
        %v3397 = vrcp.pop %v3015
        %v3398 = vmul.f32 %v3015, %v3397
        %v3399 = vsub.f32 1.0, %v3398
        %v3400 = vmul.f32 %v3397, %v3399
        %v3401 = vadd.f32 %v3397, %v3400
        %vm3402 = vweird.f32 %v3015
        %vm3403 = vweird.f32 %v3397
        %vm3404 = vmor %vm3402, %vm3403
        %v3405 = vsel %vm3404, %v3397, %v3401
        %v3406 = vand.u32 2147483647, %v3015
        %vm3407 = vcmp.eq.f32.partialorder %v3406, 8.507059e+37
        %v3408 = vand.u32 %v3015, 2147483648
        %v3409 = vor.u32 1.1754944e-38, %v3408
        %v3410 = vsel %vm3407, %v3409, %v3405
        %v3411 = vmul.f32 1.0, %v3410
        %v3412 = vrcp.pop %v3016
        %v3413 = vmul.f32 %v3016, %v3412
        %v3414 = vsub.f32 1.0, %v3413
        %v3415 = vmul.f32 %v3412, %v3414
        %v3416 = vadd.f32 %v3412, %v3415
        %vm3417 = vweird.f32 %v3016
        %vm3418 = vweird.f32 %v3412
        %vm3419 = vmor %vm3417, %vm3418
        %v3420 = vsel %vm3419, %v3412, %v3416
        %v3421 = vand.u32 2147483647, %v3016
        %vm3422 = vcmp.eq.f32.partialorder %v3421, 8.507059e+37
        %v3423 = vand.u32 %v3016, 2147483648
        %v3424 = vor.u32 1.1754944e-38, %v3423
        %v3425 = vsel %vm3422, %v3424, %v3420
        %v3426 = vmul.f32 1.0, %v3425
        %v3427 = vrcp.pop %v3017
        %v3428 = vmul.f32 %v3017, %v3427
        %v3429 = vsub.f32 1.0, %v3428
        %v3430 = vmul.f32 %v3427, %v3429
        %v3431 = vadd.f32 %v3427, %v3430
        %vm3432 = vweird.f32 %v3017
        %vm3433 = vweird.f32 %v3427
        %vm3434 = vmor %vm3432, %vm3433
        %v3435 = vsel %vm3434, %v3427, %v3431
        %v3436 = vand.u32 2147483647, %v3017
        %vm3437 = vcmp.eq.f32.partialorder %v3436, 8.507059e+37
        %v3438 = vand.u32 %v3017, 2147483648
        %v3439 = vor.u32 1.1754944e-38, %v3438
        %v3440 = vsel %vm3437, %v3439, %v3435
        %v3441 = vmul.f32 1.0, %v3440
        %v3442 = vrcp.pop %v3018
        %v3443 = vmul.f32 %v3018, %v3442
        %v3444 = vsub.f32 1.0, %v3443
        %v3445 = vmul.f32 %v3442, %v3444
        %v3446 = vadd.f32 %v3442, %v3445
        %vm3447 = vweird.f32 %v3018
        %vm3448 = vweird.f32 %v3442
        %vm3449 = vmor %vm3447, %vm3448
        %v3450 = vsel %vm3449, %v3442, %v3446
        %v3451 = vand.u32 2147483647, %v3018
        %vm3452 = vcmp.eq.f32.partialorder %v3451, 8.507059e+37
        %v3453 = vand.u32 %v3018, 2147483648
        %v3454 = vor.u32 1.1754944e-38, %v3453
        %v3455 = vsel %vm3452, %v3454, %v3450
        %v3456 = vmul.f32 1.0, %v3455
        %v3457 = vrcp.pop %v3019
        %v3458 = vmul.f32 %v3019, %v3457
        %v3459 = vsub.f32 1.0, %v3458
        %v3460 = vmul.f32 %v3457, %v3459
        %v3461 = vadd.f32 %v3457, %v3460
        %vm3462 = vweird.f32 %v3019
        %vm3463 = vweird.f32 %v3457
        %vm3464 = vmor %vm3462, %vm3463
        %v3465 = vsel %vm3464, %v3457, %v3461
        %v3466 = vand.u32 2147483647, %v3019
        %vm3467 = vcmp.eq.f32.partialorder %v3466, 8.507059e+37
        %v3468 = vand.u32 %v3019, 2147483648
        %v3469 = vor.u32 1.1754944e-38, %v3468
        %v3470 = vsel %vm3467, %v3469, %v3465
        %v3471 = vmul.f32 1.0, %v3470
        %v3472 = vrcp.pop %v3020
        %v3473 = vmul.f32 %v3020, %v3472
        %v3474 = vsub.f32 1.0, %v3473
        %v3475 = vmul.f32 %v3472, %v3474
        %v3476 = vadd.f32 %v3472, %v3475
        %vm3477 = vweird.f32 %v3020
        %vm3478 = vweird.f32 %v3472
        %vm3479 = vmor %vm3477, %vm3478
        %v3480 = vsel %vm3479, %v3472, %v3476
        %v3481 = vand.u32 2147483647, %v3020
        %vm3482 = vcmp.eq.f32.partialorder %v3481, 8.507059e+37
        %v3483 = vand.u32 %v3020, 2147483648
        %v3484 = vor.u32 1.1754944e-38, %v3483
        %v3485 = vsel %vm3482, %v3484, %v3480
        %v3486 = vmul.f32 1.0, %v3485
        %v3487 = vrcp.pop %v3021
        %v3488 = vmul.f32 %v3021, %v3487
        %v3489 = vsub.f32 1.0, %v3488
        %v3490 = vmul.f32 %v3487, %v3489
        %v3491 = vadd.f32 %v3487, %v3490
        %vm3492 = vweird.f32 %v3021
        %vm3493 = vweird.f32 %v3487
        %vm3494 = vmor %vm3492, %vm3493
        %v3495 = vsel %vm3494, %v3487, %v3491
        %v3496 = vand.u32 2147483647, %v3021
        %vm3497 = vcmp.eq.f32.partialorder %v3496, 8.507059e+37
        %v3498 = vand.u32 %v3021, 2147483648
        %v3499 = vor.u32 1.1754944e-38, %v3498
        %v3500 = vsel %vm3497, %v3499, %v3495
        %v3501 = vmul.f32 1.0, %v3500
        %v3502 = vmul.f32 %v2862, %v3036
        %v3503 = vmul.f32 %v2863, %v3051
        %v3504 = vmul.f32 %v2864, %v3066
        %v3505 = vmul.f32 %v2865, %v3081
        %v3506 = vmul.f32 %v2866, %v3096
        %v3507 = vmul.f32 %v2867, %v3111
        %v3508 = vmul.f32 %v2868, %v3126
        %v3509 = vmul.f32 %v2869, %v3141
        %v3510 = vmul.f32 %v2870, %v3156
        %v3511 = vmul.f32 %v2871, %v3171
        %v3512 = vmul.f32 %v2872, %v3186
        %v3513 = vmul.f32 %v2873, %v3201
        %v3514 = vmul.f32 %v2874, %v3216
        %v3515 = vmul.f32 %v2875, %v3231
        %v3516 = vmul.f32 %v2876, %v3246
        %v3517 = vmul.f32 %v2877, %v3261
        %v3518 = vmul.f32 %v2878, %v3276
        %v3519 = vmul.f32 %v2879, %v3291
        %v3520 = vmul.f32 %v2880, %v3306
        %v3521 = vmul.f32 %v2881, %v3321
        %v3522 = vmul.f32 %v2882, %v3336
        %v3523 = vmul.f32 %v2883, %v3351
        %v3524 = vmul.f32 %v2884, %v3366
        %v3525 = vmul.f32 %v2885, %v3381
        %v3526 = vmul.f32 %v2886, %v3396
        %v3527 = vmul.f32 %v2887, %v3411
        %v3528 = vmul.f32 %v2888, %v3426
        %v3529 = vmul.f32 %v2889, %v3441
        %v3530 = vmul.f32 %v2890, %v3456
        %v3531 = vmul.f32 %v2891, %v3471
        %v3532 = vmul.f32 %v2892, %v3486
        %v3533 = vmul.f32 %v2893, %v3501
        %vm3534 = vcmask 261120
        %3535 = vst.msk [vmem:[#allocation2] sm:$0xff] %vm3534, 0.0
        %3536 = vst.msk [vmem:[#allocation2 + $0x8] sm:$0xff] %vm3534, 0.0
        %vm3537 = vcmask 254976
        %3538 = vst.msk [vmem:[#allocation2 + $0x10] sm:$0x3] %vm3537, 0.0
        %3539 = vst.msk [vmem:[#allocation2 + $0x18] sm:$0xff] %vm3534, 0.0
        %3540 = vst.msk [vmem:[#allocation2 + $0x20] sm:$0xff] %vm3534, 0.0
        %3541 = vst.msk [vmem:[#allocation2 + $0x28] sm:$0x3] %vm3537, 0.0
        %3542 = vst.msk [vmem:[#allocation2 + $0x30] sm:$0xff] %vm3534, 0.0
        %3543 = vst.msk [vmem:[#allocation2 + $0x38] sm:$0xff] %vm3534, 0.0
        %3544 = vst.msk [vmem:[#allocation2 + $0x40] sm:$0x3] %vm3537, 0.0
        %3545 = vst.msk [vmem:[#allocation2 + $0x48] sm:$0xff] %vm3534, 0.0
        %3546 = vst.msk [vmem:[#allocation2 + $0x50] sm:$0xff] %vm3534, 0.0
        %3547 = vst.msk [vmem:[#allocation2 + $0x58] sm:$0x3] %vm3537, 0.0
        %3548 = vst.msk [vmem:[#allocation2 + $0x60] sm:$0xff] %vm3534, 0.0
        %3549 = vst.msk [vmem:[#allocation2 + $0x68] sm:$0xff] %vm3534, 0.0
        %3550 = vst.msk [vmem:[#allocation2 + $0x70] sm:$0x3] %vm3537, 0.0
        %3551 = vst.msk [vmem:[#allocation2 + $0x78] sm:$0xff] %vm3534, 0.0
        %3552 = vst.msk [vmem:[#allocation2 + $0x80] sm:$0xff] %vm3534, 0.0
        %3553 = vst.msk [vmem:[#allocation2 + $0x88] sm:$0x3] %vm3537, 0.0
        %3554 = vst.msk [vmem:[#allocation2 + $0x90] sm:$0xff] %vm3534, 0.0
        %3555 = vst.msk [vmem:[#allocation2 + $0x98] sm:$0xff] %vm3534, 0.0
        %3556 = vst.msk [vmem:[#allocation2 + $0xa0] sm:$0x3] %vm3537, 0.0
        %3557 = vst.msk [vmem:[#allocation2 + $0xa8] sm:$0xff] %vm3534, 0.0
        %3558 = vst.msk [vmem:[#allocation2 + $0xb0] sm:$0xff] %vm3534, 0.0
        %3559 = vst.msk [vmem:[#allocation2 + $0xb8] sm:$0x3] %vm3537, 0.0
        %3560 = vst.msk [vmem:[#allocation2 + $0xc0] sm:$0xff] %vm3534, 0.0
        %3561 = vst.msk [vmem:[#allocation2 + $0xc8] sm:$0xff] %vm3534, 0.0
        %3562 = vst.msk [vmem:[#allocation2 + $0xd0] sm:$0x3] %vm3537, 0.0
        %3563 = vst.msk [vmem:[#allocation2 + $0xd8] sm:$0xff] %vm3534, 0.0
        %3564 = vst.msk [vmem:[#allocation2 + $0xe0] sm:$0xff] %vm3534, 0.0
        %3565 = vst.msk [vmem:[#allocation2 + $0xe8] sm:$0x3] %vm3537, 0.0
        %3566 = vst.msk [vmem:[#allocation2 + $0xf0] sm:$0xff] %vm3534, 0.0
        %3567 = vst.msk [vmem:[#allocation2 + $0xf8] sm:$0xff] %vm3534, 0.0
        %3568 = vst.msk [vmem:[#allocation2 + $0x100] sm:$0x3] %vm3537, 0.0
        %3569 = vst.msk [vmem:[#allocation2 + $0x108] sm:$0xff] %vm3534, 0.0
        %3570 = vst.msk [vmem:[#allocation2 + $0x110] sm:$0xff] %vm3534, 0.0
        %3571 = vst.msk [vmem:[#allocation2 + $0x118] sm:$0x3] %vm3537, 0.0
        %3572 = vst.msk [vmem:[#allocation2 + $0x120] sm:$0xff] %vm3534, 0.0
        %3573 = vst.msk [vmem:[#allocation2 + $0x128] sm:$0xff] %vm3534, 0.0
        %3574 = vst.msk [vmem:[#allocation2 + $0x130] sm:$0x3] %vm3537, 0.0
        %3575 = vst.msk [vmem:[#allocation2 + $0x138] sm:$0xff] %vm3534, 0.0
        %3576 = vst.msk [vmem:[#allocation2 + $0x140] sm:$0xff] %vm3534, 0.0
        %3577 = vst.msk [vmem:[#allocation2 + $0x148] sm:$0x3] %vm3537, 0.0
        %3578 = vst.msk [vmem:[#allocation2 + $0x150] sm:$0xff] %vm3534, 0.0
        %3579 = vst.msk [vmem:[#allocation2 + $0x158] sm:$0xff] %vm3534, 0.0
        %3580 = vst.msk [vmem:[#allocation2 + $0x160] sm:$0x3] %vm3537, 0.0
        %3581 = vst.msk [vmem:[#allocation2 + $0x168] sm:$0xff] %vm3534, 0.0
        %3582 = vst.msk [vmem:[#allocation2 + $0x170] sm:$0xff] %vm3534, 0.0
        %3583 = vst.msk [vmem:[#allocation2 + $0x178] sm:$0x3] %vm3537, 0.0
        %3584 = vst.msk [vmem:[#allocation2 + $0x180] sm:$0xff] %vm3534, 0.0
        %3585 = vst.msk [vmem:[#allocation2 + $0x188] sm:$0xff] %vm3534, 0.0
        %3586 = vst.msk [vmem:[#allocation2 + $0x190] sm:$0x3] %vm3537, 0.0
        %3587 = vst.msk [vmem:[#allocation2 + $0x198] sm:$0xff] %vm3534, 0.0
        %3588 = vst.msk [vmem:[#allocation2 + $0x1a0] sm:$0xff] %vm3534, 0.0
        %3589 = vst.msk [vmem:[#allocation2 + $0x1a8] sm:$0x3] %vm3537, 0.0
        %s3590 = scalar_lea.vmem [#allocation2], 24
        %3591 = vst.msk [vmem:[%s3590 + $0x1] sm:$0xff] %vm3534, %v3502
        %3592 = vst.msk [vmem:[%s3590 + $0x9] sm:$0xff] %vm3534, %v3503
        %3593 = vst.msk [vmem:[%s3590 + $0x19] sm:$0xff] %vm3534, %v3504
        %3594 = vst.msk [vmem:[%s3590 + $0x21] sm:$0xff] %vm3534, %v3505
        %3595 = vst.msk [vmem:[%s3590 + $0x31] sm:$0xff] %vm3534, %v3506
        %3596 = vst.msk [vmem:[%s3590 + $0x39] sm:$0xff] %vm3534, %v3507
        %3597 = vst.msk [vmem:[%s3590 + $0x49] sm:$0xff] %vm3534, %v3508
        %3598 = vst.msk [vmem:[%s3590 + $0x51] sm:$0xff] %vm3534, %v3509
        %3599 = vst.msk [vmem:[%s3590 + $0x61] sm:$0xff] %vm3534, %v3510
        %3600 = vst.msk [vmem:[%s3590 + $0x69] sm:$0xff] %vm3534, %v3511
        %3601 = vst.msk [vmem:[%s3590 + $0x79] sm:$0xff] %vm3534, %v3512
        %3602 = vst.msk [vmem:[%s3590 + $0x81] sm:$0xff] %vm3534, %v3513
        %3603 = vst.msk [vmem:[%s3590 + $0x91] sm:$0xff] %vm3534, %v3514
        %3604 = vst.msk [vmem:[%s3590 + $0x99] sm:$0xff] %vm3534, %v3515
        %3605 = vst.msk [vmem:[%s3590 + $0xa9] sm:$0xff] %vm3534, %v3516
        %3606 = vst.msk [vmem:[%s3590 + $0xb1] sm:$0xff] %vm3534, %v3517
        %3607 = vst.msk [vmem:[%s3590 + $0xc1] sm:$0xff] %vm3534, %v3518
        %3608 = vst.msk [vmem:[%s3590 + $0xc9] sm:$0xff] %vm3534, %v3519
        %3609 = vst.msk [vmem:[%s3590 + $0xd9] sm:$0xff] %vm3534, %v3520
        %3610 = vst.msk [vmem:[%s3590 + $0xe1] sm:$0xff] %vm3534, %v3521
        %3611 = vst.msk [vmem:[%s3590 + $0xf1] sm:$0xff] %vm3534, %v3522
        %3612 = vst.msk [vmem:[%s3590 + $0xf9] sm:$0xff] %vm3534, %v3523
        %3613 = vst.msk [vmem:[%s3590 + $0x109] sm:$0xff] %vm3534, %v3524
        %3614 = vst.msk [vmem:[%s3590 + $0x111] sm:$0xff] %vm3534, %v3525
        %3615 = vst.msk [vmem:[%s3590 + $0x121] sm:$0xff] %vm3534, %v3526
        %3616 = vst.msk [vmem:[%s3590 + $0x129] sm:$0xff] %vm3534, %v3527
        %3617 = vst.msk [vmem:[%s3590 + $0x139] sm:$0xff] %vm3534, %v3528
        %3618 = vst.msk [vmem:[%s3590 + $0x141] sm:$0xff] %vm3534, %v3529
        %3619 = vst.msk [vmem:[%s3590 + $0x151] sm:$0xff] %vm3534, %v3530
        %3620 = vst.msk [vmem:[%s3590 + $0x159] sm:$0xff] %vm3534, %v3531
        %3621 = vst.msk [vmem:[%s3590 + $0x169] sm:$0xff] %vm3534, %v3532
        %3622 = vst.msk [vmem:[%s3590 + $0x171] sm:$0xff] %vm3534, %v3533
        %v3623 = vld [vmem:[#allocation2] sm:$0xff]
        %v3624 = vld [vmem:[#allocation2 + $0x8] sm:$0xff]
        %v3625 = vld [vmem:[#allocation2 + $0x18] sm:$0xff]
        %v3626 = vld [vmem:[#allocation2 + $0x20] sm:$0xff]
        %v3627 = vld [vmem:[#allocation2 + $0x30] sm:$0xff]
        %v3628 = vld [vmem:[#allocation2 + $0x38] sm:$0xff]
        %v3629 = vld [vmem:[#allocation2 + $0x48] sm:$0xff]
        %v3630 = vld [vmem:[#allocation2 + $0x50] sm:$0xff]
        %v3631 = vld [vmem:[#allocation2 + $0x60] sm:$0xff]
        %v3632 = vld [vmem:[#allocation2 + $0x68] sm:$0xff]
        %v3633 = vld [vmem:[#allocation2 + $0x78] sm:$0xff]
        %v3634 = vld [vmem:[#allocation2 + $0x80] sm:$0xff]
        %v3635 = vld [vmem:[#allocation2 + $0x90] sm:$0xff]
        %v3636 = vld [vmem:[#allocation2 + $0x98] sm:$0xff]
        %v3637 = vld [vmem:[#allocation2 + $0xa8] sm:$0xff]
        %v3638 = vld [vmem:[#allocation2 + $0xb0] sm:$0xff]
        %v3639 = vld [vmem:[#allocation2 + $0xc0] sm:$0xff]
        %v3640 = vld [vmem:[#allocation2 + $0xc8] sm:$0xff]
        %v3641 = vld [vmem:[#allocation2 + $0xd8] sm:$0xff]
        %v3642 = vld [vmem:[#allocation2 + $0xe0] sm:$0xff]
        %v3643 = vld [vmem:[#allocation2 + $0xf0] sm:$0xff]
        %v3644 = vld [vmem:[#allocation2 + $0xf8] sm:$0xff]
        %v3645 = vld [vmem:[#allocation2 + $0x108] sm:$0xff]
        %v3646 = vld [vmem:[#allocation2 + $0x110] sm:$0xff]
        %v3647 = vld [vmem:[#allocation2 + $0x120] sm:$0xff]
        %v3648 = vld [vmem:[#allocation2 + $0x128] sm:$0xff]
        %v3649 = vld [vmem:[#allocation2 + $0x138] sm:$0xff]
        %v3650 = vld [vmem:[#allocation2 + $0x140] sm:$0xff]
        %v3651 = vld [vmem:[#allocation2 + $0x150] sm:$0xff]
        %v3652 = vld [vmem:[#allocation2 + $0x158] sm:$0xff]
        %v3653 = vld [vmem:[#allocation2 + $0x168] sm:$0xff]
        %v3654 = vld [vmem:[#allocation2 + $0x170] sm:$0xff]
        %v3655 = vld [vmem:[%s7] sm:$0xff]
        %v3656 = vld [vmem:[%s7 + $0x8] sm:$0xff]
        %v3657 = vld [vmem:[%s7 + $0x10] sm:$0xff]
        %v3658 = vld [vmem:[%s7 + $0x18] sm:$0xff]
        %v3659 = vld [vmem:[#allocation2 + $0x1] sm:$0xff]
        %v3660 = vld [vmem:[#allocation2 + $0x9] sm:$0xff]
        %v3661 = vld [vmem:[#allocation2 + $0x19] sm:$0xff]
        %v3662 = vld [vmem:[#allocation2 + $0x21] sm:$0xff]
        %v3663 = vld [vmem:[#allocation2 + $0x31] sm:$0xff]
        %v3664 = vld [vmem:[#allocation2 + $0x39] sm:$0xff]
        %v3665 = vld [vmem:[#allocation2 + $0x49] sm:$0xff]
        %v3666 = vld [vmem:[#allocation2 + $0x51] sm:$0xff]
        %v3667 = vld [vmem:[#allocation2 + $0x61] sm:$0xff]
        %v3668 = vld [vmem:[#allocation2 + $0x69] sm:$0xff]
        %v3669 = vld [vmem:[#allocation2 + $0x79] sm:$0xff]
        %v3670 = vld [vmem:[#allocation2 + $0x81] sm:$0xff]
        %v3671 = vld [vmem:[#allocation2 + $0x91] sm:$0xff]
        %v3672 = vld [vmem:[#allocation2 + $0x99] sm:$0xff]
        %v3673 = vld [vmem:[#allocation2 + $0xa9] sm:$0xff]
        %v3674 = vld [vmem:[#allocation2 + $0xb1] sm:$0xff]
        %v3675 = vld [vmem:[#allocation2 + $0xc1] sm:$0xff]
        %v3676 = vld [vmem:[#allocation2 + $0xc9] sm:$0xff]
        %v3677 = vld [vmem:[#allocation2 + $0xd9] sm:$0xff]
        %v3678 = vld [vmem:[#allocation2 + $0xe1] sm:$0xff]
        %v3679 = vld [vmem:[#allocation2 + $0xf1] sm:$0xff]
        %v3680 = vld [vmem:[#allocation2 + $0xf9] sm:$0xff]
        %v3681 = vld [vmem:[#allocation2 + $0x109] sm:$0xff]
        %v3682 = vld [vmem:[#allocation2 + $0x111] sm:$0xff]
        %v3683 = vld [vmem:[#allocation2 + $0x121] sm:$0xff]
        %v3684 = vld [vmem:[#allocation2 + $0x129] sm:$0xff]
        %v3685 = vld [vmem:[#allocation2 + $0x139] sm:$0xff]
        %v3686 = vld [vmem:[#allocation2 + $0x141] sm:$0xff]
        %v3687 = vld [vmem:[#allocation2 + $0x151] sm:$0xff]
        %v3688 = vld [vmem:[#allocation2 + $0x159] sm:$0xff]
        %v3689 = vld [vmem:[#allocation2 + $0x169] sm:$0xff]
        %v3690 = vld [vmem:[#allocation2 + $0x171] sm:$0xff]
        %v3691 = vld [vmem:[%s7 + $0x20] sm:$0xff]
        %v3692 = vld [vmem:[%s7 + $0x28] sm:$0xff]
        %v3693 = vld [vmem:[%s7 + $0x30] sm:$0xff]
        %v3694 = vld [vmem:[%s7 + $0x38] sm:$0xff]
        %v3696 = vsel %vm3534, %v3659, 0
        %v3699 = vsel %vm3534, %v3660, 0
        %v3702 = vsel %vm3534, %v3661, 0
        %v3705 = vsel %vm3534, %v3662, 0
        %v3708 = vsel %vm3534, %v3663, 0
        %v3711 = vsel %vm3534, %v3664, 0
        %v3714 = vsel %vm3534, %v3665, 0
        %v3717 = vsel %vm3534, %v3666, 0
        %v3720 = vsel %vm3534, %v3667, 0
        %v3723 = vsel %vm3534, %v3668, 0
        %v3726 = vsel %vm3534, %v3669, 0
        %v3729 = vsel %vm3534, %v3670, 0
        %v3732 = vsel %vm3534, %v3671, 0
        %v3735 = vsel %vm3534, %v3672, 0
        %v3738 = vsel %vm3534, %v3673, 0
        %v3741 = vsel %vm3534, %v3674, 0
        %v3744 = vsel %vm3534, %v3675, 0
        %v3747 = vsel %vm3534, %v3676, 0
        %v3750 = vsel %vm3534, %v3677, 0
        %v3753 = vsel %vm3534, %v3678, 0
        %v3756 = vsel %vm3534, %v3679, 0
        %v3759 = vsel %vm3534, %v3680, 0
        %v3762 = vsel %vm3534, %v3681, 0
        %v3765 = vsel %vm3534, %v3682, 0
        %v3768 = vsel %vm3534, %v3683, 0
        %v3771 = vsel %vm3534, %v3684, 0
        %v3774 = vsel %vm3534, %v3685, 0
        %v3777 = vsel %vm3534, %v3686, 0
        %v3780 = vsel %vm3534, %v3687, 0
        %v3783 = vsel %vm3534, %v3688, 0
        %v3786 = vsel %vm3534, %v3689, 0
        %v3789 = vsel %vm3534, %v3690, 0
        %3791 = vmatpush.msra.mxu0 0.0
        %3792 = vmatpush.msra.mxu0 0.0
        %3793 = vmatpush.msra.mxu0 0.0
        %3794 = vmatpush.msra.mxu0 0.0
        %3795 = vmatpush.msra.mxu0 0.0
        %3796 = vmatpush.msra.mxu0 0.0
        %3797 = vmatpush.msra.mxu0 0.0
        %3798 = vmatpush.msra.mxu0 0.0
        %3799 = vmatpush.msra.mxu0 0.0
        %3800 = vmatpush.msra.mxu0 0.0
        %3801 = vmatpush.msra.mxu0 0.0
        %3802 = vmatpush.msra.mxu0 0.0
        %3803 = vmatpush.msra.mxu0 %v3694
        %3804 = vmatpush.msra.mxu0 %v3693
        %3805 = vmatpush.msra.mxu0 %v3692
        %3806 = vmatpush.msra.mxu0 %v3691
        %3807 = vmatmul.f32.gmra.mxu0 %v3696
        %v3808 = vpop.f32.mrf.mxu0
        %v3809 = vadd.f32 0.0, %v3808
        %3810 = vmatmul.f32.gmra.mxu0 %v3699
        %v3811 = vpop.f32.mrf.mxu0
        %v3812 = vadd.f32 0.0, %v3811
        %3813 = vmatmul.f32.gmra.mxu0 %v3702
        %v3814 = vpop.f32.mrf.mxu0
        %v3815 = vadd.f32 0.0, %v3814
        %3816 = vmatmul.f32.gmra.mxu0 %v3705
        %v3817 = vpop.f32.mrf.mxu0
        %v3818 = vadd.f32 0.0, %v3817
        %3819 = vmatmul.f32.gmra.mxu0 %v3708
        %v3820 = vpop.f32.mrf.mxu0
        %v3821 = vadd.f32 0.0, %v3820
        %3822 = vmatmul.f32.gmra.mxu0 %v3711
        %v3823 = vpop.f32.mrf.mxu0
        %v3824 = vadd.f32 0.0, %v3823
        %3825 = vmatmul.f32.gmra.mxu0 %v3714
        %v3826 = vpop.f32.mrf.mxu0
        %v3827 = vadd.f32 0.0, %v3826
        %3828 = vmatmul.f32.gmra.mxu0 %v3717
        %v3829 = vpop.f32.mrf.mxu0
        %v3830 = vadd.f32 0.0, %v3829
        %3831 = vmatmul.f32.gmra.mxu0 %v3720
        %v3832 = vpop.f32.mrf.mxu0
        %v3833 = vadd.f32 0.0, %v3832
        %3834 = vmatmul.f32.gmra.mxu0 %v3723
        %v3835 = vpop.f32.mrf.mxu0
        %v3836 = vadd.f32 0.0, %v3835
        %3837 = vmatmul.f32.gmra.mxu0 %v3726
        %v3838 = vpop.f32.mrf.mxu0
        %v3839 = vadd.f32 0.0, %v3838
        %3840 = vmatmul.f32.gmra.mxu0 %v3729
        %v3841 = vpop.f32.mrf.mxu0
        %v3842 = vadd.f32 0.0, %v3841
        %3843 = vmatmul.f32.gmra.mxu0 %v3732
        %v3844 = vpop.f32.mrf.mxu0
        %v3845 = vadd.f32 0.0, %v3844
        %3846 = vmatmul.f32.gmra.mxu0 %v3735
        %v3847 = vpop.f32.mrf.mxu0
        %v3848 = vadd.f32 0.0, %v3847
        %3849 = vmatmul.f32.gmra.mxu0 %v3738
        %v3850 = vpop.f32.mrf.mxu0
        %v3851 = vadd.f32 0.0, %v3850
        %3852 = vmatmul.f32.gmra.mxu0 %v3741
        %v3853 = vpop.f32.mrf.mxu0
        %v3854 = vadd.f32 0.0, %v3853
        %3855 = vmatmul.f32.gmra.mxu0 %v3744
        %v3856 = vpop.f32.mrf.mxu0
        %v3857 = vadd.f32 0.0, %v3856
        %3858 = vmatmul.f32.gmra.mxu0 %v3747
        %v3859 = vpop.f32.mrf.mxu0
        %v3860 = vadd.f32 0.0, %v3859
        %3861 = vmatmul.f32.gmra.mxu0 %v3750
        %v3862 = vpop.f32.mrf.mxu0
        %v3863 = vadd.f32 0.0, %v3862
        %3864 = vmatmul.f32.gmra.mxu0 %v3753
        %v3865 = vpop.f32.mrf.mxu0
        %v3866 = vadd.f32 0.0, %v3865
        %3867 = vmatmul.f32.gmra.mxu0 %v3756
        %v3868 = vpop.f32.mrf.mxu0
        %v3869 = vadd.f32 0.0, %v3868
        %3870 = vmatmul.f32.gmra.mxu0 %v3759
        %v3871 = vpop.f32.mrf.mxu0
        %v3872 = vadd.f32 0.0, %v3871
        %3873 = vmatmul.f32.gmra.mxu0 %v3762
        %v3874 = vpop.f32.mrf.mxu0
        %v3875 = vadd.f32 0.0, %v3874
        %3876 = vmatmul.f32.gmra.mxu0 %v3765
        %v3877 = vpop.f32.mrf.mxu0
        %v3878 = vadd.f32 0.0, %v3877
        %3879 = vmatmul.f32.gmra.mxu0 %v3768
        %v3880 = vpop.f32.mrf.mxu0
        %v3881 = vadd.f32 0.0, %v3880
        %3882 = vmatmul.f32.gmra.mxu0 %v3771
        %v3883 = vpop.f32.mrf.mxu0
        %v3884 = vadd.f32 0.0, %v3883
        %3885 = vmatmul.f32.gmra.mxu0 %v3774
        %v3886 = vpop.f32.mrf.mxu0
        %v3887 = vadd.f32 0.0, %v3886
        %3888 = vmatmul.f32.gmra.mxu0 %v3777
        %v3889 = vpop.f32.mrf.mxu0
        %v3890 = vadd.f32 0.0, %v3889
        %3891 = vmatmul.f32.gmra.mxu0 %v3780
        %v3892 = vpop.f32.mrf.mxu0
        %v3893 = vadd.f32 0.0, %v3892
        %3894 = vmatmul.f32.gmra.mxu0 %v3783
        %v3895 = vpop.f32.mrf.mxu0
        %v3896 = vadd.f32 0.0, %v3895
        %3897 = vmatmul.f32.gmra.mxu0 %v3786
        %v3898 = vpop.f32.mrf.mxu0
        %v3899 = vadd.f32 0.0, %v3898
        %3900 = vmatmul.f32.gmra.mxu0 %v3789
        %v3901 = vpop.f32.mrf.mxu0
        %v3902 = vadd.f32 0.0, %v3901
        %3903 = vdwg.mxu0
        %v3905 = vsel %vm3534, %v3623, 0
        %v3908 = vsel %vm3534, %v3624, 0
        %v3911 = vsel %vm3534, %v3625, 0
        %v3914 = vsel %vm3534, %v3626, 0
        %v3917 = vsel %vm3534, %v3627, 0
        %v3920 = vsel %vm3534, %v3628, 0
        %v3923 = vsel %vm3534, %v3629, 0
        %v3926 = vsel %vm3534, %v3630, 0
        %v3929 = vsel %vm3534, %v3631, 0
        %v3932 = vsel %vm3534, %v3632, 0
        %v3935 = vsel %vm3534, %v3633, 0
        %v3938 = vsel %vm3534, %v3634, 0
        %v3941 = vsel %vm3534, %v3635, 0
        %v3944 = vsel %vm3534, %v3636, 0
        %v3947 = vsel %vm3534, %v3637, 0
        %v3950 = vsel %vm3534, %v3638, 0
        %v3953 = vsel %vm3534, %v3639, 0
        %v3956 = vsel %vm3534, %v3640, 0
        %v3959 = vsel %vm3534, %v3641, 0
        %v3962 = vsel %vm3534, %v3642, 0
        %v3965 = vsel %vm3534, %v3643, 0
        %v3968 = vsel %vm3534, %v3644, 0
        %v3971 = vsel %vm3534, %v3645, 0
        %v3974 = vsel %vm3534, %v3646, 0
        %v3977 = vsel %vm3534, %v3647, 0
        %v3980 = vsel %vm3534, %v3648, 0
        %v3983 = vsel %vm3534, %v3649, 0
        %v3986 = vsel %vm3534, %v3650, 0
        %v3989 = vsel %vm3534, %v3651, 0
        %v3992 = vsel %vm3534, %v3652, 0
        %v3995 = vsel %vm3534, %v3653, 0
        %v3998 = vsel %vm3534, %v3654, 0
        %4000 = vmatpush.msra.mxu0 0.0
        %4001 = vmatpush.msra.mxu0 0.0
        %4002 = vmatpush.msra.mxu0 0.0
        %4003 = vmatpush.msra.mxu0 0.0
        %4004 = vmatpush.msra.mxu0 0.0
        %4005 = vmatpush.msra.mxu0 0.0
        %4006 = vmatpush.msra.mxu0 0.0
        %4007 = vmatpush.msra.mxu0 0.0
        %4008 = vmatpush.msra.mxu0 0.0
        %4009 = vmatpush.msra.mxu0 0.0
        %4010 = vmatpush.msra.mxu0 0.0
        %4011 = vmatpush.msra.mxu0 0.0
        %4012 = vmatpush.msra.mxu0 %v3658
        %4013 = vmatpush.msra.mxu0 %v3657
        %4014 = vmatpush.msra.mxu0 %v3656
        %4015 = vmatpush.msra.mxu0 %v3655
        %4016 = vmatmul.f32.gmra.mxu0 %v3905
        %v4017 = vpop.f32.mrf.mxu0
        %v4018 = vadd.f32 %v3809, %v4017
        %4019 = vmatmul.f32.gmra.mxu0 %v3908
        %v4020 = vpop.f32.mrf.mxu0
        %v4021 = vadd.f32 %v3812, %v4020
        %4022 = vmatmul.f32.gmra.mxu0 %v3911
        %v4023 = vpop.f32.mrf.mxu0
        %v4024 = vadd.f32 %v3815, %v4023
        %4025 = vmatmul.f32.gmra.mxu0 %v3914
        %v4026 = vpop.f32.mrf.mxu0
        %v4027 = vadd.f32 %v3818, %v4026
        %4028 = vmatmul.f32.gmra.mxu0 %v3917
        %v4029 = vpop.f32.mrf.mxu0
        %v4030 = vadd.f32 %v3821, %v4029
        %4031 = vmatmul.f32.gmra.mxu0 %v3920
        %v4032 = vpop.f32.mrf.mxu0
        %v4033 = vadd.f32 %v3824, %v4032
        %4034 = vmatmul.f32.gmra.mxu0 %v3923
        %v4035 = vpop.f32.mrf.mxu0
        %v4036 = vadd.f32 %v3827, %v4035
        %4037 = vmatmul.f32.gmra.mxu0 %v3926
        %v4038 = vpop.f32.mrf.mxu0
        %v4039 = vadd.f32 %v3830, %v4038
        %4040 = vmatmul.f32.gmra.mxu0 %v3929
        %v4041 = vpop.f32.mrf.mxu0
        %v4042 = vadd.f32 %v3833, %v4041
        %4043 = vmatmul.f32.gmra.mxu0 %v3932
        %v4044 = vpop.f32.mrf.mxu0
        %v4045 = vadd.f32 %v3836, %v4044
        %4046 = vmatmul.f32.gmra.mxu0 %v3935
        %v4047 = vpop.f32.mrf.mxu0
        %v4048 = vadd.f32 %v3839, %v4047
        %4049 = vmatmul.f32.gmra.mxu0 %v3938
        %v4050 = vpop.f32.mrf.mxu0
        %v4051 = vadd.f32 %v3842, %v4050
        %4052 = vmatmul.f32.gmra.mxu0 %v3941
        %v4053 = vpop.f32.mrf.mxu0
        %v4054 = vadd.f32 %v3845, %v4053
        %4055 = vmatmul.f32.gmra.mxu0 %v3944
        %v4056 = vpop.f32.mrf.mxu0
        %v4057 = vadd.f32 %v3848, %v4056
        %4058 = vmatmul.f32.gmra.mxu0 %v3947
        %v4059 = vpop.f32.mrf.mxu0
        %v4060 = vadd.f32 %v3851, %v4059
        %4061 = vmatmul.f32.gmra.mxu0 %v3950
        %v4062 = vpop.f32.mrf.mxu0
        %v4063 = vadd.f32 %v3854, %v4062
        %4064 = vmatmul.f32.gmra.mxu0 %v3953
        %v4065 = vpop.f32.mrf.mxu0
        %v4066 = vadd.f32 %v3857, %v4065
        %4067 = vmatmul.f32.gmra.mxu0 %v3956
        %v4068 = vpop.f32.mrf.mxu0
        %v4069 = vadd.f32 %v3860, %v4068
        %4070 = vmatmul.f32.gmra.mxu0 %v3959
        %v4071 = vpop.f32.mrf.mxu0
        %v4072 = vadd.f32 %v3863, %v4071
        %4073 = vmatmul.f32.gmra.mxu0 %v3962
        %v4074 = vpop.f32.mrf.mxu0
        %v4075 = vadd.f32 %v3866, %v4074
        %4076 = vmatmul.f32.gmra.mxu0 %v3965
        %v4077 = vpop.f32.mrf.mxu0
        %v4078 = vadd.f32 %v3869, %v4077
        %4079 = vmatmul.f32.gmra.mxu0 %v3968
        %v4080 = vpop.f32.mrf.mxu0
        %v4081 = vadd.f32 %v3872, %v4080
        %4082 = vmatmul.f32.gmra.mxu0 %v3971
        %v4083 = vpop.f32.mrf.mxu0
        %v4084 = vadd.f32 %v3875, %v4083
        %4085 = vmatmul.f32.gmra.mxu0 %v3974
        %v4086 = vpop.f32.mrf.mxu0
        %v4087 = vadd.f32 %v3878, %v4086
        %4088 = vmatmul.f32.gmra.mxu0 %v3977
        %v4089 = vpop.f32.mrf.mxu0
        %v4090 = vadd.f32 %v3881, %v4089
        %4091 = vmatmul.f32.gmra.mxu0 %v3980
        %v4092 = vpop.f32.mrf.mxu0
        %v4093 = vadd.f32 %v3884, %v4092
        %4094 = vmatmul.f32.gmra.mxu0 %v3983
        %v4095 = vpop.f32.mrf.mxu0
        %v4096 = vadd.f32 %v3887, %v4095
        %4097 = vmatmul.f32.gmra.mxu0 %v3986
        %v4098 = vpop.f32.mrf.mxu0
        %v4099 = vadd.f32 %v3890, %v4098
        %4100 = vmatmul.f32.gmra.mxu0 %v3989
        %v4101 = vpop.f32.mrf.mxu0
        %v4102 = vadd.f32 %v3893, %v4101
        %4103 = vmatmul.f32.gmra.mxu0 %v3992
        %v4104 = vpop.f32.mrf.mxu0
        %v4105 = vadd.f32 %v3896, %v4104
        %4106 = vmatmul.f32.gmra.mxu0 %v3995
        %v4107 = vpop.f32.mrf.mxu0
        %v4108 = vadd.f32 %v3899, %v4107
        %4109 = vmatmul.f32.gmra.mxu0 %v3998
        %v4110 = vpop.f32.mrf.mxu0
        %v4111 = vadd.f32 %v3902, %v4110
        %4112 = vdwg.mxu0
        %v4113 = vld [vmem:[#allocation2 + $0x2] sm:$0xff]
        %v4114 = vld [vmem:[#allocation2 + $0xa] sm:$0xff]
        %v4115 = vld [vmem:[#allocation2 + $0x1a] sm:$0xff]
        %v4116 = vld [vmem:[#allocation2 + $0x22] sm:$0xff]
        %v4117 = vld [vmem:[#allocation2 + $0x32] sm:$0xff]
        %v4118 = vld [vmem:[#allocation2 + $0x3a] sm:$0xff]
        %v4119 = vld [vmem:[#allocation2 + $0x4a] sm:$0xff]
        %v4120 = vld [vmem:[#allocation2 + $0x52] sm:$0xff]
        %v4121 = vld [vmem:[#allocation2 + $0x62] sm:$0xff]
        %v4122 = vld [vmem:[#allocation2 + $0x6a] sm:$0xff]
        %v4123 = vld [vmem:[#allocation2 + $0x7a] sm:$0xff]
        %v4124 = vld [vmem:[#allocation2 + $0x82] sm:$0xff]
        %v4125 = vld [vmem:[#allocation2 + $0x92] sm:$0xff]
        %v4126 = vld [vmem:[#allocation2 + $0x9a] sm:$0xff]
        %v4127 = vld [vmem:[#allocation2 + $0xaa] sm:$0xff]
        %v4128 = vld [vmem:[#allocation2 + $0xb2] sm:$0xff]
        %v4129 = vld [vmem:[#allocation2 + $0xc2] sm:$0xff]
        %v4130 = vld [vmem:[#allocation2 + $0xca] sm:$0xff]
        %v4131 = vld [vmem:[#allocation2 + $0xda] sm:$0xff]
        %v4132 = vld [vmem:[#allocation2 + $0xe2] sm:$0xff]
        %v4133 = vld [vmem:[#allocation2 + $0xf2] sm:$0xff]
        %v4134 = vld [vmem:[#allocation2 + $0xfa] sm:$0xff]
        %v4135 = vld [vmem:[#allocation2 + $0x10a] sm:$0xff]
        %v4136 = vld [vmem:[#allocation2 + $0x112] sm:$0xff]
        %v4137 = vld [vmem:[#allocation2 + $0x122] sm:$0xff]
        %v4138 = vld [vmem:[#allocation2 + $0x12a] sm:$0xff]
        %v4139 = vld [vmem:[#allocation2 + $0x13a] sm:$0xff]
        %v4140 = vld [vmem:[#allocation2 + $0x142] sm:$0xff]
        %v4141 = vld [vmem:[#allocation2 + $0x152] sm:$0xff]
        %v4142 = vld [vmem:[#allocation2 + $0x15a] sm:$0xff]
        %v4143 = vld [vmem:[#allocation2 + $0x16a] sm:$0xff]
        %v4144 = vld [vmem:[#allocation2 + $0x172] sm:$0xff]
        %v4145 = vld [vmem:[%s7 + $0x40] sm:$0xff]
        %v4146 = vld [vmem:[%s7 + $0x48] sm:$0xff]
        %v4147 = vld [vmem:[%s7 + $0x50] sm:$0xff]
        %v4148 = vld [vmem:[%s7 + $0x58] sm:$0xff]
        %v4150 = vsel %vm3534, %v4113, 0
        %v4153 = vsel %vm3534, %v4114, 0
        %v4156 = vsel %vm3534, %v4115, 0
        %v4159 = vsel %vm3534, %v4116, 0
        %v4162 = vsel %vm3534, %v4117, 0
        %v4165 = vsel %vm3534, %v4118, 0
        %v4168 = vsel %vm3534, %v4119, 0
        %v4171 = vsel %vm3534, %v4120, 0
        %v4174 = vsel %vm3534, %v4121, 0
        %v4177 = vsel %vm3534, %v4122, 0
        %v4180 = vsel %vm3534, %v4123, 0
        %v4183 = vsel %vm3534, %v4124, 0
        %v4186 = vsel %vm3534, %v4125, 0
        %v4189 = vsel %vm3534, %v4126, 0
        %v4192 = vsel %vm3534, %v4127, 0
        %v4195 = vsel %vm3534, %v4128, 0
        %v4198 = vsel %vm3534, %v4129, 0
        %v4201 = vsel %vm3534, %v4130, 0
        %v4204 = vsel %vm3534, %v4131, 0
        %v4207 = vsel %vm3534, %v4132, 0
        %v4210 = vsel %vm3534, %v4133, 0
        %v4213 = vsel %vm3534, %v4134, 0
        %v4216 = vsel %vm3534, %v4135, 0
        %v4219 = vsel %vm3534, %v4136, 0
        %v4222 = vsel %vm3534, %v4137, 0
        %v4225 = vsel %vm3534, %v4138, 0
        %v4228 = vsel %vm3534, %v4139, 0
        %v4231 = vsel %vm3534, %v4140, 0
        %v4234 = vsel %vm3534, %v4141, 0
        %v4237 = vsel %vm3534, %v4142, 0
        %v4240 = vsel %vm3534, %v4143, 0
        %v4243 = vsel %vm3534, %v4144, 0
        %4245 = vmatpush.msra.mxu0 0.0
        %4246 = vmatpush.msra.mxu0 0.0
        %4247 = vmatpush.msra.mxu0 0.0
        %4248 = vmatpush.msra.mxu0 0.0
        %4249 = vmatpush.msra.mxu0 0.0
        %4250 = vmatpush.msra.mxu0 0.0
        %4251 = vmatpush.msra.mxu0 0.0
        %4252 = vmatpush.msra.mxu0 0.0
        %4253 = vmatpush.msra.mxu0 0.0
        %4254 = vmatpush.msra.mxu0 0.0
        %4255 = vmatpush.msra.mxu0 0.0
        %4256 = vmatpush.msra.mxu0 0.0
        %4257 = vmatpush.msra.mxu0 %v4148
        %4258 = vmatpush.msra.mxu0 %v4147
        %4259 = vmatpush.msra.mxu0 %v4146
        %4260 = vmatpush.msra.mxu0 %v4145
        %4261 = vmatmul.f32.gmra.mxu0 %v4150
        %v4262 = vpop.f32.mrf.mxu0
        %v4263 = vadd.f32 0.0, %v4262
        %4264 = vmatmul.f32.gmra.mxu0 %v4153
        %v4265 = vpop.f32.mrf.mxu0
        %v4266 = vadd.f32 0.0, %v4265
        %4267 = vmatmul.f32.gmra.mxu0 %v4156
        %v4268 = vpop.f32.mrf.mxu0
        %v4269 = vadd.f32 0.0, %v4268
        %4270 = vmatmul.f32.gmra.mxu0 %v4159
        %v4271 = vpop.f32.mrf.mxu0
        %v4272 = vadd.f32 0.0, %v4271
        %4273 = vmatmul.f32.gmra.mxu0 %v4162
        %v4274 = vpop.f32.mrf.mxu0
        %v4275 = vadd.f32 0.0, %v4274
        %4276 = vmatmul.f32.gmra.mxu0 %v4165
        %v4277 = vpop.f32.mrf.mxu0
        %v4278 = vadd.f32 0.0, %v4277
        %4279 = vmatmul.f32.gmra.mxu0 %v4168
        %v4280 = vpop.f32.mrf.mxu0
        %v4281 = vadd.f32 0.0, %v4280
        %4282 = vmatmul.f32.gmra.mxu0 %v4171
        %v4283 = vpop.f32.mrf.mxu0
        %v4284 = vadd.f32 0.0, %v4283
        %4285 = vmatmul.f32.gmra.mxu0 %v4174
        %v4286 = vpop.f32.mrf.mxu0
        %v4287 = vadd.f32 0.0, %v4286
        %4288 = vmatmul.f32.gmra.mxu0 %v4177
        %v4289 = vpop.f32.mrf.mxu0
        %v4290 = vadd.f32 0.0, %v4289
        %4291 = vmatmul.f32.gmra.mxu0 %v4180
        %v4292 = vpop.f32.mrf.mxu0
        %v4293 = vadd.f32 0.0, %v4292
        %4294 = vmatmul.f32.gmra.mxu0 %v4183
        %v4295 = vpop.f32.mrf.mxu0
        %v4296 = vadd.f32 0.0, %v4295
        %4297 = vmatmul.f32.gmra.mxu0 %v4186
        %v4298 = vpop.f32.mrf.mxu0
        %v4299 = vadd.f32 0.0, %v4298
        %4300 = vmatmul.f32.gmra.mxu0 %v4189
        %v4301 = vpop.f32.mrf.mxu0
        %v4302 = vadd.f32 0.0, %v4301
        %4303 = vmatmul.f32.gmra.mxu0 %v4192
        %v4304 = vpop.f32.mrf.mxu0
        %v4305 = vadd.f32 0.0, %v4304
        %4306 = vmatmul.f32.gmra.mxu0 %v4195
        %v4307 = vpop.f32.mrf.mxu0
        %v4308 = vadd.f32 0.0, %v4307
        %4309 = vmatmul.f32.gmra.mxu0 %v4198
        %v4310 = vpop.f32.mrf.mxu0
        %v4311 = vadd.f32 0.0, %v4310
        %4312 = vmatmul.f32.gmra.mxu0 %v4201
        %v4313 = vpop.f32.mrf.mxu0
        %v4314 = vadd.f32 0.0, %v4313
        %4315 = vmatmul.f32.gmra.mxu0 %v4204
        %v4316 = vpop.f32.mrf.mxu0
        %v4317 = vadd.f32 0.0, %v4316
        %4318 = vmatmul.f32.gmra.mxu0 %v4207
        %v4319 = vpop.f32.mrf.mxu0
        %v4320 = vadd.f32 0.0, %v4319
        %4321 = vmatmul.f32.gmra.mxu0 %v4210
        %v4322 = vpop.f32.mrf.mxu0
        %v4323 = vadd.f32 0.0, %v4322
        %4324 = vmatmul.f32.gmra.mxu0 %v4213
        %v4325 = vpop.f32.mrf.mxu0
        %v4326 = vadd.f32 0.0, %v4325
        %4327 = vmatmul.f32.gmra.mxu0 %v4216
        %v4328 = vpop.f32.mrf.mxu0
        %v4329 = vadd.f32 0.0, %v4328
        %4330 = vmatmul.f32.gmra.mxu0 %v4219
        %v4331 = vpop.f32.mrf.mxu0
        %v4332 = vadd.f32 0.0, %v4331
        %4333 = vmatmul.f32.gmra.mxu0 %v4222
        %v4334 = vpop.f32.mrf.mxu0
        %v4335 = vadd.f32 0.0, %v4334
        %4336 = vmatmul.f32.gmra.mxu0 %v4225
        %v4337 = vpop.f32.mrf.mxu0
        %v4338 = vadd.f32 0.0, %v4337
        %4339 = vmatmul.f32.gmra.mxu0 %v4228
        %v4340 = vpop.f32.mrf.mxu0
        %v4341 = vadd.f32 0.0, %v4340
        %4342 = vmatmul.f32.gmra.mxu0 %v4231
        %v4343 = vpop.f32.mrf.mxu0
        %v4344 = vadd.f32 0.0, %v4343
        %4345 = vmatmul.f32.gmra.mxu0 %v4234
        %v4346 = vpop.f32.mrf.mxu0
        %v4347 = vadd.f32 0.0, %v4346
        %4348 = vmatmul.f32.gmra.mxu0 %v4237
        %v4349 = vpop.f32.mrf.mxu0
        %v4350 = vadd.f32 0.0, %v4349
        %4351 = vmatmul.f32.gmra.mxu0 %v4240
        %v4352 = vpop.f32.mrf.mxu0
        %v4353 = vadd.f32 0.0, %v4352
        %4354 = vmatmul.f32.gmra.mxu0 %v4243
        %v4355 = vpop.f32.mrf.mxu0
        %v4356 = vadd.f32 0.0, %v4355
        %4357 = vdwg.mxu0
        %v4358 = vadd.f32 %v4018, %v4263
        %v4359 = vadd.f32 %v4021, %v4266
        %v4360 = vadd.f32 %v4024, %v4269
        %v4361 = vadd.f32 %v4027, %v4272
        %v4362 = vadd.f32 %v4030, %v4275
        %v4363 = vadd.f32 %v4033, %v4278
        %v4364 = vadd.f32 %v4036, %v4281
        %v4365 = vadd.f32 %v4039, %v4284
        %v4366 = vadd.f32 %v4042, %v4287
        %v4367 = vadd.f32 %v4045, %v4290
        %v4368 = vadd.f32 %v4048, %v4293
        %v4369 = vadd.f32 %v4051, %v4296
        %v4370 = vadd.f32 %v4054, %v4299
        %v4371 = vadd.f32 %v4057, %v4302
        %v4372 = vadd.f32 %v4060, %v4305
        %v4373 = vadd.f32 %v4063, %v4308
        %v4374 = vadd.f32 %v4066, %v4311
        %v4375 = vadd.f32 %v4069, %v4314
        %v4376 = vadd.f32 %v4072, %v4317
        %v4377 = vadd.f32 %v4075, %v4320
        %v4378 = vadd.f32 %v4078, %v4323
        %v4379 = vadd.f32 %v4081, %v4326
        %v4380 = vadd.f32 %v4084, %v4329
        %v4381 = vadd.f32 %v4087, %v4332
        %v4382 = vadd.f32 %v4090, %v4335
        %v4383 = vadd.f32 %v4093, %v4338
        %v4384 = vadd.f32 %v4096, %v4341
        %v4385 = vadd.f32 %v4099, %v4344
        %v4386 = vadd.f32 %v4102, %v4347
        %v4387 = vadd.f32 %v4105, %v4350
        %v4388 = vadd.f32 %v4108, %v4353
        %v4389 = vadd.f32 %v4111, %v4356
        %v4390 = vld [vmem:[%s3590] sm:$0xff]
        %v4391 = vld [vmem:[%s3590 + $0x8] sm:$0xff]
        %v4392 = vld [vmem:[%s3590 + $0x18] sm:$0xff]
        %v4393 = vld [vmem:[%s3590 + $0x20] sm:$0xff]
        %v4394 = vld [vmem:[%s3590 + $0x30] sm:$0xff]
        %v4395 = vld [vmem:[%s3590 + $0x38] sm:$0xff]
        %v4396 = vld [vmem:[%s3590 + $0x48] sm:$0xff]
        %v4397 = vld [vmem:[%s3590 + $0x50] sm:$0xff]
        %v4398 = vld [vmem:[%s3590 + $0x60] sm:$0xff]
        %v4399 = vld [vmem:[%s3590 + $0x68] sm:$0xff]
        %v4400 = vld [vmem:[%s3590 + $0x78] sm:$0xff]
        %v4401 = vld [vmem:[%s3590 + $0x80] sm:$0xff]
        %v4402 = vld [vmem:[%s3590 + $0x90] sm:$0xff]
        %v4403 = vld [vmem:[%s3590 + $0x98] sm:$0xff]
        %v4404 = vld [vmem:[%s3590 + $0xa8] sm:$0xff]
        %v4405 = vld [vmem:[%s3590 + $0xb0] sm:$0xff]
        %v4406 = vld [vmem:[%s3590 + $0xc0] sm:$0xff]
        %v4407 = vld [vmem:[%s3590 + $0xc8] sm:$0xff]
        %v4408 = vld [vmem:[%s3590 + $0xd8] sm:$0xff]
        %v4409 = vld [vmem:[%s3590 + $0xe0] sm:$0xff]
        %v4410 = vld [vmem:[%s3590 + $0xf0] sm:$0xff]
        %v4411 = vld [vmem:[%s3590 + $0xf8] sm:$0xff]
        %v4412 = vld [vmem:[%s3590 + $0x108] sm:$0xff]
        %v4413 = vld [vmem:[%s3590 + $0x110] sm:$0xff]
        %v4414 = vld [vmem:[%s3590 + $0x120] sm:$0xff]
        %v4415 = vld [vmem:[%s3590 + $0x128] sm:$0xff]
        %v4416 = vld [vmem:[%s3590 + $0x138] sm:$0xff]
        %v4417 = vld [vmem:[%s3590 + $0x140] sm:$0xff]
        %v4418 = vld [vmem:[%s3590 + $0x150] sm:$0xff]
        %v4419 = vld [vmem:[%s3590 + $0x158] sm:$0xff]
        %v4420 = vld [vmem:[%s3590 + $0x168] sm:$0xff]
        %v4421 = vld [vmem:[%s3590 + $0x170] sm:$0xff]
        %v4422 = vld [vmem:[%s7 + $0x60] sm:$0xff]
        %v4423 = vld [vmem:[%s7 + $0x68] sm:$0xff]
        %v4424 = vld [vmem:[%s7 + $0x70] sm:$0xff]
        %v4425 = vld [vmem:[%s7 + $0x78] sm:$0xff]
        %v4427 = vsel %vm3534, %v4390, 0
        %v4430 = vsel %vm3534, %v4391, 0
        %v4433 = vsel %vm3534, %v4392, 0
        %v4436 = vsel %vm3534, %v4393, 0
        %v4439 = vsel %vm3534, %v4394, 0
        %v4442 = vsel %vm3534, %v4395, 0
        %v4445 = vsel %vm3534, %v4396, 0
        %v4448 = vsel %vm3534, %v4397, 0
        %v4451 = vsel %vm3534, %v4398, 0
        %v4454 = vsel %vm3534, %v4399, 0
        %v4457 = vsel %vm3534, %v4400, 0
        %v4460 = vsel %vm3534, %v4401, 0
        %v4463 = vsel %vm3534, %v4402, 0
        %v4466 = vsel %vm3534, %v4403, 0
        %v4469 = vsel %vm3534, %v4404, 0
        %v4472 = vsel %vm3534, %v4405, 0
        %v4475 = vsel %vm3534, %v4406, 0
        %v4478 = vsel %vm3534, %v4407, 0
        %v4481 = vsel %vm3534, %v4408, 0
        %v4484 = vsel %vm3534, %v4409, 0
        %v4487 = vsel %vm3534, %v4410, 0
        %v4490 = vsel %vm3534, %v4411, 0
        %v4493 = vsel %vm3534, %v4412, 0
        %v4496 = vsel %vm3534, %v4413, 0
        %v4499 = vsel %vm3534, %v4414, 0
        %v4502 = vsel %vm3534, %v4415, 0
        %v4505 = vsel %vm3534, %v4416, 0
        %v4508 = vsel %vm3534, %v4417, 0
        %v4511 = vsel %vm3534, %v4418, 0
        %v4514 = vsel %vm3534, %v4419, 0
        %v4517 = vsel %vm3534, %v4420, 0
        %v4520 = vsel %vm3534, %v4421, 0
        %4522 = vmatpush.msra.mxu0 0.0
        %4523 = vmatpush.msra.mxu0 0.0
        %4524 = vmatpush.msra.mxu0 0.0
        %4525 = vmatpush.msra.mxu0 0.0
        %4526 = vmatpush.msra.mxu0 0.0
        %4527 = vmatpush.msra.mxu0 0.0
        %4528 = vmatpush.msra.mxu0 0.0
        %4529 = vmatpush.msra.mxu0 0.0
        %4530 = vmatpush.msra.mxu0 0.0
        %4531 = vmatpush.msra.mxu0 0.0
        %4532 = vmatpush.msra.mxu0 0.0
        %4533 = vmatpush.msra.mxu0 0.0
        %4534 = vmatpush.msra.mxu0 %v4425
        %4535 = vmatpush.msra.mxu0 %v4424
        %4536 = vmatpush.msra.mxu0 %v4423
        %4537 = vmatpush.msra.mxu0 %v4422
        %4538 = vmatmul.f32.gmra.mxu0 %v4427
        %v4539 = vpop.f32.mrf.mxu0
        %v4540 = vadd.f32 0.0, %v4539
        %4541 = vmatmul.f32.gmra.mxu0 %v4430
        %v4542 = vpop.f32.mrf.mxu0
        %v4543 = vadd.f32 0.0, %v4542
        %4544 = vmatmul.f32.gmra.mxu0 %v4433
        %v4545 = vpop.f32.mrf.mxu0
        %v4546 = vadd.f32 0.0, %v4545
        %4547 = vmatmul.f32.gmra.mxu0 %v4436
        %v4548 = vpop.f32.mrf.mxu0
        %v4549 = vadd.f32 0.0, %v4548
        %4550 = vmatmul.f32.gmra.mxu0 %v4439
        %v4551 = vpop.f32.mrf.mxu0
        %v4552 = vadd.f32 0.0, %v4551
        %4553 = vmatmul.f32.gmra.mxu0 %v4442
        %v4554 = vpop.f32.mrf.mxu0
        %v4555 = vadd.f32 0.0, %v4554
        %4556 = vmatmul.f32.gmra.mxu0 %v4445
        %v4557 = vpop.f32.mrf.mxu0
        %v4558 = vadd.f32 0.0, %v4557
        %4559 = vmatmul.f32.gmra.mxu0 %v4448
        %v4560 = vpop.f32.mrf.mxu0
        %v4561 = vadd.f32 0.0, %v4560
        %4562 = vmatmul.f32.gmra.mxu0 %v4451
        %v4563 = vpop.f32.mrf.mxu0
        %v4564 = vadd.f32 0.0, %v4563
        %4565 = vmatmul.f32.gmra.mxu0 %v4454
        %v4566 = vpop.f32.mrf.mxu0
        %v4567 = vadd.f32 0.0, %v4566
        %4568 = vmatmul.f32.gmra.mxu0 %v4457
        %v4569 = vpop.f32.mrf.mxu0
        %v4570 = vadd.f32 0.0, %v4569
        %4571 = vmatmul.f32.gmra.mxu0 %v4460
        %v4572 = vpop.f32.mrf.mxu0
        %v4573 = vadd.f32 0.0, %v4572
        %4574 = vmatmul.f32.gmra.mxu0 %v4463
        %v4575 = vpop.f32.mrf.mxu0
        %v4576 = vadd.f32 0.0, %v4575
        %4577 = vmatmul.f32.gmra.mxu0 %v4466
        %v4578 = vpop.f32.mrf.mxu0
        %v4579 = vadd.f32 0.0, %v4578
        %4580 = vmatmul.f32.gmra.mxu0 %v4469
        %v4581 = vpop.f32.mrf.mxu0
        %v4582 = vadd.f32 0.0, %v4581
        %4583 = vmatmul.f32.gmra.mxu0 %v4472
        %v4584 = vpop.f32.mrf.mxu0
        %v4585 = vadd.f32 0.0, %v4584
        %4586 = vmatmul.f32.gmra.mxu0 %v4475
        %v4587 = vpop.f32.mrf.mxu0
        %v4588 = vadd.f32 0.0, %v4587
        %4589 = vmatmul.f32.gmra.mxu0 %v4478
        %v4590 = vpop.f32.mrf.mxu0
        %v4591 = vadd.f32 0.0, %v4590
        %4592 = vmatmul.f32.gmra.mxu0 %v4481
        %v4593 = vpop.f32.mrf.mxu0
        %v4594 = vadd.f32 0.0, %v4593
        %4595 = vmatmul.f32.gmra.mxu0 %v4484
        %v4596 = vpop.f32.mrf.mxu0
        %v4597 = vadd.f32 0.0, %v4596
        %4598 = vmatmul.f32.gmra.mxu0 %v4487
        %v4599 = vpop.f32.mrf.mxu0
        %v4600 = vadd.f32 0.0, %v4599
        %4601 = vmatmul.f32.gmra.mxu0 %v4490
        %v4602 = vpop.f32.mrf.mxu0
        %v4603 = vadd.f32 0.0, %v4602
        %4604 = vmatmul.f32.gmra.mxu0 %v4493
        %v4605 = vpop.f32.mrf.mxu0
        %v4606 = vadd.f32 0.0, %v4605
        %4607 = vmatmul.f32.gmra.mxu0 %v4496
        %v4608 = vpop.f32.mrf.mxu0
        %v4609 = vadd.f32 0.0, %v4608
        %4610 = vmatmul.f32.gmra.mxu0 %v4499
        %v4611 = vpop.f32.mrf.mxu0
        %v4612 = vadd.f32 0.0, %v4611
        %4613 = vmatmul.f32.gmra.mxu0 %v4502
        %v4614 = vpop.f32.mrf.mxu0
        %v4615 = vadd.f32 0.0, %v4614
        %4616 = vmatmul.f32.gmra.mxu0 %v4505
        %v4617 = vpop.f32.mrf.mxu0
        %v4618 = vadd.f32 0.0, %v4617
        %4619 = vmatmul.f32.gmra.mxu0 %v4508
        %v4620 = vpop.f32.mrf.mxu0
        %v4621 = vadd.f32 0.0, %v4620
        %4622 = vmatmul.f32.gmra.mxu0 %v4511
        %v4623 = vpop.f32.mrf.mxu0
        %v4624 = vadd.f32 0.0, %v4623
        %4625 = vmatmul.f32.gmra.mxu0 %v4514
        %v4626 = vpop.f32.mrf.mxu0
        %v4627 = vadd.f32 0.0, %v4626
        %4628 = vmatmul.f32.gmra.mxu0 %v4517
        %v4629 = vpop.f32.mrf.mxu0
        %v4630 = vadd.f32 0.0, %v4629
        %4631 = vmatmul.f32.gmra.mxu0 %v4520
        %v4632 = vpop.f32.mrf.mxu0
        %v4633 = vadd.f32 0.0, %v4632
        %4634 = vdwg.mxu0
        %v4635 = vadd.f32 %v4358, %v4540
        %v4636 = vadd.f32 %v4359, %v4543
        %v4637 = vadd.f32 %v4360, %v4546
        %v4638 = vadd.f32 %v4361, %v4549
        %v4639 = vadd.f32 %v4362, %v4552
        %v4640 = vadd.f32 %v4363, %v4555
        %v4641 = vadd.f32 %v4364, %v4558
        %v4642 = vadd.f32 %v4365, %v4561
        %v4643 = vadd.f32 %v4366, %v4564
        %v4644 = vadd.f32 %v4367, %v4567
        %v4645 = vadd.f32 %v4368, %v4570
        %v4646 = vadd.f32 %v4369, %v4573
        %v4647 = vadd.f32 %v4370, %v4576
        %v4648 = vadd.f32 %v4371, %v4579
        %v4649 = vadd.f32 %v4372, %v4582
        %v4650 = vadd.f32 %v4373, %v4585
        %v4651 = vadd.f32 %v4374, %v4588
        %v4652 = vadd.f32 %v4375, %v4591
        %v4653 = vadd.f32 %v4376, %v4594
        %v4654 = vadd.f32 %v4377, %v4597
        %v4655 = vadd.f32 %v4378, %v4600
        %v4656 = vadd.f32 %v4379, %v4603
        %v4657 = vadd.f32 %v4380, %v4606
        %v4658 = vadd.f32 %v4381, %v4609
        %v4659 = vadd.f32 %v4382, %v4612
        %v4660 = vadd.f32 %v4383, %v4615
        %v4661 = vadd.f32 %v4384, %v4618
        %v4662 = vadd.f32 %v4385, %v4621
        %v4663 = vadd.f32 %v4386, %v4624
        %v4664 = vadd.f32 %v4387, %v4627
        %v4665 = vadd.f32 %v4388, %v4630
        %v4666 = vadd.f32 %v4389, %v4633
        %v4667 = vld [vmem:[%s3590 + $0x1] sm:$0xff]
        %v4668 = vld [vmem:[%s3590 + $0x9] sm:$0xff]
        %v4669 = vld [vmem:[%s3590 + $0x19] sm:$0xff]
        %v4670 = vld [vmem:[%s3590 + $0x21] sm:$0xff]
        %v4671 = vld [vmem:[%s3590 + $0x31] sm:$0xff]
        %v4672 = vld [vmem:[%s3590 + $0x39] sm:$0xff]
        %v4673 = vld [vmem:[%s3590 + $0x49] sm:$0xff]
        %v4674 = vld [vmem:[%s3590 + $0x51] sm:$0xff]
        %v4675 = vld [vmem:[%s3590 + $0x61] sm:$0xff]
        %v4676 = vld [vmem:[%s3590 + $0x69] sm:$0xff]
        %v4677 = vld [vmem:[%s3590 + $0x79] sm:$0xff]
        %v4678 = vld [vmem:[%s3590 + $0x81] sm:$0xff]
        %v4679 = vld [vmem:[%s3590 + $0x91] sm:$0xff]
        %v4680 = vld [vmem:[%s3590 + $0x99] sm:$0xff]
        %v4681 = vld [vmem:[%s3590 + $0xa9] sm:$0xff]
        %v4682 = vld [vmem:[%s3590 + $0xb1] sm:$0xff]
        %v4683 = vld [vmem:[%s3590 + $0xc1] sm:$0xff]
        %v4684 = vld [vmem:[%s3590 + $0xc9] sm:$0xff]
        %v4685 = vld [vmem:[%s3590 + $0xd9] sm:$0xff]
        %v4686 = vld [vmem:[%s3590 + $0xe1] sm:$0xff]
        %v4687 = vld [vmem:[%s3590 + $0xf1] sm:$0xff]
        %v4688 = vld [vmem:[%s3590 + $0xf9] sm:$0xff]
        %v4689 = vld [vmem:[%s3590 + $0x109] sm:$0xff]
        %v4690 = vld [vmem:[%s3590 + $0x111] sm:$0xff]
        %v4691 = vld [vmem:[%s3590 + $0x121] sm:$0xff]
        %v4692 = vld [vmem:[%s3590 + $0x129] sm:$0xff]
        %v4693 = vld [vmem:[%s3590 + $0x139] sm:$0xff]
        %v4694 = vld [vmem:[%s3590 + $0x141] sm:$0xff]
        %v4695 = vld [vmem:[%s3590 + $0x151] sm:$0xff]
        %v4696 = vld [vmem:[%s3590 + $0x159] sm:$0xff]
        %v4697 = vld [vmem:[%s3590 + $0x169] sm:$0xff]
        %v4698 = vld [vmem:[%s3590 + $0x171] sm:$0xff]
        %v4699 = vld [vmem:[%s7 + $0x80] sm:$0xff]
        %v4700 = vld [vmem:[%s7 + $0x88] sm:$0xff]
        %v4701 = vld [vmem:[%s7 + $0x90] sm:$0xff]
        %v4702 = vld [vmem:[%s7 + $0x98] sm:$0xff]
        %v4704 = vsel %vm3534, %v4667, 0
        %v4707 = vsel %vm3534, %v4668, 0
        %v4710 = vsel %vm3534, %v4669, 0
        %v4713 = vsel %vm3534, %v4670, 0
        %v4716 = vsel %vm3534, %v4671, 0
        %v4719 = vsel %vm3534, %v4672, 0
        %v4722 = vsel %vm3534, %v4673, 0
        %v4725 = vsel %vm3534, %v4674, 0
        %v4728 = vsel %vm3534, %v4675, 0
        %v4731 = vsel %vm3534, %v4676, 0
        %v4734 = vsel %vm3534, %v4677, 0
        %v4737 = vsel %vm3534, %v4678, 0
        %v4740 = vsel %vm3534, %v4679, 0
        %v4743 = vsel %vm3534, %v4680, 0
        %v4746 = vsel %vm3534, %v4681, 0
        %v4749 = vsel %vm3534, %v4682, 0
        %v4752 = vsel %vm3534, %v4683, 0
        %v4755 = vsel %vm3534, %v4684, 0
        %v4758 = vsel %vm3534, %v4685, 0
        %v4761 = vsel %vm3534, %v4686, 0
        %v4764 = vsel %vm3534, %v4687, 0
        %v4767 = vsel %vm3534, %v4688, 0
        %v4770 = vsel %vm3534, %v4689, 0
        %v4773 = vsel %vm3534, %v4690, 0
        %v4776 = vsel %vm3534, %v4691, 0
        %v4779 = vsel %vm3534, %v4692, 0
        %v4782 = vsel %vm3534, %v4693, 0
        %v4785 = vsel %vm3534, %v4694, 0
        %v4788 = vsel %vm3534, %v4695, 0
        %v4791 = vsel %vm3534, %v4696, 0
        %v4794 = vsel %vm3534, %v4697, 0
        %v4797 = vsel %vm3534, %v4698, 0
        %4799 = vmatpush.msra.mxu0 0.0
        %4800 = vmatpush.msra.mxu0 0.0
        %4801 = vmatpush.msra.mxu0 0.0
        %4802 = vmatpush.msra.mxu0 0.0
        %4803 = vmatpush.msra.mxu0 0.0
        %4804 = vmatpush.msra.mxu0 0.0
        %4805 = vmatpush.msra.mxu0 0.0
        %4806 = vmatpush.msra.mxu0 0.0
        %4807 = vmatpush.msra.mxu0 0.0
        %4808 = vmatpush.msra.mxu0 0.0
        %4809 = vmatpush.msra.mxu0 0.0
        %4810 = vmatpush.msra.mxu0 0.0
        %4811 = vmatpush.msra.mxu0 %v4702
        %4812 = vmatpush.msra.mxu0 %v4701
        %4813 = vmatpush.msra.mxu0 %v4700
        %4814 = vmatpush.msra.mxu0 %v4699
        %4815 = vmatmul.f32.gmra.mxu0 %v4704
        %v4816 = vpop.f32.mrf.mxu0
        %v4817 = vadd.f32 0.0, %v4816
        %4818 = vmatmul.f32.gmra.mxu0 %v4707
        %v4819 = vpop.f32.mrf.mxu0
        %v4820 = vadd.f32 0.0, %v4819
        %4821 = vmatmul.f32.gmra.mxu0 %v4710
        %v4822 = vpop.f32.mrf.mxu0
        %v4823 = vadd.f32 0.0, %v4822
        %4824 = vmatmul.f32.gmra.mxu0 %v4713
        %v4825 = vpop.f32.mrf.mxu0
        %v4826 = vadd.f32 0.0, %v4825
        %4827 = vmatmul.f32.gmra.mxu0 %v4716
        %v4828 = vpop.f32.mrf.mxu0
        %v4829 = vadd.f32 0.0, %v4828
        %4830 = vmatmul.f32.gmra.mxu0 %v4719
        %v4831 = vpop.f32.mrf.mxu0
        %v4832 = vadd.f32 0.0, %v4831
        %4833 = vmatmul.f32.gmra.mxu0 %v4722
        %v4834 = vpop.f32.mrf.mxu0
        %v4835 = vadd.f32 0.0, %v4834
        %4836 = vmatmul.f32.gmra.mxu0 %v4725
        %v4837 = vpop.f32.mrf.mxu0
        %v4838 = vadd.f32 0.0, %v4837
        %4839 = vmatmul.f32.gmra.mxu0 %v4728
        %v4840 = vpop.f32.mrf.mxu0
        %v4841 = vadd.f32 0.0, %v4840
        %4842 = vmatmul.f32.gmra.mxu0 %v4731
        %v4843 = vpop.f32.mrf.mxu0
        %v4844 = vadd.f32 0.0, %v4843
        %4845 = vmatmul.f32.gmra.mxu0 %v4734
        %v4846 = vpop.f32.mrf.mxu0
        %v4847 = vadd.f32 0.0, %v4846
        %4848 = vmatmul.f32.gmra.mxu0 %v4737
        %v4849 = vpop.f32.mrf.mxu0
        %v4850 = vadd.f32 0.0, %v4849
        %4851 = vmatmul.f32.gmra.mxu0 %v4740
        %v4852 = vpop.f32.mrf.mxu0
        %v4853 = vadd.f32 0.0, %v4852
        %4854 = vmatmul.f32.gmra.mxu0 %v4743
        %v4855 = vpop.f32.mrf.mxu0
        %v4856 = vadd.f32 0.0, %v4855
        %4857 = vmatmul.f32.gmra.mxu0 %v4746
        %v4858 = vpop.f32.mrf.mxu0
        %v4859 = vadd.f32 0.0, %v4858
        %4860 = vmatmul.f32.gmra.mxu0 %v4749
        %v4861 = vpop.f32.mrf.mxu0
        %v4862 = vadd.f32 0.0, %v4861
        %4863 = vmatmul.f32.gmra.mxu0 %v4752
        %v4864 = vpop.f32.mrf.mxu0
        %v4865 = vadd.f32 0.0, %v4864
        %4866 = vmatmul.f32.gmra.mxu0 %v4755
        %v4867 = vpop.f32.mrf.mxu0
        %v4868 = vadd.f32 0.0, %v4867
        %4869 = vmatmul.f32.gmra.mxu0 %v4758
        %v4870 = vpop.f32.mrf.mxu0
        %v4871 = vadd.f32 0.0, %v4870
        %4872 = vmatmul.f32.gmra.mxu0 %v4761
        %v4873 = vpop.f32.mrf.mxu0
        %v4874 = vadd.f32 0.0, %v4873
        %4875 = vmatmul.f32.gmra.mxu0 %v4764
        %v4876 = vpop.f32.mrf.mxu0
        %v4877 = vadd.f32 0.0, %v4876
        %4878 = vmatmul.f32.gmra.mxu0 %v4767
        %v4879 = vpop.f32.mrf.mxu0
        %v4880 = vadd.f32 0.0, %v4879
        %4881 = vmatmul.f32.gmra.mxu0 %v4770
        %v4882 = vpop.f32.mrf.mxu0
        %v4883 = vadd.f32 0.0, %v4882
        %4884 = vmatmul.f32.gmra.mxu0 %v4773
        %v4885 = vpop.f32.mrf.mxu0
        %v4886 = vadd.f32 0.0, %v4885
        %4887 = vmatmul.f32.gmra.mxu0 %v4776
        %v4888 = vpop.f32.mrf.mxu0
        %v4889 = vadd.f32 0.0, %v4888
        %4890 = vmatmul.f32.gmra.mxu0 %v4779
        %v4891 = vpop.f32.mrf.mxu0
        %v4892 = vadd.f32 0.0, %v4891
        %4893 = vmatmul.f32.gmra.mxu0 %v4782
        %v4894 = vpop.f32.mrf.mxu0
        %v4895 = vadd.f32 0.0, %v4894
        %4896 = vmatmul.f32.gmra.mxu0 %v4785
        %v4897 = vpop.f32.mrf.mxu0
        %v4898 = vadd.f32 0.0, %v4897
        %4899 = vmatmul.f32.gmra.mxu0 %v4788
        %v4900 = vpop.f32.mrf.mxu0
        %v4901 = vadd.f32 0.0, %v4900
        %4902 = vmatmul.f32.gmra.mxu0 %v4791
        %v4903 = vpop.f32.mrf.mxu0
        %v4904 = vadd.f32 0.0, %v4903
        %4905 = vmatmul.f32.gmra.mxu0 %v4794
        %v4906 = vpop.f32.mrf.mxu0
        %v4907 = vadd.f32 0.0, %v4906
        %4908 = vmatmul.f32.gmra.mxu0 %v4797
        %v4909 = vpop.f32.mrf.mxu0
        %v4910 = vadd.f32 0.0, %v4909
        %4911 = vdwg.mxu0
        %v4912 = vadd.f32 %v4635, %v4817
        %v4913 = vadd.f32 %v4636, %v4820
        %v4914 = vadd.f32 %v4637, %v4823
        %v4915 = vadd.f32 %v4638, %v4826
        %v4916 = vadd.f32 %v4639, %v4829
        %v4917 = vadd.f32 %v4640, %v4832
        %v4918 = vadd.f32 %v4641, %v4835
        %v4919 = vadd.f32 %v4642, %v4838
        %v4920 = vadd.f32 %v4643, %v4841
        %v4921 = vadd.f32 %v4644, %v4844
        %v4922 = vadd.f32 %v4645, %v4847
        %v4923 = vadd.f32 %v4646, %v4850
        %v4924 = vadd.f32 %v4647, %v4853
        %v4925 = vadd.f32 %v4648, %v4856
        %v4926 = vadd.f32 %v4649, %v4859
        %v4927 = vadd.f32 %v4650, %v4862
        %v4928 = vadd.f32 %v4651, %v4865
        %v4929 = vadd.f32 %v4652, %v4868
        %v4930 = vadd.f32 %v4653, %v4871
        %v4931 = vadd.f32 %v4654, %v4874
        %v4932 = vadd.f32 %v4655, %v4877
        %v4933 = vadd.f32 %v4656, %v4880
        %v4934 = vadd.f32 %v4657, %v4883
        %v4935 = vadd.f32 %v4658, %v4886
        %v4936 = vadd.f32 %v4659, %v4889
        %v4937 = vadd.f32 %v4660, %v4892
        %v4938 = vadd.f32 %v4661, %v4895
        %v4939 = vadd.f32 %v4662, %v4898
        %v4940 = vadd.f32 %v4663, %v4901
        %v4941 = vadd.f32 %v4664, %v4904
        %v4942 = vadd.f32 %v4665, %v4907
        %v4943 = vadd.f32 %v4666, %v4910
        %v4944 = vld [vmem:[%s3590 + $0x2] sm:$0xff]
        %v4945 = vld [vmem:[%s3590 + $0xa] sm:$0xff]
        %v4946 = vld [vmem:[%s3590 + $0x1a] sm:$0xff]
        %v4947 = vld [vmem:[%s3590 + $0x22] sm:$0xff]
        %v4948 = vld [vmem:[%s3590 + $0x32] sm:$0xff]
        %v4949 = vld [vmem:[%s3590 + $0x3a] sm:$0xff]
        %v4950 = vld [vmem:[%s3590 + $0x4a] sm:$0xff]
        %v4951 = vld [vmem:[%s3590 + $0x52] sm:$0xff]
        %v4952 = vld [vmem:[%s3590 + $0x62] sm:$0xff]
        %v4953 = vld [vmem:[%s3590 + $0x6a] sm:$0xff]
        %v4954 = vld [vmem:[%s3590 + $0x7a] sm:$0xff]
        %v4955 = vld [vmem:[%s3590 + $0x82] sm:$0xff]
        %v4956 = vld [vmem:[%s3590 + $0x92] sm:$0xff]
        %v4957 = vld [vmem:[%s3590 + $0x9a] sm:$0xff]
        %v4958 = vld [vmem:[%s3590 + $0xaa] sm:$0xff]
        %v4959 = vld [vmem:[%s3590 + $0xb2] sm:$0xff]
        %v4960 = vld [vmem:[%s3590 + $0xc2] sm:$0xff]
        %v4961 = vld [vmem:[%s3590 + $0xca] sm:$0xff]
        %v4962 = vld [vmem:[%s3590 + $0xda] sm:$0xff]
        %v4963 = vld [vmem:[%s3590 + $0xe2] sm:$0xff]
        %v4964 = vld [vmem:[%s3590 + $0xf2] sm:$0xff]
        %v4965 = vld [vmem:[%s3590 + $0xfa] sm:$0xff]
        %v4966 = vld [vmem:[%s3590 + $0x10a] sm:$0xff]
        %v4967 = vld [vmem:[%s3590 + $0x112] sm:$0xff]
        %v4968 = vld [vmem:[%s3590 + $0x122] sm:$0xff]
        %v4969 = vld [vmem:[%s3590 + $0x12a] sm:$0xff]
        %v4970 = vld [vmem:[%s3590 + $0x13a] sm:$0xff]
        %v4971 = vld [vmem:[%s3590 + $0x142] sm:$0xff]
        %v4972 = vld [vmem:[%s3590 + $0x152] sm:$0xff]
        %v4973 = vld [vmem:[%s3590 + $0x15a] sm:$0xff]
        %v4974 = vld [vmem:[%s3590 + $0x16a] sm:$0xff]
        %v4975 = vld [vmem:[%s3590 + $0x172] sm:$0xff]
        %v4976 = vld [vmem:[%s7 + $0xa0] sm:$0xff]
        %v4977 = vld [vmem:[%s7 + $0xa8] sm:$0xff]
        %v4978 = vld [vmem:[%s7 + $0xb0] sm:$0xff]
        %v4979 = vld [vmem:[%s7 + $0xb8] sm:$0xff]
        %v4981 = vsel %vm3534, %v4944, 0
        %v4984 = vsel %vm3534, %v4945, 0
        %v4987 = vsel %vm3534, %v4946, 0
        %v4990 = vsel %vm3534, %v4947, 0
        %v4993 = vsel %vm3534, %v4948, 0
        %v4996 = vsel %vm3534, %v4949, 0
        %v4999 = vsel %vm3534, %v4950, 0
        %v5002 = vsel %vm3534, %v4951, 0
        %v5005 = vsel %vm3534, %v4952, 0
        %v5008 = vsel %vm3534, %v4953, 0
        %v5011 = vsel %vm3534, %v4954, 0
        %v5014 = vsel %vm3534, %v4955, 0
        %v5017 = vsel %vm3534, %v4956, 0
        %v5020 = vsel %vm3534, %v4957, 0
        %v5023 = vsel %vm3534, %v4958, 0
        %v5026 = vsel %vm3534, %v4959, 0
        %v5029 = vsel %vm3534, %v4960, 0
        %v5032 = vsel %vm3534, %v4961, 0
        %v5035 = vsel %vm3534, %v4962, 0
        %v5038 = vsel %vm3534, %v4963, 0
        %v5041 = vsel %vm3534, %v4964, 0
        %v5044 = vsel %vm3534, %v4965, 0
        %v5047 = vsel %vm3534, %v4966, 0
        %v5050 = vsel %vm3534, %v4967, 0
        %v5053 = vsel %vm3534, %v4968, 0
        %v5056 = vsel %vm3534, %v4969, 0
        %v5059 = vsel %vm3534, %v4970, 0
        %v5062 = vsel %vm3534, %v4971, 0
        %v5065 = vsel %vm3534, %v4972, 0
        %v5068 = vsel %vm3534, %v4973, 0
        %v5071 = vsel %vm3534, %v4974, 0
        %v5074 = vsel %vm3534, %v4975, 0
        %5076 = vmatpush.msra.mxu0 0.0
        %5077 = vmatpush.msra.mxu0 0.0
        %5078 = vmatpush.msra.mxu0 0.0
        %5079 = vmatpush.msra.mxu0 0.0
        %5080 = vmatpush.msra.mxu0 0.0
        %5081 = vmatpush.msra.mxu0 0.0
        %5082 = vmatpush.msra.mxu0 0.0
        %5083 = vmatpush.msra.mxu0 0.0
        %5084 = vmatpush.msra.mxu0 0.0
        %5085 = vmatpush.msra.mxu0 0.0
        %5086 = vmatpush.msra.mxu0 0.0
        %5087 = vmatpush.msra.mxu0 0.0
        %5088 = vmatpush.msra.mxu0 %v4979
        %5089 = vmatpush.msra.mxu0 %v4978
        %5090 = vmatpush.msra.mxu0 %v4977
        %5091 = vmatpush.msra.mxu0 %v4976
        %5092 = vmatmul.f32.gmra.mxu0 %v4981
        %v5093 = vpop.f32.mrf.mxu0
        %v5094 = vadd.f32 0.0, %v5093
        %5095 = vmatmul.f32.gmra.mxu0 %v4984
        %v5096 = vpop.f32.mrf.mxu0
        %v5097 = vadd.f32 0.0, %v5096
        %5098 = vmatmul.f32.gmra.mxu0 %v4987
        %v5099 = vpop.f32.mrf.mxu0
        %v5100 = vadd.f32 0.0, %v5099
        %5101 = vmatmul.f32.gmra.mxu0 %v4990
        %v5102 = vpop.f32.mrf.mxu0
        %v5103 = vadd.f32 0.0, %v5102
        %5104 = vmatmul.f32.gmra.mxu0 %v4993
        %v5105 = vpop.f32.mrf.mxu0
        %v5106 = vadd.f32 0.0, %v5105
        %5107 = vmatmul.f32.gmra.mxu0 %v4996
        %v5108 = vpop.f32.mrf.mxu0
        %v5109 = vadd.f32 0.0, %v5108
        %5110 = vmatmul.f32.gmra.mxu0 %v4999
        %v5111 = vpop.f32.mrf.mxu0
        %v5112 = vadd.f32 0.0, %v5111
        %5113 = vmatmul.f32.gmra.mxu0 %v5002
        %v5114 = vpop.f32.mrf.mxu0
        %v5115 = vadd.f32 0.0, %v5114
        %5116 = vmatmul.f32.gmra.mxu0 %v5005
        %v5117 = vpop.f32.mrf.mxu0
        %v5118 = vadd.f32 0.0, %v5117
        %5119 = vmatmul.f32.gmra.mxu0 %v5008
        %v5120 = vpop.f32.mrf.mxu0
        %v5121 = vadd.f32 0.0, %v5120
        %5122 = vmatmul.f32.gmra.mxu0 %v5011
        %v5123 = vpop.f32.mrf.mxu0
        %v5124 = vadd.f32 0.0, %v5123
        %5125 = vmatmul.f32.gmra.mxu0 %v5014
        %v5126 = vpop.f32.mrf.mxu0
        %v5127 = vadd.f32 0.0, %v5126
        %5128 = vmatmul.f32.gmra.mxu0 %v5017
        %v5129 = vpop.f32.mrf.mxu0
        %v5130 = vadd.f32 0.0, %v5129
        %5131 = vmatmul.f32.gmra.mxu0 %v5020
        %v5132 = vpop.f32.mrf.mxu0
        %v5133 = vadd.f32 0.0, %v5132
        %5134 = vmatmul.f32.gmra.mxu0 %v5023
        %v5135 = vpop.f32.mrf.mxu0
        %v5136 = vadd.f32 0.0, %v5135
        %5137 = vmatmul.f32.gmra.mxu0 %v5026
        %v5138 = vpop.f32.mrf.mxu0
        %v5139 = vadd.f32 0.0, %v5138
        %5140 = vmatmul.f32.gmra.mxu0 %v5029
        %v5141 = vpop.f32.mrf.mxu0
        %v5142 = vadd.f32 0.0, %v5141
        %5143 = vmatmul.f32.gmra.mxu0 %v5032
        %v5144 = vpop.f32.mrf.mxu0
        %v5145 = vadd.f32 0.0, %v5144
        %5146 = vmatmul.f32.gmra.mxu0 %v5035
        %v5147 = vpop.f32.mrf.mxu0
        %v5148 = vadd.f32 0.0, %v5147
        %5149 = vmatmul.f32.gmra.mxu0 %v5038
        %v5150 = vpop.f32.mrf.mxu0
        %v5151 = vadd.f32 0.0, %v5150
        %5152 = vmatmul.f32.gmra.mxu0 %v5041
        %v5153 = vpop.f32.mrf.mxu0
        %v5154 = vadd.f32 0.0, %v5153
        %5155 = vmatmul.f32.gmra.mxu0 %v5044
        %v5156 = vpop.f32.mrf.mxu0
        %v5157 = vadd.f32 0.0, %v5156
        %5158 = vmatmul.f32.gmra.mxu0 %v5047
        %v5159 = vpop.f32.mrf.mxu0
        %v5160 = vadd.f32 0.0, %v5159
        %5161 = vmatmul.f32.gmra.mxu0 %v5050
        %v5162 = vpop.f32.mrf.mxu0
        %v5163 = vadd.f32 0.0, %v5162
        %5164 = vmatmul.f32.gmra.mxu0 %v5053
        %v5165 = vpop.f32.mrf.mxu0
        %v5166 = vadd.f32 0.0, %v5165
        %5167 = vmatmul.f32.gmra.mxu0 %v5056
        %v5168 = vpop.f32.mrf.mxu0
        %v5169 = vadd.f32 0.0, %v5168
        %5170 = vmatmul.f32.gmra.mxu0 %v5059
        %v5171 = vpop.f32.mrf.mxu0
        %v5172 = vadd.f32 0.0, %v5171
        %5173 = vmatmul.f32.gmra.mxu0 %v5062
        %v5174 = vpop.f32.mrf.mxu0
        %v5175 = vadd.f32 0.0, %v5174
        %5176 = vmatmul.f32.gmra.mxu0 %v5065
        %v5177 = vpop.f32.mrf.mxu0
        %v5178 = vadd.f32 0.0, %v5177
        %5179 = vmatmul.f32.gmra.mxu0 %v5068
        %v5180 = vpop.f32.mrf.mxu0
        %v5181 = vadd.f32 0.0, %v5180
        %5182 = vmatmul.f32.gmra.mxu0 %v5071
        %v5183 = vpop.f32.mrf.mxu0
        %v5184 = vadd.f32 0.0, %v5183
        %5185 = vmatmul.f32.gmra.mxu0 %v5074
        %v5186 = vpop.f32.mrf.mxu0
        %v5187 = vadd.f32 0.0, %v5186
        %5188 = vdwg.mxu0
        %v5189 = vadd.f32 %v4912, %v5094
        %v5190 = vadd.f32 %v4913, %v5097
        %v5191 = vadd.f32 %v4914, %v5100
        %v5192 = vadd.f32 %v4915, %v5103
        %v5193 = vadd.f32 %v4916, %v5106
        %v5194 = vadd.f32 %v4917, %v5109
        %v5195 = vadd.f32 %v4918, %v5112
        %v5196 = vadd.f32 %v4919, %v5115
        %v5197 = vadd.f32 %v4920, %v5118
        %v5198 = vadd.f32 %v4921, %v5121
        %v5199 = vadd.f32 %v4922, %v5124
        %v5200 = vadd.f32 %v4923, %v5127
        %v5201 = vadd.f32 %v4924, %v5130
        %v5202 = vadd.f32 %v4925, %v5133
        %v5203 = vadd.f32 %v4926, %v5136
        %v5204 = vadd.f32 %v4927, %v5139
        %v5205 = vadd.f32 %v4928, %v5142
        %v5206 = vadd.f32 %v4929, %v5145
        %v5207 = vadd.f32 %v4930, %v5148
        %v5208 = vadd.f32 %v4931, %v5151
        %v5209 = vadd.f32 %v4932, %v5154
        %v5210 = vadd.f32 %v4933, %v5157
        %v5211 = vadd.f32 %v4934, %v5160
        %v5212 = vadd.f32 %v4935, %v5163
        %v5213 = vadd.f32 %v4936, %v5166
        %v5214 = vadd.f32 %v4937, %v5169
        %v5215 = vadd.f32 %v4938, %v5172
        %v5216 = vadd.f32 %v4939, %v5175
        %v5217 = vadd.f32 %v4940, %v5178
        %v5218 = vadd.f32 %v4941, %v5181
        %v5219 = vadd.f32 %v4942, %v5184
        %v5220 = vadd.f32 %v4943, %v5187
        %s5221 = scalar_lea.vmem [#allocation2], 48
        %v5222 = vld [vmem:[%s5221] sm:$0xff]
        %v5223 = vld [vmem:[%s5221 + $0x8] sm:$0xff]
        %v5224 = vld [vmem:[%s5221 + $0x18] sm:$0xff]
        %v5225 = vld [vmem:[%s5221 + $0x20] sm:$0xff]
        %v5226 = vld [vmem:[%s5221 + $0x30] sm:$0xff]
        %v5227 = vld [vmem:[%s5221 + $0x38] sm:$0xff]
        %v5228 = vld [vmem:[%s5221 + $0x48] sm:$0xff]
        %v5229 = vld [vmem:[%s5221 + $0x50] sm:$0xff]
        %v5230 = vld [vmem:[%s5221 + $0x60] sm:$0xff]
        %v5231 = vld [vmem:[%s5221 + $0x68] sm:$0xff]
        %v5232 = vld [vmem:[%s5221 + $0x78] sm:$0xff]
        %v5233 = vld [vmem:[%s5221 + $0x80] sm:$0xff]
        %v5234 = vld [vmem:[%s5221 + $0x90] sm:$0xff]
        %v5235 = vld [vmem:[%s5221 + $0x98] sm:$0xff]
        %v5236 = vld [vmem:[%s5221 + $0xa8] sm:$0xff]
        %v5237 = vld [vmem:[%s5221 + $0xb0] sm:$0xff]
        %v5238 = vld [vmem:[%s5221 + $0xc0] sm:$0xff]
        %v5239 = vld [vmem:[%s5221 + $0xc8] sm:$0xff]
        %v5240 = vld [vmem:[%s5221 + $0xd8] sm:$0xff]
        %v5241 = vld [vmem:[%s5221 + $0xe0] sm:$0xff]
        %v5242 = vld [vmem:[%s5221 + $0xf0] sm:$0xff]
        %v5243 = vld [vmem:[%s5221 + $0xf8] sm:$0xff]
        %v5244 = vld [vmem:[%s5221 + $0x108] sm:$0xff]
        %v5245 = vld [vmem:[%s5221 + $0x110] sm:$0xff]
        %v5246 = vld [vmem:[%s5221 + $0x120] sm:$0xff]
        %v5247 = vld [vmem:[%s5221 + $0x128] sm:$0xff]
        %v5248 = vld [vmem:[%s5221 + $0x138] sm:$0xff]
        %v5249 = vld [vmem:[%s5221 + $0x140] sm:$0xff]
        %v5250 = vld [vmem:[%s5221 + $0x150] sm:$0xff]
        %v5251 = vld [vmem:[%s5221 + $0x158] sm:$0xff]
        %v5252 = vld [vmem:[%s5221 + $0x168] sm:$0xff]
        %v5253 = vld [vmem:[%s5221 + $0x170] sm:$0xff]
        %v5254 = vld [vmem:[%s7 + $0xc0] sm:$0xff]
        %v5255 = vld [vmem:[%s7 + $0xc8] sm:$0xff]
        %v5256 = vld [vmem:[%s7 + $0xd0] sm:$0xff]
        %v5257 = vld [vmem:[%s7 + $0xd8] sm:$0xff]
        %v5259 = vsel %vm3534, %v5222, 0
        %v5262 = vsel %vm3534, %v5223, 0
        %v5265 = vsel %vm3534, %v5224, 0
        %v5268 = vsel %vm3534, %v5225, 0
        %v5271 = vsel %vm3534, %v5226, 0
        %v5274 = vsel %vm3534, %v5227, 0
        %v5277 = vsel %vm3534, %v5228, 0
        %v5280 = vsel %vm3534, %v5229, 0
        %v5283 = vsel %vm3534, %v5230, 0
        %v5286 = vsel %vm3534, %v5231, 0
        %v5289 = vsel %vm3534, %v5232, 0
        %v5292 = vsel %vm3534, %v5233, 0
        %v5295 = vsel %vm3534, %v5234, 0
        %v5298 = vsel %vm3534, %v5235, 0
        %v5301 = vsel %vm3534, %v5236, 0
        %v5304 = vsel %vm3534, %v5237, 0
        %v5307 = vsel %vm3534, %v5238, 0
        %v5310 = vsel %vm3534, %v5239, 0
        %v5313 = vsel %vm3534, %v5240, 0
        %v5316 = vsel %vm3534, %v5241, 0
        %v5319 = vsel %vm3534, %v5242, 0
        %v5322 = vsel %vm3534, %v5243, 0
        %v5325 = vsel %vm3534, %v5244, 0
        %v5328 = vsel %vm3534, %v5245, 0
        %v5331 = vsel %vm3534, %v5246, 0
        %v5334 = vsel %vm3534, %v5247, 0
        %v5337 = vsel %vm3534, %v5248, 0
        %v5340 = vsel %vm3534, %v5249, 0
        %v5343 = vsel %vm3534, %v5250, 0
        %v5346 = vsel %vm3534, %v5251, 0
        %v5349 = vsel %vm3534, %v5252, 0
        %v5352 = vsel %vm3534, %v5253, 0
        %5354 = vmatpush.msra.mxu0 0.0
        %5355 = vmatpush.msra.mxu0 0.0
        %5356 = vmatpush.msra.mxu0 0.0
        %5357 = vmatpush.msra.mxu0 0.0
        %5358 = vmatpush.msra.mxu0 0.0
        %5359 = vmatpush.msra.mxu0 0.0
        %5360 = vmatpush.msra.mxu0 0.0
        %5361 = vmatpush.msra.mxu0 0.0
        %5362 = vmatpush.msra.mxu0 0.0
        %5363 = vmatpush.msra.mxu0 0.0
        %5364 = vmatpush.msra.mxu0 0.0
        %5365 = vmatpush.msra.mxu0 0.0
        %5366 = vmatpush.msra.mxu0 %v5257
        %5367 = vmatpush.msra.mxu0 %v5256
        %5368 = vmatpush.msra.mxu0 %v5255
        %5369 = vmatpush.msra.mxu0 %v5254
        %5370 = vmatmul.f32.gmra.mxu0 %v5259
        %v5371 = vpop.f32.mrf.mxu0
        %v5372 = vadd.f32 0.0, %v5371
        %5373 = vmatmul.f32.gmra.mxu0 %v5262
        %v5374 = vpop.f32.mrf.mxu0
        %v5375 = vadd.f32 0.0, %v5374
        %5376 = vmatmul.f32.gmra.mxu0 %v5265
        %v5377 = vpop.f32.mrf.mxu0
        %v5378 = vadd.f32 0.0, %v5377
        %5379 = vmatmul.f32.gmra.mxu0 %v5268
        %v5380 = vpop.f32.mrf.mxu0
        %v5381 = vadd.f32 0.0, %v5380
        %5382 = vmatmul.f32.gmra.mxu0 %v5271
        %v5383 = vpop.f32.mrf.mxu0
        %v5384 = vadd.f32 0.0, %v5383
        %5385 = vmatmul.f32.gmra.mxu0 %v5274
        %v5386 = vpop.f32.mrf.mxu0
        %v5387 = vadd.f32 0.0, %v5386
        %5388 = vmatmul.f32.gmra.mxu0 %v5277
        %v5389 = vpop.f32.mrf.mxu0
        %v5390 = vadd.f32 0.0, %v5389
        %5391 = vmatmul.f32.gmra.mxu0 %v5280
        %v5392 = vpop.f32.mrf.mxu0
        %v5393 = vadd.f32 0.0, %v5392
        %5394 = vmatmul.f32.gmra.mxu0 %v5283
        %v5395 = vpop.f32.mrf.mxu0
        %v5396 = vadd.f32 0.0, %v5395
        %5397 = vmatmul.f32.gmra.mxu0 %v5286
        %v5398 = vpop.f32.mrf.mxu0
        %v5399 = vadd.f32 0.0, %v5398
        %5400 = vmatmul.f32.gmra.mxu0 %v5289
        %v5401 = vpop.f32.mrf.mxu0
        %v5402 = vadd.f32 0.0, %v5401
        %5403 = vmatmul.f32.gmra.mxu0 %v5292
        %v5404 = vpop.f32.mrf.mxu0
        %v5405 = vadd.f32 0.0, %v5404
        %5406 = vmatmul.f32.gmra.mxu0 %v5295
        %v5407 = vpop.f32.mrf.mxu0
        %v5408 = vadd.f32 0.0, %v5407
        %5409 = vmatmul.f32.gmra.mxu0 %v5298
        %v5410 = vpop.f32.mrf.mxu0
        %v5411 = vadd.f32 0.0, %v5410
        %5412 = vmatmul.f32.gmra.mxu0 %v5301
        %v5413 = vpop.f32.mrf.mxu0
        %v5414 = vadd.f32 0.0, %v5413
        %5415 = vmatmul.f32.gmra.mxu0 %v5304
        %v5416 = vpop.f32.mrf.mxu0
        %v5417 = vadd.f32 0.0, %v5416
        %5418 = vmatmul.f32.gmra.mxu0 %v5307
        %v5419 = vpop.f32.mrf.mxu0
        %v5420 = vadd.f32 0.0, %v5419
        %5421 = vmatmul.f32.gmra.mxu0 %v5310
        %v5422 = vpop.f32.mrf.mxu0
        %v5423 = vadd.f32 0.0, %v5422
        %5424 = vmatmul.f32.gmra.mxu0 %v5313
        %v5425 = vpop.f32.mrf.mxu0
        %v5426 = vadd.f32 0.0, %v5425
        %5427 = vmatmul.f32.gmra.mxu0 %v5316
        %v5428 = vpop.f32.mrf.mxu0
        %v5429 = vadd.f32 0.0, %v5428
        %5430 = vmatmul.f32.gmra.mxu0 %v5319
        %v5431 = vpop.f32.mrf.mxu0
        %v5432 = vadd.f32 0.0, %v5431
        %5433 = vmatmul.f32.gmra.mxu0 %v5322
        %v5434 = vpop.f32.mrf.mxu0
        %v5435 = vadd.f32 0.0, %v5434
        %5436 = vmatmul.f32.gmra.mxu0 %v5325
        %v5437 = vpop.f32.mrf.mxu0
        %v5438 = vadd.f32 0.0, %v5437
        %5439 = vmatmul.f32.gmra.mxu0 %v5328
        %v5440 = vpop.f32.mrf.mxu0
        %v5441 = vadd.f32 0.0, %v5440
        %5442 = vmatmul.f32.gmra.mxu0 %v5331
        %v5443 = vpop.f32.mrf.mxu0
        %v5444 = vadd.f32 0.0, %v5443
        %5445 = vmatmul.f32.gmra.mxu0 %v5334
        %v5446 = vpop.f32.mrf.mxu0
        %v5447 = vadd.f32 0.0, %v5446
        %5448 = vmatmul.f32.gmra.mxu0 %v5337
        %v5449 = vpop.f32.mrf.mxu0
        %v5450 = vadd.f32 0.0, %v5449
        %5451 = vmatmul.f32.gmra.mxu0 %v5340
        %v5452 = vpop.f32.mrf.mxu0
        %v5453 = vadd.f32 0.0, %v5452
        %5454 = vmatmul.f32.gmra.mxu0 %v5343
        %v5455 = vpop.f32.mrf.mxu0
        %v5456 = vadd.f32 0.0, %v5455
        %5457 = vmatmul.f32.gmra.mxu0 %v5346
        %v5458 = vpop.f32.mrf.mxu0
        %v5459 = vadd.f32 0.0, %v5458
        %5460 = vmatmul.f32.gmra.mxu0 %v5349
        %v5461 = vpop.f32.mrf.mxu0
        %v5462 = vadd.f32 0.0, %v5461
        %5463 = vmatmul.f32.gmra.mxu0 %v5352
        %v5464 = vpop.f32.mrf.mxu0
        %v5465 = vadd.f32 0.0, %v5464
        %5466 = vdwg.mxu0
        %v5467 = vadd.f32 %v5189, %v5372
        %v5468 = vadd.f32 %v5190, %v5375
        %v5469 = vadd.f32 %v5191, %v5378
        %v5470 = vadd.f32 %v5192, %v5381
        %v5471 = vadd.f32 %v5193, %v5384
        %v5472 = vadd.f32 %v5194, %v5387
        %v5473 = vadd.f32 %v5195, %v5390
        %v5474 = vadd.f32 %v5196, %v5393
        %v5475 = vadd.f32 %v5197, %v5396
        %v5476 = vadd.f32 %v5198, %v5399
        %v5477 = vadd.f32 %v5199, %v5402
        %v5478 = vadd.f32 %v5200, %v5405
        %v5479 = vadd.f32 %v5201, %v5408
        %v5480 = vadd.f32 %v5202, %v5411
        %v5481 = vadd.f32 %v5203, %v5414
        %v5482 = vadd.f32 %v5204, %v5417
        %v5483 = vadd.f32 %v5205, %v5420
        %v5484 = vadd.f32 %v5206, %v5423
        %v5485 = vadd.f32 %v5207, %v5426
        %v5486 = vadd.f32 %v5208, %v5429
        %v5487 = vadd.f32 %v5209, %v5432
        %v5488 = vadd.f32 %v5210, %v5435
        %v5489 = vadd.f32 %v5211, %v5438
        %v5490 = vadd.f32 %v5212, %v5441
        %v5491 = vadd.f32 %v5213, %v5444
        %v5492 = vadd.f32 %v5214, %v5447
        %v5493 = vadd.f32 %v5215, %v5450
        %v5494 = vadd.f32 %v5216, %v5453
        %v5495 = vadd.f32 %v5217, %v5456
        %v5496 = vadd.f32 %v5218, %v5459
        %v5497 = vadd.f32 %v5219, %v5462
        %v5498 = vadd.f32 %v5220, %v5465
        %v5499 = vld [vmem:[%s5221 + $0x1] sm:$0xff]
        %v5500 = vld [vmem:[%s5221 + $0x9] sm:$0xff]
        %v5501 = vld [vmem:[%s5221 + $0x19] sm:$0xff]
        %v5502 = vld [vmem:[%s5221 + $0x21] sm:$0xff]
        %v5503 = vld [vmem:[%s5221 + $0x31] sm:$0xff]
        %v5504 = vld [vmem:[%s5221 + $0x39] sm:$0xff]
        %v5505 = vld [vmem:[%s5221 + $0x49] sm:$0xff]
        %v5506 = vld [vmem:[%s5221 + $0x51] sm:$0xff]
        %v5507 = vld [vmem:[%s5221 + $0x61] sm:$0xff]
        %v5508 = vld [vmem:[%s5221 + $0x69] sm:$0xff]
        %v5509 = vld [vmem:[%s5221 + $0x79] sm:$0xff]
        %v5510 = vld [vmem:[%s5221 + $0x81] sm:$0xff]
        %v5511 = vld [vmem:[%s5221 + $0x91] sm:$0xff]
        %v5512 = vld [vmem:[%s5221 + $0x99] sm:$0xff]
        %v5513 = vld [vmem:[%s5221 + $0xa9] sm:$0xff]
        %v5514 = vld [vmem:[%s5221 + $0xb1] sm:$0xff]
        %v5515 = vld [vmem:[%s5221 + $0xc1] sm:$0xff]
        %v5516 = vld [vmem:[%s5221 + $0xc9] sm:$0xff]
        %v5517 = vld [vmem:[%s5221 + $0xd9] sm:$0xff]
        %v5518 = vld [vmem:[%s5221 + $0xe1] sm:$0xff]
        %v5519 = vld [vmem:[%s5221 + $0xf1] sm:$0xff]
        %v5520 = vld [vmem:[%s5221 + $0xf9] sm:$0xff]
        %v5521 = vld [vmem:[%s5221 + $0x109] sm:$0xff]
        %v5522 = vld [vmem:[%s5221 + $0x111] sm:$0xff]
        %v5523 = vld [vmem:[%s5221 + $0x121] sm:$0xff]
        %v5524 = vld [vmem:[%s5221 + $0x129] sm:$0xff]
        %v5525 = vld [vmem:[%s5221 + $0x139] sm:$0xff]
        %v5526 = vld [vmem:[%s5221 + $0x141] sm:$0xff]
        %v5527 = vld [vmem:[%s5221 + $0x151] sm:$0xff]
        %v5528 = vld [vmem:[%s5221 + $0x159] sm:$0xff]
        %v5529 = vld [vmem:[%s5221 + $0x169] sm:$0xff]
        %v5530 = vld [vmem:[%s5221 + $0x171] sm:$0xff]
        %v5531 = vld [vmem:[%s7 + $0xe0] sm:$0xff]
        %v5532 = vld [vmem:[%s7 + $0xe8] sm:$0xff]
        %v5533 = vld [vmem:[%s7 + $0xf0] sm:$0xff]
        %v5534 = vld [vmem:[%s7 + $0xf8] sm:$0xff]
        %v5536 = vsel %vm3534, %v5499, 0
        %v5539 = vsel %vm3534, %v5500, 0
        %v5542 = vsel %vm3534, %v5501, 0
        %v5545 = vsel %vm3534, %v5502, 0
        %v5548 = vsel %vm3534, %v5503, 0
        %v5551 = vsel %vm3534, %v5504, 0
        %v5554 = vsel %vm3534, %v5505, 0
        %v5557 = vsel %vm3534, %v5506, 0
        %v5560 = vsel %vm3534, %v5507, 0
        %v5563 = vsel %vm3534, %v5508, 0
        %v5566 = vsel %vm3534, %v5509, 0
        %v5569 = vsel %vm3534, %v5510, 0
        %v5572 = vsel %vm3534, %v5511, 0
        %v5575 = vsel %vm3534, %v5512, 0
        %v5578 = vsel %vm3534, %v5513, 0
        %v5581 = vsel %vm3534, %v5514, 0
        %v5584 = vsel %vm3534, %v5515, 0
        %v5587 = vsel %vm3534, %v5516, 0
        %v5590 = vsel %vm3534, %v5517, 0
        %v5593 = vsel %vm3534, %v5518, 0
        %v5596 = vsel %vm3534, %v5519, 0
        %v5599 = vsel %vm3534, %v5520, 0
        %v5602 = vsel %vm3534, %v5521, 0
        %v5605 = vsel %vm3534, %v5522, 0
        %v5608 = vsel %vm3534, %v5523, 0
        %v5611 = vsel %vm3534, %v5524, 0
        %v5614 = vsel %vm3534, %v5525, 0
        %v5617 = vsel %vm3534, %v5526, 0
        %v5620 = vsel %vm3534, %v5527, 0
        %v5623 = vsel %vm3534, %v5528, 0
        %v5626 = vsel %vm3534, %v5529, 0
        %v5629 = vsel %vm3534, %v5530, 0
        %5631 = vmatpush.msra.mxu0 0.0
        %5632 = vmatpush.msra.mxu0 0.0
        %5633 = vmatpush.msra.mxu0 0.0
        %5634 = vmatpush.msra.mxu0 0.0
        %5635 = vmatpush.msra.mxu0 0.0
        %5636 = vmatpush.msra.mxu0 0.0
        %5637 = vmatpush.msra.mxu0 0.0
        %5638 = vmatpush.msra.mxu0 0.0
        %5639 = vmatpush.msra.mxu0 0.0
        %5640 = vmatpush.msra.mxu0 0.0
        %5641 = vmatpush.msra.mxu0 0.0
        %5642 = vmatpush.msra.mxu0 0.0
        %5643 = vmatpush.msra.mxu0 %v5534
        %5644 = vmatpush.msra.mxu0 %v5533
        %5645 = vmatpush.msra.mxu0 %v5532
        %5646 = vmatpush.msra.mxu0 %v5531
        %5647 = vmatmul.f32.gmra.mxu0 %v5536
        %v5648 = vpop.f32.mrf.mxu0
        %v5649 = vadd.f32 0.0, %v5648
        %5650 = vmatmul.f32.gmra.mxu0 %v5539
        %v5651 = vpop.f32.mrf.mxu0
        %v5652 = vadd.f32 0.0, %v5651
        %5653 = vmatmul.f32.gmra.mxu0 %v5542
        %v5654 = vpop.f32.mrf.mxu0
        %v5655 = vadd.f32 0.0, %v5654
        %5656 = vmatmul.f32.gmra.mxu0 %v5545
        %v5657 = vpop.f32.mrf.mxu0
        %v5658 = vadd.f32 0.0, %v5657
        %5659 = vmatmul.f32.gmra.mxu0 %v5548
        %v5660 = vpop.f32.mrf.mxu0
        %v5661 = vadd.f32 0.0, %v5660
        %5662 = vmatmul.f32.gmra.mxu0 %v5551
        %v5663 = vpop.f32.mrf.mxu0
        %v5664 = vadd.f32 0.0, %v5663
        %5665 = vmatmul.f32.gmra.mxu0 %v5554
        %v5666 = vpop.f32.mrf.mxu0
        %v5667 = vadd.f32 0.0, %v5666
        %5668 = vmatmul.f32.gmra.mxu0 %v5557
        %v5669 = vpop.f32.mrf.mxu0
        %v5670 = vadd.f32 0.0, %v5669
        %5671 = vmatmul.f32.gmra.mxu0 %v5560
        %v5672 = vpop.f32.mrf.mxu0
        %v5673 = vadd.f32 0.0, %v5672
        %5674 = vmatmul.f32.gmra.mxu0 %v5563
        %v5675 = vpop.f32.mrf.mxu0
        %v5676 = vadd.f32 0.0, %v5675
        %5677 = vmatmul.f32.gmra.mxu0 %v5566
        %v5678 = vpop.f32.mrf.mxu0
        %v5679 = vadd.f32 0.0, %v5678
        %5680 = vmatmul.f32.gmra.mxu0 %v5569
        %v5681 = vpop.f32.mrf.mxu0
        %v5682 = vadd.f32 0.0, %v5681
        %5683 = vmatmul.f32.gmra.mxu0 %v5572
        %v5684 = vpop.f32.mrf.mxu0
        %v5685 = vadd.f32 0.0, %v5684
        %5686 = vmatmul.f32.gmra.mxu0 %v5575
        %v5687 = vpop.f32.mrf.mxu0
        %v5688 = vadd.f32 0.0, %v5687
        %5689 = vmatmul.f32.gmra.mxu0 %v5578
        %v5690 = vpop.f32.mrf.mxu0
        %v5691 = vadd.f32 0.0, %v5690
        %5692 = vmatmul.f32.gmra.mxu0 %v5581
        %v5693 = vpop.f32.mrf.mxu0
        %v5694 = vadd.f32 0.0, %v5693
        %5695 = vmatmul.f32.gmra.mxu0 %v5584
        %v5696 = vpop.f32.mrf.mxu0
        %v5697 = vadd.f32 0.0, %v5696
        %5698 = vmatmul.f32.gmra.mxu0 %v5587
        %v5699 = vpop.f32.mrf.mxu0
        %v5700 = vadd.f32 0.0, %v5699
        %5701 = vmatmul.f32.gmra.mxu0 %v5590
        %v5702 = vpop.f32.mrf.mxu0
        %v5703 = vadd.f32 0.0, %v5702
        %5704 = vmatmul.f32.gmra.mxu0 %v5593
        %v5705 = vpop.f32.mrf.mxu0
        %v5706 = vadd.f32 0.0, %v5705
        %5707 = vmatmul.f32.gmra.mxu0 %v5596
        %v5708 = vpop.f32.mrf.mxu0
        %v5709 = vadd.f32 0.0, %v5708
        %5710 = vmatmul.f32.gmra.mxu0 %v5599
        %v5711 = vpop.f32.mrf.mxu0
        %v5712 = vadd.f32 0.0, %v5711
        %5713 = vmatmul.f32.gmra.mxu0 %v5602
        %v5714 = vpop.f32.mrf.mxu0
        %v5715 = vadd.f32 0.0, %v5714
        %5716 = vmatmul.f32.gmra.mxu0 %v5605
        %v5717 = vpop.f32.mrf.mxu0
        %v5718 = vadd.f32 0.0, %v5717
        %5719 = vmatmul.f32.gmra.mxu0 %v5608
        %v5720 = vpop.f32.mrf.mxu0
        %v5721 = vadd.f32 0.0, %v5720
        %5722 = vmatmul.f32.gmra.mxu0 %v5611
        %v5723 = vpop.f32.mrf.mxu0
        %v5724 = vadd.f32 0.0, %v5723
        %5725 = vmatmul.f32.gmra.mxu0 %v5614
        %v5726 = vpop.f32.mrf.mxu0
        %v5727 = vadd.f32 0.0, %v5726
        %5728 = vmatmul.f32.gmra.mxu0 %v5617
        %v5729 = vpop.f32.mrf.mxu0
        %v5730 = vadd.f32 0.0, %v5729
        %5731 = vmatmul.f32.gmra.mxu0 %v5620
        %v5732 = vpop.f32.mrf.mxu0
        %v5733 = vadd.f32 0.0, %v5732
        %5734 = vmatmul.f32.gmra.mxu0 %v5623
        %v5735 = vpop.f32.mrf.mxu0
        %v5736 = vadd.f32 0.0, %v5735
        %5737 = vmatmul.f32.gmra.mxu0 %v5626
        %v5738 = vpop.f32.mrf.mxu0
        %v5739 = vadd.f32 0.0, %v5738
        %5740 = vmatmul.f32.gmra.mxu0 %v5629
        %v5741 = vpop.f32.mrf.mxu0
        %v5742 = vadd.f32 0.0, %v5741
        %5743 = vdwg.mxu0
        %v5744 = vadd.f32 %v5467, %v5649
        %v5745 = vadd.f32 %v5468, %v5652
        %v5746 = vadd.f32 %v5469, %v5655
        %v5747 = vadd.f32 %v5470, %v5658
        %v5748 = vadd.f32 %v5471, %v5661
        %v5749 = vadd.f32 %v5472, %v5664
        %v5750 = vadd.f32 %v5473, %v5667
        %v5751 = vadd.f32 %v5474, %v5670
        %v5752 = vadd.f32 %v5475, %v5673
        %v5753 = vadd.f32 %v5476, %v5676
        %v5754 = vadd.f32 %v5477, %v5679
        %v5755 = vadd.f32 %v5478, %v5682
        %v5756 = vadd.f32 %v5479, %v5685
        %v5757 = vadd.f32 %v5480, %v5688
        %v5758 = vadd.f32 %v5481, %v5691
        %v5759 = vadd.f32 %v5482, %v5694
        %v5760 = vadd.f32 %v5483, %v5697
        %v5761 = vadd.f32 %v5484, %v5700
        %v5762 = vadd.f32 %v5485, %v5703
        %v5763 = vadd.f32 %v5486, %v5706
        %v5764 = vadd.f32 %v5487, %v5709
        %v5765 = vadd.f32 %v5488, %v5712
        %v5766 = vadd.f32 %v5489, %v5715
        %v5767 = vadd.f32 %v5490, %v5718
        %v5768 = vadd.f32 %v5491, %v5721
        %v5769 = vadd.f32 %v5492, %v5724
        %v5770 = vadd.f32 %v5493, %v5727
        %v5771 = vadd.f32 %v5494, %v5730
        %v5772 = vadd.f32 %v5495, %v5733
        %v5773 = vadd.f32 %v5496, %v5736
        %v5774 = vadd.f32 %v5497, %v5739
        %v5775 = vadd.f32 %v5498, %v5742
        %v5776 = vld [vmem:[%s5221 + $0x2] sm:$0xff]
        %v5777 = vld [vmem:[%s5221 + $0xa] sm:$0xff]
        %v5778 = vld [vmem:[%s5221 + $0x1a] sm:$0xff]
        %v5779 = vld [vmem:[%s5221 + $0x22] sm:$0xff]
        %v5780 = vld [vmem:[%s5221 + $0x32] sm:$0xff]
        %v5781 = vld [vmem:[%s5221 + $0x3a] sm:$0xff]
        %v5782 = vld [vmem:[%s5221 + $0x4a] sm:$0xff]
        %v5783 = vld [vmem:[%s5221 + $0x52] sm:$0xff]
        %v5784 = vld [vmem:[%s5221 + $0x62] sm:$0xff]
        %v5785 = vld [vmem:[%s5221 + $0x6a] sm:$0xff]
        %v5786 = vld [vmem:[%s5221 + $0x7a] sm:$0xff]
        %v5787 = vld [vmem:[%s5221 + $0x82] sm:$0xff]
        %v5788 = vld [vmem:[%s5221 + $0x92] sm:$0xff]
        %v5789 = vld [vmem:[%s5221 + $0x9a] sm:$0xff]
        %v5790 = vld [vmem:[%s5221 + $0xaa] sm:$0xff]
        %v5791 = vld [vmem:[%s5221 + $0xb2] sm:$0xff]
        %v5792 = vld [vmem:[%s5221 + $0xc2] sm:$0xff]
        %v5793 = vld [vmem:[%s5221 + $0xca] sm:$0xff]
        %v5794 = vld [vmem:[%s5221 + $0xda] sm:$0xff]
        %v5795 = vld [vmem:[%s5221 + $0xe2] sm:$0xff]
        %v5796 = vld [vmem:[%s5221 + $0xf2] sm:$0xff]
        %v5797 = vld [vmem:[%s5221 + $0xfa] sm:$0xff]
        %v5798 = vld [vmem:[%s5221 + $0x10a] sm:$0xff]
        %v5799 = vld [vmem:[%s5221 + $0x112] sm:$0xff]
        %v5800 = vld [vmem:[%s5221 + $0x122] sm:$0xff]
        %v5801 = vld [vmem:[%s5221 + $0x12a] sm:$0xff]
        %v5802 = vld [vmem:[%s5221 + $0x13a] sm:$0xff]
        %v5803 = vld [vmem:[%s5221 + $0x142] sm:$0xff]
        %v5804 = vld [vmem:[%s5221 + $0x152] sm:$0xff]
        %v5805 = vld [vmem:[%s5221 + $0x15a] sm:$0xff]
        %v5806 = vld [vmem:[%s5221 + $0x16a] sm:$0xff]
        %v5807 = vld [vmem:[%s5221 + $0x172] sm:$0xff]
        %v5808 = vld [vmem:[%s7 + $0x100] sm:$0xff]
        %v5809 = vld [vmem:[%s7 + $0x108] sm:$0xff]
        %v5810 = vld [vmem:[%s7 + $0x110] sm:$0xff]
        %v5811 = vld [vmem:[%s7 + $0x118] sm:$0xff]
        %v5813 = vsel %vm3534, %v5776, 0
        %v5816 = vsel %vm3534, %v5777, 0
        %v5819 = vsel %vm3534, %v5778, 0
        %v5822 = vsel %vm3534, %v5779, 0
        %v5825 = vsel %vm3534, %v5780, 0
        %v5828 = vsel %vm3534, %v5781, 0
        %v5831 = vsel %vm3534, %v5782, 0
        %v5834 = vsel %vm3534, %v5783, 0
        %v5837 = vsel %vm3534, %v5784, 0
        %v5840 = vsel %vm3534, %v5785, 0
        %v5843 = vsel %vm3534, %v5786, 0
        %v5846 = vsel %vm3534, %v5787, 0
        %v5849 = vsel %vm3534, %v5788, 0
        %v5852 = vsel %vm3534, %v5789, 0
        %v5855 = vsel %vm3534, %v5790, 0
        %v5858 = vsel %vm3534, %v5791, 0
        %v5861 = vsel %vm3534, %v5792, 0
        %v5864 = vsel %vm3534, %v5793, 0
        %v5867 = vsel %vm3534, %v5794, 0
        %v5870 = vsel %vm3534, %v5795, 0
        %v5873 = vsel %vm3534, %v5796, 0
        %v5876 = vsel %vm3534, %v5797, 0
        %v5879 = vsel %vm3534, %v5798, 0
        %v5882 = vsel %vm3534, %v5799, 0
        %v5885 = vsel %vm3534, %v5800, 0
        %v5888 = vsel %vm3534, %v5801, 0
        %v5891 = vsel %vm3534, %v5802, 0
        %v5894 = vsel %vm3534, %v5803, 0
        %v5897 = vsel %vm3534, %v5804, 0
        %v5900 = vsel %vm3534, %v5805, 0
        %v5903 = vsel %vm3534, %v5806, 0
        %v5906 = vsel %vm3534, %v5807, 0
        %5908 = vmatpush.msra.mxu0 0.0
        %5909 = vmatpush.msra.mxu0 0.0
        %5910 = vmatpush.msra.mxu0 0.0
        %5911 = vmatpush.msra.mxu0 0.0
        %5912 = vmatpush.msra.mxu0 0.0
        %5913 = vmatpush.msra.mxu0 0.0
        %5914 = vmatpush.msra.mxu0 0.0
        %5915 = vmatpush.msra.mxu0 0.0
        %5916 = vmatpush.msra.mxu0 0.0
        %5917 = vmatpush.msra.mxu0 0.0
        %5918 = vmatpush.msra.mxu0 0.0
        %5919 = vmatpush.msra.mxu0 0.0
        %5920 = vmatpush.msra.mxu0 %v5811
        %5921 = vmatpush.msra.mxu0 %v5810
        %5922 = vmatpush.msra.mxu0 %v5809
        %5923 = vmatpush.msra.mxu0 %v5808
        %5924 = vmatmul.f32.gmra.mxu0 %v5813
        %v5925 = vpop.f32.mrf.mxu0
        %v5926 = vadd.f32 0.0, %v5925
        %5927 = vmatmul.f32.gmra.mxu0 %v5816
        %v5928 = vpop.f32.mrf.mxu0
        %v5929 = vadd.f32 0.0, %v5928
        %5930 = vmatmul.f32.gmra.mxu0 %v5819
        %v5931 = vpop.f32.mrf.mxu0
        %v5932 = vadd.f32 0.0, %v5931
        %5933 = vmatmul.f32.gmra.mxu0 %v5822
        %v5934 = vpop.f32.mrf.mxu0
        %v5935 = vadd.f32 0.0, %v5934
        %5936 = vmatmul.f32.gmra.mxu0 %v5825
        %v5937 = vpop.f32.mrf.mxu0
        %v5938 = vadd.f32 0.0, %v5937
        %5939 = vmatmul.f32.gmra.mxu0 %v5828
        %v5940 = vpop.f32.mrf.mxu0
        %v5941 = vadd.f32 0.0, %v5940
        %5942 = vmatmul.f32.gmra.mxu0 %v5831
        %v5943 = vpop.f32.mrf.mxu0
        %v5944 = vadd.f32 0.0, %v5943
        %5945 = vmatmul.f32.gmra.mxu0 %v5834
        %v5946 = vpop.f32.mrf.mxu0
        %v5947 = vadd.f32 0.0, %v5946
        %5948 = vmatmul.f32.gmra.mxu0 %v5837
        %v5949 = vpop.f32.mrf.mxu0
        %v5950 = vadd.f32 0.0, %v5949
        %5951 = vmatmul.f32.gmra.mxu0 %v5840
        %v5952 = vpop.f32.mrf.mxu0
        %v5953 = vadd.f32 0.0, %v5952
        %5954 = vmatmul.f32.gmra.mxu0 %v5843
        %v5955 = vpop.f32.mrf.mxu0
        %v5956 = vadd.f32 0.0, %v5955
        %5957 = vmatmul.f32.gmra.mxu0 %v5846
        %v5958 = vpop.f32.mrf.mxu0
        %v5959 = vadd.f32 0.0, %v5958
        %5960 = vmatmul.f32.gmra.mxu0 %v5849
        %v5961 = vpop.f32.mrf.mxu0
        %v5962 = vadd.f32 0.0, %v5961
        %5963 = vmatmul.f32.gmra.mxu0 %v5852
        %v5964 = vpop.f32.mrf.mxu0
        %v5965 = vadd.f32 0.0, %v5964
        %5966 = vmatmul.f32.gmra.mxu0 %v5855
        %v5967 = vpop.f32.mrf.mxu0
        %v5968 = vadd.f32 0.0, %v5967
        %5969 = vmatmul.f32.gmra.mxu0 %v5858
        %v5970 = vpop.f32.mrf.mxu0
        %v5971 = vadd.f32 0.0, %v5970
        %5972 = vmatmul.f32.gmra.mxu0 %v5861
        %v5973 = vpop.f32.mrf.mxu0
        %v5974 = vadd.f32 0.0, %v5973
        %5975 = vmatmul.f32.gmra.mxu0 %v5864
        %v5976 = vpop.f32.mrf.mxu0
        %v5977 = vadd.f32 0.0, %v5976
        %5978 = vmatmul.f32.gmra.mxu0 %v5867
        %v5979 = vpop.f32.mrf.mxu0
        %v5980 = vadd.f32 0.0, %v5979
        %5981 = vmatmul.f32.gmra.mxu0 %v5870
        %v5982 = vpop.f32.mrf.mxu0
        %v5983 = vadd.f32 0.0, %v5982
        %5984 = vmatmul.f32.gmra.mxu0 %v5873
        %v5985 = vpop.f32.mrf.mxu0
        %v5986 = vadd.f32 0.0, %v5985
        %5987 = vmatmul.f32.gmra.mxu0 %v5876
        %v5988 = vpop.f32.mrf.mxu0
        %v5989 = vadd.f32 0.0, %v5988
        %5990 = vmatmul.f32.gmra.mxu0 %v5879
        %v5991 = vpop.f32.mrf.mxu0
        %v5992 = vadd.f32 0.0, %v5991
        %5993 = vmatmul.f32.gmra.mxu0 %v5882
        %v5994 = vpop.f32.mrf.mxu0
        %v5995 = vadd.f32 0.0, %v5994
        %5996 = vmatmul.f32.gmra.mxu0 %v5885
        %v5997 = vpop.f32.mrf.mxu0
        %v5998 = vadd.f32 0.0, %v5997
        %5999 = vmatmul.f32.gmra.mxu0 %v5888
        %v6000 = vpop.f32.mrf.mxu0
        %v6001 = vadd.f32 0.0, %v6000
        %6002 = vmatmul.f32.gmra.mxu0 %v5891
        %v6003 = vpop.f32.mrf.mxu0
        %v6004 = vadd.f32 0.0, %v6003
        %6005 = vmatmul.f32.gmra.mxu0 %v5894
        %v6006 = vpop.f32.mrf.mxu0
        %v6007 = vadd.f32 0.0, %v6006
        %6008 = vmatmul.f32.gmra.mxu0 %v5897
        %v6009 = vpop.f32.mrf.mxu0
        %v6010 = vadd.f32 0.0, %v6009
        %6011 = vmatmul.f32.gmra.mxu0 %v5900
        %v6012 = vpop.f32.mrf.mxu0
        %v6013 = vadd.f32 0.0, %v6012
        %6014 = vmatmul.f32.gmra.mxu0 %v5903
        %v6015 = vpop.f32.mrf.mxu0
        %v6016 = vadd.f32 0.0, %v6015
        %6017 = vmatmul.f32.gmra.mxu0 %v5906
        %v6018 = vpop.f32.mrf.mxu0
        %v6019 = vadd.f32 0.0, %v6018
        %6020 = vdwg.mxu0
        %v6021 = vadd.f32 %v5744, %v5926
        %v6022 = vadd.f32 %v5745, %v5929
        %v6023 = vadd.f32 %v5746, %v5932
        %v6024 = vadd.f32 %v5747, %v5935
        %v6025 = vadd.f32 %v5748, %v5938
        %v6026 = vadd.f32 %v5749, %v5941
        %v6027 = vadd.f32 %v5750, %v5944
        %v6028 = vadd.f32 %v5751, %v5947
        %v6029 = vadd.f32 %v5752, %v5950
        %v6030 = vadd.f32 %v5753, %v5953
        %v6031 = vadd.f32 %v5754, %v5956
        %v6032 = vadd.f32 %v5755, %v5959
        %v6033 = vadd.f32 %v5756, %v5962
        %v6034 = vadd.f32 %v5757, %v5965
        %v6035 = vadd.f32 %v5758, %v5968
        %v6036 = vadd.f32 %v5759, %v5971
        %v6037 = vadd.f32 %v5760, %v5974
        %v6038 = vadd.f32 %v5761, %v5977
        %v6039 = vadd.f32 %v5762, %v5980
        %v6040 = vadd.f32 %v5763, %v5983
        %v6041 = vadd.f32 %v5764, %v5986
        %v6042 = vadd.f32 %v5765, %v5989
        %v6043 = vadd.f32 %v5766, %v5992
        %v6044 = vadd.f32 %v5767, %v5995
        %v6045 = vadd.f32 %v5768, %v5998
        %v6046 = vadd.f32 %v5769, %v6001
        %v6047 = vadd.f32 %v5770, %v6004
        %v6048 = vadd.f32 %v5771, %v6007
        %v6049 = vadd.f32 %v5772, %v6010
        %v6050 = vadd.f32 %v5773, %v6013
        %v6051 = vadd.f32 %v5774, %v6016
        %v6052 = vadd.f32 %v5775, %v6019
        %v6053 = vld [vmem:[%s8] sm:$0x1]
        %v6055 = vperm.slane %v6053, 0
        %v6057 = vadd.f32 %v6021, %v6055
        %v6058 = vadd.f32 %v6022, %v6055
        %v6059 = vadd.f32 %v6023, %v6055
        %v6060 = vadd.f32 %v6024, %v6055
        %v6061 = vadd.f32 %v6025, %v6055
        %v6062 = vadd.f32 %v6026, %v6055
        %v6063 = vadd.f32 %v6027, %v6055
        %v6064 = vadd.f32 %v6028, %v6055
        %v6065 = vadd.f32 %v6029, %v6055
        %v6066 = vadd.f32 %v6030, %v6055
        %v6067 = vadd.f32 %v6031, %v6055
        %v6068 = vadd.f32 %v6032, %v6055
        %v6069 = vadd.f32 %v6033, %v6055
        %v6070 = vadd.f32 %v6034, %v6055
        %v6071 = vadd.f32 %v6035, %v6055
        %v6072 = vadd.f32 %v6036, %v6055
        %v6073 = vadd.f32 %v6037, %v6055
        %v6074 = vadd.f32 %v6038, %v6055
        %v6075 = vadd.f32 %v6039, %v6055
        %v6076 = vadd.f32 %v6040, %v6055
        %v6077 = vadd.f32 %v6041, %v6055
        %v6078 = vadd.f32 %v6042, %v6055
        %v6079 = vadd.f32 %v6043, %v6055
        %v6080 = vadd.f32 %v6044, %v6055
        %v6081 = vadd.f32 %v6045, %v6055
        %v6082 = vadd.f32 %v6046, %v6055
        %v6083 = vadd.f32 %v6047, %v6055
        %v6084 = vadd.f32 %v6048, %v6055
        %v6085 = vadd.f32 %v6049, %v6055
        %v6086 = vadd.f32 %v6050, %v6055
        %v6087 = vadd.f32 %v6051, %v6055
        %v6088 = vadd.f32 %v6052, %v6055
        %s6089 = sld [smem:[#allocation5 + %s22]]
        %v6090 = vld [vmem:[%s386] sm:$0x77]
        %v6091 = vstv %s6089
        %v6092 = vmul.f32 %v6091, %v6090
        %s6093 = sld [smem:[#allocation7 + %s22]]
        %6094 = vxpose.xlu0.b32.start [1/16] %v6057, 128
        %6095 = vxpose.xlu0.b32.cont [2/16] %v6058, 128
        %6096 = vxpose.xlu0.b32.cont [3/16] %v6059, 128
        %6097 = vxpose.xlu0.b32.cont [4/16] %v6060, 128
        %6098 = vxpose.xlu0.b32.cont [5/16] %v6061, 128
        %6099 = vxpose.xlu0.b32.cont [6/16] %v6062, 128
        %6100 = vxpose.xlu0.b32.cont [7/16] %v6063, 128
        %6101 = vxpose.xlu0.b32.cont [8/16] %v6064, 128
        %6102 = vxpose.xlu0.b32.cont [9/16] %v6065, 128
        %6103 = vxpose.xlu0.b32.cont [10/16] %v6066, 128
        %6104 = vxpose.xlu0.b32.cont [11/16] %v6067, 128
        %6105 = vxpose.xlu0.b32.cont [12/16] %v6068, 128
        %6106 = vxpose.xlu0.b32.cont [13/16] %v6069, 128
        %6107 = vxpose.xlu0.b32.cont [14/16] %v6070, 128
        %6108 = vxpose.xlu0.b32.cont [15/16] %v6071, 128
        %6109 = vxpose.xlu0.b32.end [16/16] %v6072, 128
        %v6110 = vpop.trf.xlu0
        %v6111 = vpop.trf.xlu0
        %v6112 = vpop.trf.xlu0
        %v6113 = vpop.trf.xlu0
        %v6114 = vpop.trf.xlu0
        %v6115 = vpop.trf.xlu0
        %v6116 = vpop.trf.xlu0
        %v6117 = vpop.trf.xlu0
        %v6118 = vpop.trf.xlu0
        %v6119 = vpop.trf.xlu0
        %v6120 = vpop.trf.xlu0
        %v6121 = vpop.trf.xlu0
        %v6122 = vpop.trf.xlu0
        %v6123 = vpop.trf.xlu0
        %v6124 = vpop.trf.xlu0
        %v6125 = vpop.trf.xlu0
        %6126 = vxpose.xlu0.b32.start [1/16] %v6073, 128
        %6127 = vxpose.xlu0.b32.cont [2/16] %v6074, 128
        %6128 = vxpose.xlu0.b32.cont [3/16] %v6075, 128
        %6129 = vxpose.xlu0.b32.cont [4/16] %v6076, 128
        %6130 = vxpose.xlu0.b32.cont [5/16] %v6077, 128
        %6131 = vxpose.xlu0.b32.cont [6/16] %v6078, 128
        %6132 = vxpose.xlu0.b32.cont [7/16] %v6079, 128
        %6133 = vxpose.xlu0.b32.cont [8/16] %v6080, 128
        %6134 = vxpose.xlu0.b32.cont [9/16] %v6081, 128
        %6135 = vxpose.xlu0.b32.cont [10/16] %v6082, 128
        %6136 = vxpose.xlu0.b32.cont [11/16] %v6083, 128
        %6137 = vxpose.xlu0.b32.cont [12/16] %v6084, 128
        %6138 = vxpose.xlu0.b32.cont [13/16] %v6085, 128
        %6139 = vxpose.xlu0.b32.cont [14/16] %v6086, 128
        %6140 = vxpose.xlu0.b32.cont [15/16] %v6087, 128
        %6141 = vxpose.xlu0.b32.end [16/16] %v6088, 128
        %v6142 = vpop.trf.xlu0
        %v6143 = vpop.trf.xlu0
        %v6144 = vpop.trf.xlu0
        %v6145 = vpop.trf.xlu0
        %v6146 = vpop.trf.xlu0
        %v6147 = vpop.trf.xlu0
        %v6148 = vpop.trf.xlu0
        %v6149 = vpop.trf.xlu0
        %v6150 = vpop.trf.xlu0
        %v6151 = vpop.trf.xlu0
        %v6152 = vpop.trf.xlu0
        %v6153 = vpop.trf.xlu0
        %v6154 = vpop.trf.xlu0
        %v6155 = vpop.trf.xlu0
        %v6156 = vpop.trf.xlu0
        %v6157 = vpop.trf.xlu0
        %v6158 = vstv %s6093
        %v6159 = vmul.f32 %v6158, %v6110
        %v6160 = vmul.f32 %v6158, %v6142
        %v6163 = vrot.slane %v6160, 4
        %vm6164 = vcmask 1043456
        %v6165 = vsel %vm6164, %v6159, %v6163
        %v6167 = vadd.f32 %v6092, %v6165
        %6168 = vst [vmem:[%s391] sm:$0x77] %v6167
        %p6169 = scmp.lt.s32.totalorder %s22, 1
        %s6170 = scalar_select %p6169, %s22, 1
        %s6171 = smul.addr %s6170, 2
        %s6172 = smul.addr %s6171, 4
        %s6173 = scalar_lea.vmem %s9, %s6172
        // Predicated region
        $region69: #{edm_precond_forward.1} parent=55 // pred_check
          %p6174 = pneg %p239
        $region70: #{edm_precond_forward.1} parent=55 // pred_check_branch
          %6176 = sbr.rel (%p6174) target = $region72
        $region71: #{edm_precond_forward.1} parent=55 // pred_region
          _
        $region72: #{edm_precond_forward.1} parent=55 // pred_fallthru
          _
      $region56: #{edm_precond_forward.1} parent=5 // pred_fallthru
        _
      %p6177 = scmp.le.s32.totalorder 2, %s17
      // Predicated region
      $region73: #{edm_precond_forward.1} parent=5 // pred_check
        %p6178 = pneg %p6177
      $region74: #{edm_precond_forward.1} parent=5 // pred_check_branch
        %6180 = sbr.rel (%p6178) target = $region76
      $region75: #{edm_precond_forward.1} parent=5 // pred_region
        %s6181 = ssub.s32 %s17, 2
        // Predicated region
        $region77: #{edm_precond_forward.1} parent=75 // pred_check
          %p6182 = pneg %p245
        $region78: #{edm_precond_forward.1} parent=75 // pred_check_branch
          %6184 = sbr.rel (%p6182) target = $region80
        $region79: #{edm_precond_forward.1} parent=75 // pred_region
          %p6185 = scmp.lt.s32.totalorder %s23, 1
          %s6186 = scalar_select %p6185, %s23, 1
          %s6187 = smul.addr %s6186, 2
          %s6188 = smul.addr %s6187, 4
          %s6189 = scalar_lea.vmem %s9, %s6188
        $region80: #{edm_precond_forward.1} parent=75 // pred_fallthru
          _
      $region76: #{edm_precond_forward.1} parent=5 // pred_fallthru
        _
    $region6: #{edm_precond_forward.1} parent=1 // loop_footer
      %s21 = sadd.s32 1, %s17
    $region7: #{edm_precond_forward.1} parent=1 // loop_footer_branch
      %16 = sbr.rel target = $region3
    $region8: #{edm_precond_forward.1} parent=1 // loop_exit
      _
    %6190 = vsyncpa [#allocation4], 1
    %s6191 = scalar_lea.sflag [#allocation4], 1
    %6192 = vsyncpa %s6191, 1
    %6193 = vsyncpa [#allocation6], 1

</llo_original>
